<compile_context>
chip_gen: v7x
topology: tpu7x:2x2x1
jax: 0.10.0
libtpu: 0.0.40
codegen_flags: <defaults>
</compile_context>

<pallas_src>
import math

import jax
import jax.numpy as jnp
import numpy as np
from jax import lax
from jax.experimental import pallas as pl
from jax.experimental.pallas import tpu as pltpu


# ----------------------------------------------------------------------------
# Softplus with beta, matching torch.nn.Softplus(beta=100) (threshold = 20).
# y is f32; only exp/log1p (the EUP ops) run at eup_dtype.
# ----------------------------------------------------------------------------
def _softplus_beta(y, beta=100.0, threshold=20.0, eup_dtype=jnp.float32):
    z = y * beta                                   # f32, VALU
    zc = jnp.minimum(z, threshold)                 # f32, VALU
    soft = jnp.log1p(jnp.exp(zc.astype(eup_dtype))).astype(jnp.float32) \
        * (1.0 / beta)
    return jnp.where(z > threshold, y, soft)       # f32


def _activation(y, beta, threshold, eup_dtype):
    if beta > 0:
        return _softplus_beta(y, beta, threshold, eup_dtype)
    return jnp.maximum(y, 0.0)                     # nn.ReLU branch (beta <= 0)


# ----------------------------------------------------------------------------
# (out, k) x (tm, k) -> (out, tm), contracting the shared k axis.
# Used for layer 0 and the skip-layer re-read of the row-major input tile.
# ----------------------------------------------------------------------------
def _dot_t(w, x_rows):
    return lax.dot_general(w, x_rows, (((1,), (1,)), ((), ())),
                           preferred_element_type=jnp.float32)


# ----------------------------------------------------------------------------
# Kernel factory: whole DeepSDF MLP on one tile of points.
#   inp_ref : (tm, d_in)   — row-major tile straight from HBM
#   params  : per layer (W (out,in), b (out,1));
#             skip layer: (W_x, W_inp, b);
#             last layer (out_dim==1): (W_col (in,1), b (1,1)).
#   out_ref : (out_dim, tm) — lane-dense store
# Activations are feature-major (features, tm) so elementwise/EUP vregs are
# fully lane-dense even at hidden_dim = 32.
# ----------------------------------------------------------------------------
def _make_deepsdf_kernel(num_linear, skip_layer, beta, act_dtype,
                         last_is_column, threshold=20.0):
    inv_sqrt2 = 1.0 / math.sqrt(2.0)

    def kernel(inp_ref, *refs):
        out_ref = refs[-1]
        params = refs[:-1]

        x = None                                  # feature-major activations
        p = 0
        for layer in range(num_linear):
            last = layer == num_linear - 1
            if layer == 0:
                w, b = params[p], params[p + 1]
                p += 2
                y = _dot_t(w[...], inp_ref[...]) + b[...].astype(jnp.float32)
            elif layer == skip_layer:
                w_x, w_i, b = params[p], params[p + 1], params[p + 2]
                p += 3
                # torch: x = cat([x, inp], -1)/sqrt(2); x = lin(x)
                #   ==  (W_x @ x + W_inp @ inp^T) / sqrt(2) + b
                # `inp` is re-read from its VMEM ref here (not carried live).
                y = (jnp.dot(w_x[...], x, preferred_element_type=jnp.float32)
                     + _dot_t(w_i[...], inp_ref[...])
                     ) * inv_sqrt2 + b[...].astype(jnp.float32)
            elif last and last_is_column:
                # Final out_dim==1 layer: broadcast-mul + sublane reduce.
                w_col, b = params[p], params[p + 1]
                p += 2
                y = jnp.sum(w_col[...].astype(jnp.float32)
                            * x.astype(jnp.float32),
                            axis=0, keepdims=True) + b[...].astype(jnp.float32)
            else:
                w, b = params[p], params[p + 1]
                p += 2
                y = jnp.dot(w[...], x, preferred_element_type=jnp.float32) \
                    + b[...].astype(jnp.float32)

            if last:
                out_ref[...] = y.astype(out_ref.dtype)
            else:
                x = _activation(y, beta, threshold, act_dtype).astype(act_dtype)

    return kernel


# ----------------------------------------------------------------------------
# Parameter construction (deterministic, mirrors DeepSDF.__init__ shapes).
# Weights are kept in PyTorch (out, in) layout.
# Returns:
#   raw_params    : list of (W (out,in), b (out,)) per linear layer (reference)
#   kernel_params : flat list for the kernel (skip W split, last W as column)
#   meta          : static info for the kernel / cost estimate
# ----------------------------------------------------------------------------
def init_deepsdf_params(key, lat_dim, hidden_dim, nlayers=8, out_dim=1,
                        input_dim=3, radius_init=1.0, num_freq_bands=None,
                        geometric_init=True, param_dtype=jnp.float32):
    if num_freq_bands is None:
        d_in_spatial = input_dim
    else:
        d_in_spatial = input_dim * (2 * num_freq_bands + 1)
    d_in = lat_dim + d_in_spatial

    dims = [d_in] + [hidden_dim] * nlayers + [out_dim]
    num_linear = len(dims) - 1
    skip_in = nlayers // 2
    last_is_column = (out_dim == 1)

    raw_params, kernel_params = [], []
    weight_elems = param_elems = hidden_elems = 0
    for layer in range(num_linear):
        if layer + 1 == skip_in:
            od = dims[layer + 1] - d_in
        else:
            od = dims[layer + 1]
        idim = dims[layer]

        key, k1, k2 = jax.random.split(key, 3)
        if geometric_init and layer == num_linear - 1:
            w = (jax.random.normal(k1, (od, idim), jnp.float32) * 1e-5
                 + math.sqrt(math.pi) / math.sqrt(idim))
            b = jnp.full((od,), -radius_init, dtype=jnp.float32)
        else:
            bound = 1.0 / math.sqrt(idim)
            w = jax.random.uniform(k1, (od, idim), jnp.float32, -bound, bound)
            b = jax.random.uniform(k2, (od,), jnp.float32, -bound, bound)

        raw_params.append((w, b))
        weight_elems += od * idim
        param_elems += od * idim + od
        if layer < num_linear - 1:
            hidden_elems += od

        b_col = b.reshape(od, 1).astype(param_dtype)
        if layer == skip_in:
            x_dim = dims[skip_in] - d_in   # width of x entering the skip cat
            kernel_params.extend([w[:, :x_dim].astype(param_dtype),
                                  w[:, x_dim:].astype(param_dtype),
                                  b_col])
        elif layer == num_linear - 1 and last_is_column:
            kernel_params.extend([w.T.astype(param_dtype), b_col])  # (in, 1)
        else:
            kernel_params.extend([w.astype(param_dtype), b_col])

    meta = dict(d_in=d_in, num_linear=num_linear, skip_layer=skip_in,
                out_dim=out_dim, last_is_column=last_is_column,
                weight_elems=weight_elems, param_elems=param_elems,
                hidden_elems=hidden_elems)
    return raw_params, kernel_params, meta


# ----------------------------------------------------------------------------
# Positional-encoding glue (matches the torch num_freq_bands branch).
# ----------------------------------------------------------------------------
def _embed(xyz, num_freq_bands):
    if num_freq_bands is None:
        return xyz
    parts = [xyz]
    for i in range(num_freq_bands):
        freq = float(2 ** i)
        parts.append(jnp.sin(xyz * freq))
        parts.append(jnp.cos(xyz * freq))
    return jnp.concatenate(parts, axis=-1)


# ----------------------------------------------------------------------------
# Pallas wrapper.
#   tm        : points per grid step.  2048 default (bf16 v6e/v7x sweet spot);
#               use 512-1024 + f32 on v5e.  Must be a multiple of 128.
#   act_dtype : compute dtype for activations / EUP ops.  Defaults to the
#               params' dtype so weights and activations stay consistent
#               (pass bf16 kernel_params for the v6e/v7x bf16 path).
# ----------------------------------------------------------------------------
def deepsdf_forward(xyz, lat_rep, kernel_params, meta, *, beta=100.0,
                    num_freq_bands=None, tm=2048, act_dtype=None,
                    interpret=False):
    if act_dtype is None:
        act_dtype = kernel_params[0].dtype

    inp = jnp.concatenate([_embed(xyz, num_freq_bands), lat_rep], axis=-1)
    inp = inp.astype(act_dtype)        # fuses into the concat; no extra pass
    n, d_in = inp.shape
    assert d_in == meta["d_in"]
    out_dim = meta["out_dim"]

    # Keep the tile a multiple of 128 and no larger than the padded row count;
    # Pallas handles the ragged last block (no host-side pad / transpose).
    tm = min(tm, 128 * pl.cdiv(n, 128))
    assert tm % 128 == 0
    grid = (pl.cdiv(n, tm),)

    kernel = _make_deepsdf_kernel(meta["num_linear"], meta["skip_layer"], beta,
                                  act_dtype, meta["last_is_column"])

    in_specs = [pl.BlockSpec((tm, d_in), lambda i: (i, 0))]
    for prm in kernel_params:
        in_specs.append(pl.BlockSpec(prm.shape, lambda i: (0, 0)))

    # Advisory: cost is transcendental-dominated (softplus), not FLOP-bound.
    itemsize = jnp.dtype(act_dtype).itemsize
    cost = pl.CostEstimate(
        flops=2 * n * meta["weight_elems"],
        transcendentals=2 * n * meta["hidden_elems"],
        bytes_accessed=(itemsize * n * d_in + 4 * n * out_dim
                        + itemsize * meta["param_elems"]),
    )

    out_t = pl.pallas_call(
        kernel,
        out_shape=jax.ShapeDtypeStruct((out_dim, n), jnp.float32),
        grid_spec=pltpu.PrefetchScalarGridSpec(
            num_scalar_prefetch=0,
            grid=grid,
            in_specs=in_specs,
            out_specs=pl.BlockSpec((out_dim, tm), lambda i: (0, i)),
        ),
        compiler_params=pltpu.CompilerParams(
            dimension_semantics=("parallel",)),
        cost_estimate=cost,
        interpret=interpret,
    )(inp, *kernel_params)

    return out_t.T, None   # DeepSDF.forward returns (x, None)


# ----------------------------------------------------------------------------
# Pure-JAX reference mirroring the PyTorch forward (row-major, torch layout).
# ----------------------------------------------------------------------------
def deepsdf_ref(xyz, lat_rep, raw_params, meta, *, beta=100.0,
                num_freq_bands=None):
    inp = jnp.concatenate([_embed(xyz, num_freq_bands), lat_rep], axis=-1)
    inp = inp.astype(jnp.float32)
    x = inp
    num_linear = meta["num_linear"]
    for layer in range(num_linear):
        w, b = raw_params[layer]                    # (out, in), (out,)
        if layer == meta["skip_layer"]:
            x = jnp.concatenate([x, inp], axis=-1) / np.sqrt(2)
        x = x @ w.T + b
        if layer < num_linear - 1:
            x = _softplus_beta(x, beta) if beta > 0 else jnp.maximum(x, 0.0)
    return x, None


# ----------------------------------------------------------------------------
if __name__ == "__main__":
    key = jax.random.PRNGKey(0)

    # Module config (small): lat_dim=16, hidden_dim=32, nlayers=8,
    # input_dim=3, out_dim=1, num_freq_bands=None -> d_in = 19.
    lat_dim, hidden_dim, nlayers, input_dim, out_dim = 16, 32, 8, 3, 1
    num_freq_bands = None
    beta = 100.0
    N = 1000          # deliberately not a tile multiple -> ragged last block

    kp, kx, kl = jax.random.split(key, 3)
    raw_params, kernel_params_f32, meta = init_deepsdf_params(
        kp, lat_dim, hidden_dim, nlayers=nlayers, out_dim=out_dim,
        input_dim=input_dim, num_freq_bands=num_freq_bands)

    xyz = jax.random.normal(kx, (N, input_dim), jnp.float32)
    lat_rep = jax.random.normal(kl, (N, lat_dim), jnp.float32)

    ref, _ = deepsdf_ref(xyz, lat_rep, raw_params, meta, beta=beta,
                         num_freq_bands=num_freq_bands)
    ref = np.asarray(jax.block_until_ready(ref))

    # f32 end-to-end path (v5e-safe): tight check against the reference.
    out_f32, _ = deepsdf_forward(xyz, lat_rep, kernel_params_f32, meta,
                                 beta=beta, num_freq_bands=num_freq_bands,
                                 tm=256)
    out_f32 = np.asarray(jax.block_until_ready(out_f32))
    assert out_f32.shape == (N, out_dim), out_f32.shape
    np.testing.assert_allclose(out_f32, ref, rtol=1e-4, atol=1e-4)

    # bf16 end-to-end path (v6e/v7x): bf16 weights + activations + EUP,
    # f32 matmul accumulation.  Loose check against the f32 reference.
    kernel_params_bf16 = [p.astype(jnp.bfloat16) for p in kernel_params_f32]
    out_bf16, _ = deepsdf_forward(xyz, lat_rep, kernel_params_bf16, meta,
                                  beta=beta, num_freq_bands=num_freq_bands,
                                  tm=512)
    out_bf16 = np.asarray(jax.block_until_ready(out_bf16))
    assert out_bf16.shape == (N, out_dim), out_bf16.shape
    assert np.all(np.isfinite(out_bf16))
    np.testing.assert_allclose(out_bf16, ref, rtol=1e-1, atol=1e-1)

    print("KERNEL_OK")
</pallas_src>

<mosaic_0001>
module attributes {stable_mosaic.version = 11 : i64} {
  func.func @kernel(%arg0: i32, %arg1: memref<256x19xf32, #tpu.memory_space<vmem>>, %arg2: memref<32x19xf32, #tpu.memory_space<vmem>>, %arg3: memref<32x1xf32, #tpu.memory_space<vmem>>, %arg4: memref<32x32xf32, #tpu.memory_space<vmem>>, %arg5: memref<32x1xf32, #tpu.memory_space<vmem>>, %arg6: memref<32x32xf32, #tpu.memory_space<vmem>>, %arg7: memref<32x1xf32, #tpu.memory_space<vmem>>, %arg8: memref<13x32xf32, #tpu.memory_space<vmem>>, %arg9: memref<13x1xf32, #tpu.memory_space<vmem>>, %arg10: memref<32x13xf32, #tpu.memory_space<vmem>>, %arg11: memref<32x19xf32, #tpu.memory_space<vmem>>, %arg12: memref<32x1xf32, #tpu.memory_space<vmem>>, %arg13: memref<32x32xf32, #tpu.memory_space<vmem>>, %arg14: memref<32x1xf32, #tpu.memory_space<vmem>>, %arg15: memref<32x32xf32, #tpu.memory_space<vmem>>, %arg16: memref<32x1xf32, #tpu.memory_space<vmem>>, %arg17: memref<32x32xf32, #tpu.memory_space<vmem>>, %arg18: memref<32x1xf32, #tpu.memory_space<vmem>>, %arg19: memref<32x1xf32, #tpu.memory_space<vmem>>, %arg20: memref<1x1xf32, #tpu.memory_space<vmem>>, %arg21: memref<1x256xf32, #tpu.memory_space<vmem>>) attributes {dimension_semantics = [#tpu.dimension_semantics<parallel>], iteration_bounds = array<i64: 4>, scalar_prefetch = 0 : i64, scratch_operands = 0 : i64, tpu.core_type = #tpu.core_type<tc>, window_params = [{transform_indices = @transform_0, window_bounds = array<i64: 256, 19>}, {pipeline_mode = #tpu.pipeline_mode<synchronous>, transform_indices = @transform_1, window_bounds = array<i64: 32, 19>}, {pipeline_mode = #tpu.pipeline_mode<synchronous>, transform_indices = @transform_2, window_bounds = array<i64: 32, 1>}, {pipeline_mode = #tpu.pipeline_mode<synchronous>, transform_indices = @transform_3, window_bounds = array<i64: 32, 32>}, {pipeline_mode = #tpu.pipeline_mode<synchronous>, transform_indices = @transform_4, window_bounds = array<i64: 32, 1>}, {pipeline_mode = #tpu.pipeline_mode<synchronous>, transform_indices = @transform_5, window_bounds = array<i64: 32, 32>}, {pipeline_mode = #tpu.pipeline_mode<synchronous>, transform_indices = @transform_6, window_bounds = array<i64: 32, 1>}, {pipeline_mode = #tpu.pipeline_mode<synchronous>, transform_indices = @transform_7, window_bounds = array<i64: 13, 32>}, {pipeline_mode = #tpu.pipeline_mode<synchronous>, transform_indices = @transform_8, window_bounds = array<i64: 13, 1>}, {pipeline_mode = #tpu.pipeline_mode<synchronous>, transform_indices = @transform_9, window_bounds = array<i64: 32, 13>}, {pipeline_mode = #tpu.pipeline_mode<synchronous>, transform_indices = @transform_10, window_bounds = array<i64: 32, 19>}, {pipeline_mode = #tpu.pipeline_mode<synchronous>, transform_indices = @transform_11, window_bounds = array<i64: 32, 1>}, {pipeline_mode = #tpu.pipeline_mode<synchronous>, transform_indices = @transform_12, window_bounds = array<i64: 32, 32>}, {pipeline_mode = #tpu.pipeline_mode<synchronous>, transform_indices = @transform_13, window_bounds = array<i64: 32, 1>}, {pipeline_mode = #tpu.pipeline_mode<synchronous>, transform_indices = @transform_14, window_bounds = array<i64: 32, 32>}, {pipeline_mode = #tpu.pipeline_mode<synchronous>, transform_indices = @transform_15, window_bounds = array<i64: 32, 1>}, {pipeline_mode = #tpu.pipeline_mode<synchronous>, transform_indices = @transform_16, window_bounds = array<i64: 32, 32>}, {pipeline_mode = #tpu.pipeline_mode<synchronous>, transform_indices = @transform_17, window_bounds = array<i64: 32, 1>}, {pipeline_mode = #tpu.pipeline_mode<synchronous>, transform_indices = @transform_18, window_bounds = array<i64: 32, 1>}, {pipeline_mode = #tpu.pipeline_mode<synchronous>, transform_indices = @transform_19, window_bounds = array<i64: 1, 1>}, {transform_indices = @transform_20, window_bounds = array<i64: 1, 256>}]} {
    %c0 = arith.constant 0 : index
    %c0_0 = arith.constant 0 : index
    %0 = vector.load %arg2[%c0, %c0_0] : memref<32x19xf32, #tpu.memory_space<vmem>>, vector<32x19xf32>
    %c0_1 = arith.constant 0 : index
    %c0_2 = arith.constant 0 : index
    %1 = vector.load %arg1[%c0_1, %c0_2] : memref<256x19xf32, #tpu.memory_space<vmem>>, vector<256x19xf32>
    %cst = arith.constant dense<0.000000e+00> : vector<32x256xf32>
    %2 = tpu.matmul %0, %1, %cst {dimension_numbers = #tpu.dot_dimension_numbers<[1], [1], [0], [0], [0, 0, 1, 0], [], []>} : vector<32x19xf32>, vector<256x19xf32>, vector<32x256xf32> -> vector<32x256xf32>
    %c0_3 = arith.constant 0 : index
    %c0_4 = arith.constant 0 : index
    %3 = vector.load %arg3[%c0_3, %c0_4] : memref<32x1xf32, #tpu.memory_space<vmem>>, vector<32x1xf32>
    %4 = vector.broadcast %3 : vector<32x1xf32> to vector<32x256xf32>
    %5 = arith.addf %2, %4 : vector<32x256xf32>
    %cst_5 = arith.constant 1.000000e+02 : f32
    %6 = vector.broadcast %cst_5 : f32 to vector<32x256xf32>
    %7 = arith.mulf %5, %6 : vector<32x256xf32>
    %cst_6 = arith.constant 2.000000e+01 : f32
    %8 = vector.broadcast %cst_6 : f32 to vector<32x256xf32>
    %9 = arith.minimumf %7, %8 : vector<32x256xf32>
    %10 = math.exp %9 : vector<32x256xf32>
    %11 = math.log1p %10 : vector<32x256xf32>
    %cst_7 = arith.constant 0.00999999977 : f32
    %12 = vector.broadcast %cst_7 : f32 to vector<32x256xf32>
    %13 = arith.mulf %11, %12 : vector<32x256xf32>
    %cst_8 = arith.constant 2.000000e+01 : f32
    %14 = vector.broadcast %cst_8 : f32 to vector<32x256xf32>
    %15 = arith.cmpf ogt, %7, %14 : vector<32x256xf32>
    %16 = arith.select %15, %5, %13 : vector<32x256xi1>, vector<32x256xf32>
    %c0_9 = arith.constant 0 : index
    %c0_10 = arith.constant 0 : index
    %17 = vector.load %arg4[%c0_9, %c0_10] : memref<32x32xf32, #tpu.memory_space<vmem>>, vector<32x32xf32>
    %cst_11 = arith.constant dense<0.000000e+00> : vector<32x256xf32>
    %18 = tpu.matmul %17, %16, %cst_11 {dimension_numbers = #tpu.dot_dimension_numbers<[1], [0], [0], [1], [0, 0, 1, 1], [], []>} : vector<32x32xf32>, vector<32x256xf32>, vector<32x256xf32> -> vector<32x256xf32>
    %c0_12 = arith.constant 0 : index
    %c0_13 = arith.constant 0 : index
    %19 = vector.load %arg5[%c0_12, %c0_13] : memref<32x1xf32, #tpu.memory_space<vmem>>, vector<32x1xf32>
    %20 = vector.broadcast %19 : vector<32x1xf32> to vector<32x256xf32>
    %21 = arith.addf %18, %20 : vector<32x256xf32>
    %cst_14 = arith.constant 1.000000e+02 : f32
    %22 = vector.broadcast %cst_14 : f32 to vector<32x256xf32>
    %23 = arith.mulf %21, %22 : vector<32x256xf32>
    %cst_15 = arith.constant 2.000000e+01 : f32
    %24 = vector.broadcast %cst_15 : f32 to vector<32x256xf32>
    %25 = arith.minimumf %23, %24 : vector<32x256xf32>
    %26 = math.exp %25 : vector<32x256xf32>
    %27 = math.log1p %26 : vector<32x256xf32>
    %cst_16 = arith.constant 0.00999999977 : f32
    %28 = vector.broadcast %cst_16 : f32 to vector<32x256xf32>
    %29 = arith.mulf %27, %28 : vector<32x256xf32>
    %cst_17 = arith.constant 2.000000e+01 : f32
    %30 = vector.broadcast %cst_17 : f32 to vector<32x256xf32>
    %31 = arith.cmpf ogt, %23, %30 : vector<32x256xf32>
    %32 = arith.select %31, %21, %29 : vector<32x256xi1>, vector<32x256xf32>
    %c0_18 = arith.constant 0 : index
    %c0_19 = arith.constant 0 : index
    %33 = vector.load %arg6[%c0_18, %c0_19] : memref<32x32xf32, #tpu.memory_space<vmem>>, vector<32x32xf32>
    %cst_20 = arith.constant dense<0.000000e+00> : vector<32x256xf32>
    %34 = tpu.matmul %33, %32, %cst_20 {dimension_numbers = #tpu.dot_dimension_numbers<[1], [0], [0], [1], [0, 0, 1, 1], [], []>} : vector<32x32xf32>, vector<32x256xf32>, vector<32x256xf32> -> vector<32x256xf32>
    %c0_21 = arith.constant 0 : index
    %c0_22 = arith.constant 0 : index
    %35 = vector.load %arg7[%c0_21, %c0_22] : memref<32x1xf32, #tpu.memory_space<vmem>>, vector<32x1xf32>
    %36 = vector.broadcast %35 : vector<32x1xf32> to vector<32x256xf32>
    %37 = arith.addf %34, %36 : vector<32x256xf32>
    %cst_23 = arith.constant 1.000000e+02 : f32
    %38 = vector.broadcast %cst_23 : f32 to vector<32x256xf32>
    %39 = arith.mulf %37, %38 : vector<32x256xf32>
    %cst_24 = arith.constant 2.000000e+01 : f32
    %40 = vector.broadcast %cst_24 : f32 to vector<32x256xf32>
    %41 = arith.minimumf %39, %40 : vector<32x256xf32>
    %42 = math.exp %41 : vector<32x256xf32>
    %43 = math.log1p %42 : vector<32x256xf32>
    %cst_25 = arith.constant 0.00999999977 : f32
    %44 = vector.broadcast %cst_25 : f32 to vector<32x256xf32>
    %45 = arith.mulf %43, %44 : vector<32x256xf32>
    %cst_26 = arith.constant 2.000000e+01 : f32
    %46 = vector.broadcast %cst_26 : f32 to vector<32x256xf32>
    %47 = arith.cmpf ogt, %39, %46 : vector<32x256xf32>
    %48 = arith.select %47, %37, %45 : vector<32x256xi1>, vector<32x256xf32>
    %c0_27 = arith.constant 0 : index
    %c0_28 = arith.constant 0 : index
    %49 = vector.load %arg8[%c0_27, %c0_28] : memref<13x32xf32, #tpu.memory_space<vmem>>, vector<13x32xf32>
    %cst_29 = arith.constant dense<0.000000e+00> : vector<13x256xf32>
    %50 = tpu.matmul %49, %48, %cst_29 {dimension_numbers = #tpu.dot_dimension_numbers<[1], [0], [0], [1], [0, 0, 1, 1], [], []>} : vector<13x32xf32>, vector<32x256xf32>, vector<13x256xf32> -> vector<13x256xf32>
    %c0_30 = arith.constant 0 : index
    %c0_31 = arith.constant 0 : index
    %51 = vector.load %arg9[%c0_30, %c0_31] : memref<13x1xf32, #tpu.memory_space<vmem>>, vector<13x1xf32>
    %52 = vector.broadcast %51 : vector<13x1xf32> to vector<13x256xf32>
    %53 = arith.addf %50, %52 : vector<13x256xf32>
    %cst_32 = arith.constant 1.000000e+02 : f32
    %54 = vector.broadcast %cst_32 : f32 to vector<13x256xf32>
    %55 = arith.mulf %53, %54 : vector<13x256xf32>
    %cst_33 = arith.constant 2.000000e+01 : f32
    %56 = vector.broadcast %cst_33 : f32 to vector<13x256xf32>
    %57 = arith.minimumf %55, %56 : vector<13x256xf32>
    %58 = math.exp %57 : vector<13x256xf32>
    %59 = math.log1p %58 : vector<13x256xf32>
    %cst_34 = arith.constant 0.00999999977 : f32
    %60 = vector.broadcast %cst_34 : f32 to vector<13x256xf32>
    %61 = arith.mulf %59, %60 : vector<13x256xf32>
    %cst_35 = arith.constant 2.000000e+01 : f32
    %62 = vector.broadcast %cst_35 : f32 to vector<13x256xf32>
    %63 = arith.cmpf ogt, %55, %62 : vector<13x256xf32>
    %64 = arith.select %63, %53, %61 : vector<13x256xi1>, vector<13x256xf32>
    %c0_36 = arith.constant 0 : index
    %c0_37 = arith.constant 0 : index
    %65 = vector.load %arg10[%c0_36, %c0_37] : memref<32x13xf32, #tpu.memory_space<vmem>>, vector<32x13xf32>
    %cst_38 = arith.constant dense<0.000000e+00> : vector<32x256xf32>
    %66 = tpu.matmul %65, %64, %cst_38 {dimension_numbers = #tpu.dot_dimension_numbers<[1], [0], [0], [1], [0, 0, 1, 1], [], []>} : vector<32x13xf32>, vector<13x256xf32>, vector<32x256xf32> -> vector<32x256xf32>
    %c0_39 = arith.constant 0 : index
    %c0_40 = arith.constant 0 : index
    %67 = vector.load %arg11[%c0_39, %c0_40] : memref<32x19xf32, #tpu.memory_space<vmem>>, vector<32x19xf32>
    %c0_41 = arith.constant 0 : index
    %c0_42 = arith.constant 0 : index
    %68 = vector.load %arg1[%c0_41, %c0_42] : memref<256x19xf32, #tpu.memory_space<vmem>>, vector<256x19xf32>
    %cst_43 = arith.constant dense<0.000000e+00> : vector<32x256xf32>
    %69 = tpu.matmul %67, %68, %cst_43 {dimension_numbers = #tpu.dot_dimension_numbers<[1], [1], [0], [0], [0, 0, 1, 0], [], []>} : vector<32x19xf32>, vector<256x19xf32>, vector<32x256xf32> -> vector<32x256xf32>
    %70 = arith.addf %66, %69 : vector<32x256xf32>
    %cst_44 = arith.constant 0.707106769 : f32
    %71 = vector.broadcast %cst_44 : f32 to vector<32x256xf32>
    %72 = arith.mulf %70, %71 : vector<32x256xf32>
    %c0_45 = arith.constant 0 : index
    %c0_46 = arith.constant 0 : index
    %73 = vector.load %arg12[%c0_45, %c0_46] : memref<32x1xf32, #tpu.memory_space<vmem>>, vector<32x1xf32>
    %74 = vector.broadcast %73 : vector<32x1xf32> to vector<32x256xf32>
    %75 = arith.addf %72, %74 : vector<32x256xf32>
    %cst_47 = arith.constant 1.000000e+02 : f32
    %76 = vector.broadcast %cst_47 : f32 to vector<32x256xf32>
    %77 = arith.mulf %75, %76 : vector<32x256xf32>
    %cst_48 = arith.constant 2.000000e+01 : f32
    %78 = vector.broadcast %cst_48 : f32 to vector<32x256xf32>
    %79 = arith.minimumf %77, %78 : vector<32x256xf32>
    %80 = math.exp %79 : vector<32x256xf32>
    %81 = math.log1p %80 : vector<32x256xf32>
    %cst_49 = arith.constant 0.00999999977 : f32
    %82 = vector.broadcast %cst_49 : f32 to vector<32x256xf32>
    %83 = arith.mulf %81, %82 : vector<32x256xf32>
    %cst_50 = arith.constant 2.000000e+01 : f32
    %84 = vector.broadcast %cst_50 : f32 to vector<32x256xf32>
    %85 = arith.cmpf ogt, %77, %84 : vector<32x256xf32>
    %86 = arith.select %85, %75, %83 : vector<32x256xi1>, vector<32x256xf32>
    %c0_51 = arith.constant 0 : index
    %c0_52 = arith.constant 0 : index
    %87 = vector.load %arg13[%c0_51, %c0_52] : memref<32x32xf32, #tpu.memory_space<vmem>>, vector<32x32xf32>
    %cst_53 = arith.constant dense<0.000000e+00> : vector<32x256xf32>
    %88 = tpu.matmul %87, %86, %cst_53 {dimension_numbers = #tpu.dot_dimension_numbers<[1], [0], [0], [1], [0, 0, 1, 1], [], []>} : vector<32x32xf32>, vector<32x256xf32>, vector<32x256xf32> -> vector<32x256xf32>
    %c0_54 = arith.constant 0 : index
    %c0_55 = arith.constant 0 : index
    %89 = vector.load %arg14[%c0_54, %c0_55] : memref<32x1xf32, #tpu.memory_space<vmem>>, vector<32x1xf32>
    %90 = vector.broadcast %89 : vector<32x1xf32> to vector<32x256xf32>
    %91 = arith.addf %88, %90 : vector<32x256xf32>
    %cst_56 = arith.constant 1.000000e+02 : f32
    %92 = vector.broadcast %cst_56 : f32 to vector<32x256xf32>
    %93 = arith.mulf %91, %92 : vector<32x256xf32>
    %cst_57 = arith.constant 2.000000e+01 : f32
    %94 = vector.broadcast %cst_57 : f32 to vector<32x256xf32>
    %95 = arith.minimumf %93, %94 : vector<32x256xf32>
    %96 = math.exp %95 : vector<32x256xf32>
    %97 = math.log1p %96 : vector<32x256xf32>
    %cst_58 = arith.constant 0.00999999977 : f32
    %98 = vector.broadcast %cst_58 : f32 to vector<32x256xf32>
    %99 = arith.mulf %97, %98 : vector<32x256xf32>
    %cst_59 = arith.constant 2.000000e+01 : f32
    %100 = vector.broadcast %cst_59 : f32 to vector<32x256xf32>
    %101 = arith.cmpf ogt, %93, %100 : vector<32x256xf32>
    %102 = arith.select %101, %91, %99 : vector<32x256xi1>, vector<32x256xf32>
    %c0_60 = arith.constant 0 : index
    %c0_61 = arith.constant 0 : index
    %103 = vector.load %arg15[%c0_60, %c0_61] : memref<32x32xf32, #tpu.memory_space<vmem>>, vector<32x32xf32>
    %cst_62 = arith.constant dense<0.000000e+00> : vector<32x256xf32>
    %104 = tpu.matmul %103, %102, %cst_62 {dimension_numbers = #tpu.dot_dimension_numbers<[1], [0], [0], [1], [0, 0, 1, 1], [], []>} : vector<32x32xf32>, vector<32x256xf32>, vector<32x256xf32> -> vector<32x256xf32>
    %c0_63 = arith.constant 0 : index
    %c0_64 = arith.constant 0 : index
    %105 = vector.load %arg16[%c0_63, %c0_64] : memref<32x1xf32, #tpu.memory_space<vmem>>, vector<32x1xf32>
    %106 = vector.broadcast %105 : vector<32x1xf32> to vector<32x256xf32>
    %107 = arith.addf %104, %106 : vector<32x256xf32>
    %cst_65 = arith.constant 1.000000e+02 : f32
    %108 = vector.broadcast %cst_65 : f32 to vector<32x256xf32>
    %109 = arith.mulf %107, %108 : vector<32x256xf32>
    %cst_66 = arith.constant 2.000000e+01 : f32
    %110 = vector.broadcast %cst_66 : f32 to vector<32x256xf32>
    %111 = arith.minimumf %109, %110 : vector<32x256xf32>
    %112 = math.exp %111 : vector<32x256xf32>
    %113 = math.log1p %112 : vector<32x256xf32>
    %cst_67 = arith.constant 0.00999999977 : f32
    %114 = vector.broadcast %cst_67 : f32 to vector<32x256xf32>
    %115 = arith.mulf %113, %114 : vector<32x256xf32>
    %cst_68 = arith.constant 2.000000e+01 : f32
    %116 = vector.broadcast %cst_68 : f32 to vector<32x256xf32>
    %117 = arith.cmpf ogt, %109, %116 : vector<32x256xf32>
    %118 = arith.select %117, %107, %115 : vector<32x256xi1>, vector<32x256xf32>
    %c0_69 = arith.constant 0 : index
    %c0_70 = arith.constant 0 : index
    %119 = vector.load %arg17[%c0_69, %c0_70] : memref<32x32xf32, #tpu.memory_space<vmem>>, vector<32x32xf32>
    %cst_71 = arith.constant dense<0.000000e+00> : vector<32x256xf32>
    %120 = tpu.matmul %119, %118, %cst_71 {dimension_numbers = #tpu.dot_dimension_numbers<[1], [0], [0], [1], [0, 0, 1, 1], [], []>} : vector<32x32xf32>, vector<32x256xf32>, vector<32x256xf32> -> vector<32x256xf32>
    %c0_72 = arith.constant 0 : index
    %c0_73 = arith.constant 0 : index
    %121 = vector.load %arg18[%c0_72, %c0_73] : memref<32x1xf32, #tpu.memory_space<vmem>>, vector<32x1xf32>
    %122 = vector.broadcast %121 : vector<32x1xf32> to vector<32x256xf32>
    %123 = arith.addf %120, %122 : vector<32x256xf32>
    %cst_74 = arith.constant 1.000000e+02 : f32
    %124 = vector.broadcast %cst_74 : f32 to vector<32x256xf32>
    %125 = arith.mulf %123, %124 : vector<32x256xf32>
    %cst_75 = arith.constant 2.000000e+01 : f32
    %126 = vector.broadcast %cst_75 : f32 to vector<32x256xf32>
    %127 = arith.minimumf %125, %126 : vector<32x256xf32>
    %128 = math.exp %127 : vector<32x256xf32>
    %129 = math.log1p %128 : vector<32x256xf32>
    %cst_76 = arith.constant 0.00999999977 : f32
    %130 = vector.broadcast %cst_76 : f32 to vector<32x256xf32>
    %131 = arith.mulf %129, %130 : vector<32x256xf32>
    %cst_77 = arith.constant 2.000000e+01 : f32
    %132 = vector.broadcast %cst_77 : f32 to vector<32x256xf32>
    %133 = arith.cmpf ogt, %125, %132 : vector<32x256xf32>
    %134 = arith.select %133, %123, %131 : vector<32x256xi1>, vector<32x256xf32>
    %c0_78 = arith.constant 0 : index
    %c0_79 = arith.constant 0 : index
    %135 = vector.load %arg19[%c0_78, %c0_79] : memref<32x1xf32, #tpu.memory_space<vmem>>, vector<32x1xf32>
    %136 = vector.broadcast %135 : vector<32x1xf32> to vector<32x256xf32>
    %137 = arith.mulf %136, %134 : vector<32x256xf32>
    %cst_80 = arith.constant dense<0.000000e+00> : vector<256xf32>
    %138 = vector.multi_reduction <add>, %137, %cst_80 [0] : vector<32x256xf32> to vector<256xf32>
    %139 = vector.shape_cast %138 : vector<256xf32> to vector<1x256xf32>
    %c0_81 = arith.constant 0 : index
    %c0_82 = arith.constant 0 : index
    %140 = vector.load %arg20[%c0_81, %c0_82] : memref<1x1xf32, #tpu.memory_space<vmem>>, vector<1x1xf32>
    %141 = vector.broadcast %140 : vector<1x1xf32> to vector<1x256xf32>
    %142 = arith.addf %139, %141 : vector<1x256xf32>
    %c0_83 = arith.constant 0 : index
    %c0_84 = arith.constant 0 : index
    %143 = vector.load %arg21[%c0_83, %c0_84] : memref<1x256xf32, #tpu.memory_space<vmem>>, vector<1x256xf32>
    tpu.vector_store %arg21[%c0_83, %c0_84], %142 {strides = array<i32>} : memref<1x256xf32, #tpu.memory_space<vmem>>, vector<1x256xf32>,
    return
  }
  func.func @transform_0(%arg0: i32) -> (i32, i32) {
    %c0_i32 = arith.constant 0 : i32
    %c0_i32_0 = arith.constant 0 : i32
    return %arg0, %c0_i32 : i32, i32
  }
  func.func @transform_1(%arg0: i32) -> (i32, i32) {
    %c0_i32 = arith.constant 0 : i32
    %c0_i32_0 = arith.constant 0 : i32
    %c0_i32_1 = arith.constant 0 : i32
    return %c0_i32, %c0_i32_0 : i32, i32
  }
  func.func @transform_2(%arg0: i32) -> (i32, i32) {
    %c0_i32 = arith.constant 0 : i32
    %c0_i32_0 = arith.constant 0 : i32
    %c0_i32_1 = arith.constant 0 : i32
    return %c0_i32, %c0_i32_0 : i32, i32
  }
  func.func @transform_3(%arg0: i32) -> (i32, i32) {
    %c0_i32 = arith.constant 0 : i32
    %c0_i32_0 = arith.constant 0 : i32
    %c0_i32_1 = arith.constant 0 : i32
    return %c0_i32, %c0_i32_0 : i32, i32
  }
  func.func @transform_4(%arg0: i32) -> (i32, i32) {
    %c0_i32 = arith.constant 0 : i32
    %c0_i32_0 = arith.constant 0 : i32
    %c0_i32_1 = arith.constant 0 : i32
    return %c0_i32, %c0_i32_0 : i32, i32
  }
  func.func @transform_5(%arg0: i32) -> (i32, i32) {
    %c0_i32 = arith.constant 0 : i32
    %c0_i32_0 = arith.constant 0 : i32
    %c0_i32_1 = arith.constant 0 : i32
    return %c0_i32, %c0_i32_0 : i32, i32
  }
  func.func @transform_6(%arg0: i32) -> (i32, i32) {
    %c0_i32 = arith.constant 0 : i32
    %c0_i32_0 = arith.constant 0 : i32
    %c0_i32_1 = arith.constant 0 : i32
    return %c0_i32, %c0_i32_0 : i32, i32
  }
  func.func @transform_7(%arg0: i32) -> (i32, i32) {
    %c0_i32 = arith.constant 0 : i32
    %c0_i32_0 = arith.constant 0 : i32
    %c0_i32_1 = arith.constant 0 : i32
    return %c0_i32, %c0_i32_0 : i32, i32
  }
  func.func @transform_8(%arg0: i32) -> (i32, i32) {
    %c0_i32 = arith.constant 0 : i32
    %c0_i32_0 = arith.constant 0 : i32
    %c0_i32_1 = arith.constant 0 : i32
    return %c0_i32, %c0_i32_0 : i32, i32
  }
  func.func @transform_9(%arg0: i32) -> (i32, i32) {
    %c0_i32 = arith.constant 0 : i32
    %c0_i32_0 = arith.constant 0 : i32
    %c0_i32_1 = arith.constant 0 : i32
    return %c0_i32, %c0_i32_0 : i32, i32
  }
  func.func @transform_10(%arg0: i32) -> (i32, i32) {
    %c0_i32 = arith.constant 0 : i32
    %c0_i32_0 = arith.constant 0 : i32
    %c0_i32_1 = arith.constant 0 : i32
    return %c0_i32, %c0_i32_0 : i32, i32
  }
  func.func @transform_11(%arg0: i32) -> (i32, i32) {
    %c0_i32 = arith.constant 0 : i32
    %c0_i32_0 = arith.constant 0 : i32
    %c0_i32_1 = arith.constant 0 : i32
    return %c0_i32, %c0_i32_0 : i32, i32
  }
  func.func @transform_12(%arg0: i32) -> (i32, i32) {
    %c0_i32 = arith.constant 0 : i32
    %c0_i32_0 = arith.constant 0 : i32
    %c0_i32_1 = arith.constant 0 : i32
    return %c0_i32, %c0_i32_0 : i32, i32
  }
  func.func @transform_13(%arg0: i32) -> (i32, i32) {
    %c0_i32 = arith.constant 0 : i32
    %c0_i32_0 = arith.constant 0 : i32
    %c0_i32_1 = arith.constant 0 : i32
    return %c0_i32, %c0_i32_0 : i32, i32
  }
  func.func @transform_14(%arg0: i32) -> (i32, i32) {
    %c0_i32 = arith.constant 0 : i32
    %c0_i32_0 = arith.constant 0 : i32
    %c0_i32_1 = arith.constant 0 : i32
    return %c0_i32, %c0_i32_0 : i32, i32
  }
  func.func @transform_15(%arg0: i32) -> (i32, i32) {
    %c0_i32 = arith.constant 0 : i32
    %c0_i32_0 = arith.constant 0 : i32
    %c0_i32_1 = arith.constant 0 : i32
    return %c0_i32, %c0_i32_0 : i32, i32
  }
  func.func @transform_16(%arg0: i32) -> (i32, i32) {
    %c0_i32 = arith.constant 0 : i32
    %c0_i32_0 = arith.constant 0 : i32
    %c0_i32_1 = arith.constant 0 : i32
    return %c0_i32, %c0_i32_0 : i32, i32
  }
  func.func @transform_17(%arg0: i32) -> (i32, i32) {
    %c0_i32 = arith.constant 0 : i32
    %c0_i32_0 = arith.constant 0 : i32
    %c0_i32_1 = arith.constant 0 : i32
    return %c0_i32, %c0_i32_0 : i32, i32
  }
  func.func @transform_18(%arg0: i32) -> (i32, i32) {
    %c0_i32 = arith.constant 0 : i32
    %c0_i32_0 = arith.constant 0 : i32
    %c0_i32_1 = arith.constant 0 : i32
    return %c0_i32, %c0_i32_0 : i32, i32
  }
  func.func @transform_19(%arg0: i32) -> (i32, i32) {
    %c0_i32 = arith.constant 0 : i32
    %c0_i32_0 = arith.constant 0 : i32
    %c0_i32_1 = arith.constant 0 : i32
    return %c0_i32, %c0_i32_0 : i32, i32
  }
  func.func @transform_20(%arg0: i32) -> (i32, i32) {
    %c0_i32 = arith.constant 0 : i32
    %c0_i32_0 = arith.constant 0 : i32
    return %c0_i32, %arg0 : i32, i32
  }
}

</mosaic_0001>

<llo_original>
// kernel: tpu_custom_call.1
$region0: #{tpu_custom_call.1}
  #allocation0 [shape = 'u32[]', space=smem, size = 0x4, offset = 0x4, fixed_abs, tag = 'smem constant byte address 0x4 - core index']
  #allocation1 [shape = 'u32[144,128]{1,0:T(1,128)}', space=vmem, size = 0x12000, scoped, tag = 'internal scratch']
  #allocation2 [shape = 'f32[1,1]{1,0:T(1,128)S(1)}', space=vmem, size = 0x200, scoped, tag = 'scoped memory for tpu_custom_call.1']
  %s0 = inlined_call_operand.vmem [shape: f32[1000,19], index: 0, kind: input, shape index: {}]
  %s1 = inlined_call_operand.vmem [shape: f32[32,19], index: 1, kind: input, shape index: {}]
  %s2 = inlined_call_operand.vmem [shape: f32[32,1], index: 2, kind: input, shape index: {}]
  %s3 = inlined_call_operand.vmem [shape: f32[32,32], index: 3, kind: input, shape index: {}]
  %s4 = inlined_call_operand.vmem [shape: f32[32,1], index: 4, kind: input, shape index: {}]
  %s5 = inlined_call_operand.vmem [shape: f32[32,32], index: 5, kind: input, shape index: {}]
  %s6 = inlined_call_operand.vmem [shape: f32[32,1], index: 6, kind: input, shape index: {}]
  %s7 = inlined_call_operand.vmem [shape: f32[13,32], index: 7, kind: input, shape index: {}]
  %s8 = inlined_call_operand.vmem [shape: f32[13,1], index: 8, kind: input, shape index: {}]
  %s9 = inlined_call_operand.vmem [shape: f32[32,13], index: 9, kind: input, shape index: {}]
  %s10 = inlined_call_operand.vmem [shape: f32[32,19], index: 10, kind: input, shape index: {}]
  %s11 = inlined_call_operand.vmem [shape: f32[32,1], index: 11, kind: input, shape index: {}]
  %s12 = inlined_call_operand.vmem [shape: f32[32,32], index: 12, kind: input, shape index: {}]
  %s13 = inlined_call_operand.vmem [shape: f32[32,1], index: 13, kind: input, shape index: {}]
  %s14 = inlined_call_operand.vmem [shape: f32[32,32], index: 14, kind: input, shape index: {}]
  %s15 = inlined_call_operand.vmem [shape: f32[32,1], index: 15, kind: input, shape index: {}]
  %s16 = inlined_call_operand.vmem [shape: f32[32,32], index: 16, kind: input, shape index: {}]
  %s17 = inlined_call_operand.vmem [shape: f32[32,1], index: 17, kind: input, shape index: {}]
  %s18 = inlined_call_operand.vmem [shape: f32[32,1], index: 18, kind: input, shape index: {}]
  %s19 = inlined_call_operand.<no memory space> [shape: f32[1,1], index: 19, kind: input, shape index: {}]
  %s20 = inlined_call_operand.hbm [shape: f32[1,1000], index: 20, kind: output, shape index: {}]
  %s21 = sld [smem:[#allocation0]]
  $region113: #{tpu_custom_call.1} parent=0
    _
  %s23 = ssub.s32 1, %s21
  %s24 = scalar_select 0, %s23, %s21
  %v25 = vstv %s19
  %26 = vst [vmem:[#allocation2] sm:$0x1] %v25
  $region1: #{tpu_custom_call.1} parent=0
    #allocation3 [shape = 'u8[2048]{0}', space=vmem, size = 0x800, scoped, tag = 'output window, operand 0']
    #allocation4 [shape = 's32[2]{0}', space=sflag, size = 0x8, scoped, tag = 'scoped memory for tpu_custom_call.1']
    %27 = vsyncpa [#allocation4], 0
    %s28 = scalar_lea.sflag [#allocation4], 1
    %29 = vsyncpa %s28, 0
    loop: start=0, step=1, limit=6
    $region2: #{tpu_custom_call.1} parent=1 // loop_pre_header
      _
    $region3: #{tpu_custom_call.1} parent=1 // loop_header
      %s31 = sphi 0, %s35
      %p32 = scmp.ge.s32.totalorder %s31, 6
      %s41 = sphi 0, %s43
      %s44 = sphi 0, %s41
      %s45 = sphi 0, %s44
      %s61 = sphi 0, %s45
      %s65 = sphi 0, %s65
      %s67 = sphi 0, %s65
      %s68 = sphi 0, %s67
      %s82 = sphi 0, %s68
      %s86 = sphi 0, %s86
      %s88 = sphi 0, %s86
      %s89 = sphi 0, %s88
      %s103 = sphi 0, %s89
      %s107 = sphi 0, %s107
      %s109 = sphi 0, %s107
      %s110 = sphi 0, %s109
      %s124 = sphi 0, %s110
      %s128 = sphi 0, %s128
      %s130 = sphi 0, %s128
      %s131 = sphi 0, %s130
      %s145 = sphi 0, %s131
      %s149 = sphi 0, %s149
      %s151 = sphi 0, %s149
      %s152 = sphi 0, %s151
      %s166 = sphi 0, %s152
      %s170 = sphi 0, %s170
      %s172 = sphi 0, %s170
      %s173 = sphi 0, %s172
      %s187 = sphi 0, %s173
      %s191 = sphi 0, %s191
      %s193 = sphi 0, %s191
      %s194 = sphi 0, %s193
      %s208 = sphi 0, %s194
      %s212 = sphi 0, %s212
      %s214 = sphi 0, %s212
      %s215 = sphi 0, %s214
      %s229 = sphi 0, %s215
      %s233 = sphi 0, %s233
      %s235 = sphi 0, %s233
      %s236 = sphi 0, %s235
      %s250 = sphi 0, %s236
      %s254 = sphi 0, %s254
      %s256 = sphi 0, %s254
      %s257 = sphi 0, %s256
      %s271 = sphi 0, %s257
      %s275 = sphi 0, %s275
      %s277 = sphi 0, %s275
      %s278 = sphi 0, %s277
      %s292 = sphi 0, %s278
      %s296 = sphi 0, %s296
      %s298 = sphi 0, %s296
      %s299 = sphi 0, %s298
      %s313 = sphi 0, %s299
      %s317 = sphi 0, %s317
      %s319 = sphi 0, %s317
      %s320 = sphi 0, %s319
      %s334 = sphi 0, %s320
      %s338 = sphi 0, %s338
      %s340 = sphi 0, %s338
      %s341 = sphi 0, %s340
      %s355 = sphi 0, %s341
      %s359 = sphi 0, %s359
      %s361 = sphi 0, %s359
      %s362 = sphi 0, %s361
      %s376 = sphi 0, %s362
      %s380 = sphi 0, %s380
      %s382 = sphi 0, %s380
      %s383 = sphi 0, %s382
      %s397 = sphi 0, %s383
      %s401 = sphi 0, %s401
      %s403 = sphi 0, %s401
      %s404 = sphi 0, %s403
      %s418 = sphi 0, %s404
      %s422 = sphi 0, %s422
      %s424 = sphi 0, %s422
      %s425 = sphi 0, %s424
      %s439 = sphi 0, %s425
      %s443 = sphi 0, %s443
      %s445 = sphi 0, %s443
      %s446 = sphi 0, %s445
      %s460 = sphi 0, %s446
      %s466 = sphi 0, %s468
      %s469 = sphi 0, %s466
      %s470 = sphi 0, %s469
      %s486 = sphi 0, %s470
    $region4: #{tpu_custom_call.1} parent=1 // loop_header_branch
      %34 = sbr.rel (%p32) target = $region8
    $region5: #{tpu_custom_call.1} parent=1 // loop_body
      %s36 = ssub.s32 %s31, 1
      %s37 = ssub.s32 %s31, 2
      %s38 = sadd.s32 %s31, 1
      %s39 = ssub.s32 %s31, %s38
      %p40 = scmp.eq.s32.totalorder %s39, 0
      %s42 = sadd.s32 %s41, 1
      %s43 = scalar_select %p40, %s41, %s42
      %p46 = pneg %p40
      %p47 = scmp.eq.s32.totalorder %s31, 3
      %p48 = por %p46, %p47
      %p49 = scmp.ne.s32.totalorder %s41, %s44
      %p50 = scmp.eq.s32.totalorder %s31, 0
      %p51 = por %p49, %p50
      %p52 = scmp.ne.s32.totalorder %s41, %s44
      %p53 = scmp.eq.s32.totalorder %s36, 3
      %p54 = por %p52, %p53
      %p55 = scmp.ne.s32.totalorder %s44, %s45
      %p56 = scmp.eq.s32.totalorder %s36, 0
      %p57 = por %p55, %p56
      %p58 = scmp.ne.s32.totalorder %s44, %s45
      %p59 = scmp.eq.s32.totalorder %s37, 3
      %p60 = por %p58, %p59
      %p62 = scmp.ne.s32.totalorder %s45, %s61
      %p63 = scmp.eq.s32.totalorder %s37, 0
      %p64 = por %p62, %p63
      %s66 = sadd.s32 %s65, 1
      %p69 = scmp.eq.s32.totalorder %s31, 3
      %p70 = scmp.ne.s32.totalorder %s65, %s67
      %p71 = scmp.eq.s32.totalorder %s31, 0
      %p72 = por %p70, %p71
      %p73 = scmp.ne.s32.totalorder %s65, %s67
      %p74 = scmp.eq.s32.totalorder %s36, 3
      %p75 = por %p73, %p74
      %p76 = scmp.ne.s32.totalorder %s67, %s68
      %p77 = scmp.eq.s32.totalorder %s36, 0
      %p78 = por %p76, %p77
      %p79 = scmp.ne.s32.totalorder %s67, %s68
      %p80 = scmp.eq.s32.totalorder %s37, 3
      %p81 = por %p79, %p80
      %p83 = scmp.ne.s32.totalorder %s68, %s82
      %p84 = scmp.eq.s32.totalorder %s37, 0
      %p85 = por %p83, %p84
      %s87 = sadd.s32 %s86, 1
      %p90 = scmp.eq.s32.totalorder %s31, 3
      %p91 = scmp.ne.s32.totalorder %s86, %s88
      %p92 = scmp.eq.s32.totalorder %s31, 0
      %p93 = por %p91, %p92
      %p94 = scmp.ne.s32.totalorder %s86, %s88
      %p95 = scmp.eq.s32.totalorder %s36, 3
      %p96 = por %p94, %p95
      %p97 = scmp.ne.s32.totalorder %s88, %s89
      %p98 = scmp.eq.s32.totalorder %s36, 0
      %p99 = por %p97, %p98
      %p100 = scmp.ne.s32.totalorder %s88, %s89
      %p101 = scmp.eq.s32.totalorder %s37, 3
      %p102 = por %p100, %p101
      %p104 = scmp.ne.s32.totalorder %s89, %s103
      %p105 = scmp.eq.s32.totalorder %s37, 0
      %p106 = por %p104, %p105
      %s108 = sadd.s32 %s107, 1
      %p111 = scmp.eq.s32.totalorder %s31, 3
      %p112 = scmp.ne.s32.totalorder %s107, %s109
      %p113 = scmp.eq.s32.totalorder %s31, 0
      %p114 = por %p112, %p113
      %p115 = scmp.ne.s32.totalorder %s107, %s109
      %p116 = scmp.eq.s32.totalorder %s36, 3
      %p117 = por %p115, %p116
      %p118 = scmp.ne.s32.totalorder %s109, %s110
      %p119 = scmp.eq.s32.totalorder %s36, 0
      %p120 = por %p118, %p119
      %p121 = scmp.ne.s32.totalorder %s109, %s110
      %p122 = scmp.eq.s32.totalorder %s37, 3
      %p123 = por %p121, %p122
      %p125 = scmp.ne.s32.totalorder %s110, %s124
      %p126 = scmp.eq.s32.totalorder %s37, 0
      %p127 = por %p125, %p126
      %s129 = sadd.s32 %s128, 1
      %p132 = scmp.eq.s32.totalorder %s31, 3
      %p133 = scmp.ne.s32.totalorder %s128, %s130
      %p134 = scmp.eq.s32.totalorder %s31, 0
      %p135 = por %p133, %p134
      %p136 = scmp.ne.s32.totalorder %s128, %s130
      %p137 = scmp.eq.s32.totalorder %s36, 3
      %p138 = por %p136, %p137
      %p139 = scmp.ne.s32.totalorder %s130, %s131
      %p140 = scmp.eq.s32.totalorder %s36, 0
      %p141 = por %p139, %p140
      %p142 = scmp.ne.s32.totalorder %s130, %s131
      %p143 = scmp.eq.s32.totalorder %s37, 3
      %p144 = por %p142, %p143
      %p146 = scmp.ne.s32.totalorder %s131, %s145
      %p147 = scmp.eq.s32.totalorder %s37, 0
      %p148 = por %p146, %p147
      %s150 = sadd.s32 %s149, 1
      %p153 = scmp.eq.s32.totalorder %s31, 3
      %p154 = scmp.ne.s32.totalorder %s149, %s151
      %p155 = scmp.eq.s32.totalorder %s31, 0
      %p156 = por %p154, %p155
      %p157 = scmp.ne.s32.totalorder %s149, %s151
      %p158 = scmp.eq.s32.totalorder %s36, 3
      %p159 = por %p157, %p158
      %p160 = scmp.ne.s32.totalorder %s151, %s152
      %p161 = scmp.eq.s32.totalorder %s36, 0
      %p162 = por %p160, %p161
      %p163 = scmp.ne.s32.totalorder %s151, %s152
      %p164 = scmp.eq.s32.totalorder %s37, 3
      %p165 = por %p163, %p164
      %p167 = scmp.ne.s32.totalorder %s152, %s166
      %p168 = scmp.eq.s32.totalorder %s37, 0
      %p169 = por %p167, %p168
      %s171 = sadd.s32 %s170, 1
      %p174 = scmp.eq.s32.totalorder %s31, 3
      %p175 = scmp.ne.s32.totalorder %s170, %s172
      %p176 = scmp.eq.s32.totalorder %s31, 0
      %p177 = por %p175, %p176
      %p178 = scmp.ne.s32.totalorder %s170, %s172
      %p179 = scmp.eq.s32.totalorder %s36, 3
      %p180 = por %p178, %p179
      %p181 = scmp.ne.s32.totalorder %s172, %s173
      %p182 = scmp.eq.s32.totalorder %s36, 0
      %p183 = por %p181, %p182
      %p184 = scmp.ne.s32.totalorder %s172, %s173
      %p185 = scmp.eq.s32.totalorder %s37, 3
      %p186 = por %p184, %p185
      %p188 = scmp.ne.s32.totalorder %s173, %s187
      %p189 = scmp.eq.s32.totalorder %s37, 0
      %p190 = por %p188, %p189
      %s192 = sadd.s32 %s191, 1
      %p195 = scmp.eq.s32.totalorder %s31, 3
      %p196 = scmp.ne.s32.totalorder %s191, %s193
      %p197 = scmp.eq.s32.totalorder %s31, 0
      %p198 = por %p196, %p197
      %p199 = scmp.ne.s32.totalorder %s191, %s193
      %p200 = scmp.eq.s32.totalorder %s36, 3
      %p201 = por %p199, %p200
      %p202 = scmp.ne.s32.totalorder %s193, %s194
      %p203 = scmp.eq.s32.totalorder %s36, 0
      %p204 = por %p202, %p203
      %p205 = scmp.ne.s32.totalorder %s193, %s194
      %p206 = scmp.eq.s32.totalorder %s37, 3
      %p207 = por %p205, %p206
      %p209 = scmp.ne.s32.totalorder %s194, %s208
      %p210 = scmp.eq.s32.totalorder %s37, 0
      %p211 = por %p209, %p210
      %s213 = sadd.s32 %s212, 1
      %p216 = scmp.eq.s32.totalorder %s31, 3
      %p217 = scmp.ne.s32.totalorder %s212, %s214
      %p218 = scmp.eq.s32.totalorder %s31, 0
      %p219 = por %p217, %p218
      %p220 = scmp.ne.s32.totalorder %s212, %s214
      %p221 = scmp.eq.s32.totalorder %s36, 3
      %p222 = por %p220, %p221
      %p223 = scmp.ne.s32.totalorder %s214, %s215
      %p224 = scmp.eq.s32.totalorder %s36, 0
      %p225 = por %p223, %p224
      %p226 = scmp.ne.s32.totalorder %s214, %s215
      %p227 = scmp.eq.s32.totalorder %s37, 3
      %p228 = por %p226, %p227
      %p230 = scmp.ne.s32.totalorder %s215, %s229
      %p231 = scmp.eq.s32.totalorder %s37, 0
      %p232 = por %p230, %p231
      %s234 = sadd.s32 %s233, 1
      %p237 = scmp.eq.s32.totalorder %s31, 3
      %p238 = scmp.ne.s32.totalorder %s233, %s235
      %p239 = scmp.eq.s32.totalorder %s31, 0
      %p240 = por %p238, %p239
      %p241 = scmp.ne.s32.totalorder %s233, %s235
      %p242 = scmp.eq.s32.totalorder %s36, 3
      %p243 = por %p241, %p242
      %p244 = scmp.ne.s32.totalorder %s235, %s236
      %p245 = scmp.eq.s32.totalorder %s36, 0
      %p246 = por %p244, %p245
      %p247 = scmp.ne.s32.totalorder %s235, %s236
      %p248 = scmp.eq.s32.totalorder %s37, 3
      %p249 = por %p247, %p248
      %p251 = scmp.ne.s32.totalorder %s236, %s250
      %p252 = scmp.eq.s32.totalorder %s37, 0
      %p253 = por %p251, %p252
      %s255 = sadd.s32 %s254, 1
      %p258 = scmp.eq.s32.totalorder %s31, 3
      %p259 = scmp.ne.s32.totalorder %s254, %s256
      %p260 = scmp.eq.s32.totalorder %s31, 0
      %p261 = por %p259, %p260
      %p262 = scmp.ne.s32.totalorder %s254, %s256
      %p263 = scmp.eq.s32.totalorder %s36, 3
      %p264 = por %p262, %p263
      %p265 = scmp.ne.s32.totalorder %s256, %s257
      %p266 = scmp.eq.s32.totalorder %s36, 0
      %p267 = por %p265, %p266
      %p268 = scmp.ne.s32.totalorder %s256, %s257
      %p269 = scmp.eq.s32.totalorder %s37, 3
      %p270 = por %p268, %p269
      %p272 = scmp.ne.s32.totalorder %s257, %s271
      %p273 = scmp.eq.s32.totalorder %s37, 0
      %p274 = por %p272, %p273
      %s276 = sadd.s32 %s275, 1
      %p279 = scmp.eq.s32.totalorder %s31, 3
      %p280 = scmp.ne.s32.totalorder %s275, %s277
      %p281 = scmp.eq.s32.totalorder %s31, 0
      %p282 = por %p280, %p281
      %p283 = scmp.ne.s32.totalorder %s275, %s277
      %p284 = scmp.eq.s32.totalorder %s36, 3
      %p285 = por %p283, %p284
      %p286 = scmp.ne.s32.totalorder %s277, %s278
      %p287 = scmp.eq.s32.totalorder %s36, 0
      %p288 = por %p286, %p287
      %p289 = scmp.ne.s32.totalorder %s277, %s278
      %p290 = scmp.eq.s32.totalorder %s37, 3
      %p291 = por %p289, %p290
      %p293 = scmp.ne.s32.totalorder %s278, %s292
      %p294 = scmp.eq.s32.totalorder %s37, 0
      %p295 = por %p293, %p294
      %s297 = sadd.s32 %s296, 1
      %p300 = scmp.eq.s32.totalorder %s31, 3
      %p301 = scmp.ne.s32.totalorder %s296, %s298
      %p302 = scmp.eq.s32.totalorder %s31, 0
      %p303 = por %p301, %p302
      %p304 = scmp.ne.s32.totalorder %s296, %s298
      %p305 = scmp.eq.s32.totalorder %s36, 3
      %p306 = por %p304, %p305
      %p307 = scmp.ne.s32.totalorder %s298, %s299
      %p308 = scmp.eq.s32.totalorder %s36, 0
      %p309 = por %p307, %p308
      %p310 = scmp.ne.s32.totalorder %s298, %s299
      %p311 = scmp.eq.s32.totalorder %s37, 3
      %p312 = por %p310, %p311
      %p314 = scmp.ne.s32.totalorder %s299, %s313
      %p315 = scmp.eq.s32.totalorder %s37, 0
      %p316 = por %p314, %p315
      %s318 = sadd.s32 %s317, 1
      %p321 = scmp.eq.s32.totalorder %s31, 3
      %p322 = scmp.ne.s32.totalorder %s317, %s319
      %p323 = scmp.eq.s32.totalorder %s31, 0
      %p324 = por %p322, %p323
      %p325 = scmp.ne.s32.totalorder %s317, %s319
      %p326 = scmp.eq.s32.totalorder %s36, 3
      %p327 = por %p325, %p326
      %p328 = scmp.ne.s32.totalorder %s319, %s320
      %p329 = scmp.eq.s32.totalorder %s36, 0
      %p330 = por %p328, %p329
      %p331 = scmp.ne.s32.totalorder %s319, %s320
      %p332 = scmp.eq.s32.totalorder %s37, 3
      %p333 = por %p331, %p332
      %p335 = scmp.ne.s32.totalorder %s320, %s334
      %p336 = scmp.eq.s32.totalorder %s37, 0
      %p337 = por %p335, %p336
      %s339 = sadd.s32 %s338, 1
      %p342 = scmp.eq.s32.totalorder %s31, 3
      %p343 = scmp.ne.s32.totalorder %s338, %s340
      %p344 = scmp.eq.s32.totalorder %s31, 0
      %p345 = por %p343, %p344
      %p346 = scmp.ne.s32.totalorder %s338, %s340
      %p347 = scmp.eq.s32.totalorder %s36, 3
      %p348 = por %p346, %p347
      %p349 = scmp.ne.s32.totalorder %s340, %s341
      %p350 = scmp.eq.s32.totalorder %s36, 0
      %p351 = por %p349, %p350
      %p352 = scmp.ne.s32.totalorder %s340, %s341
      %p353 = scmp.eq.s32.totalorder %s37, 3
      %p354 = por %p352, %p353
      %p356 = scmp.ne.s32.totalorder %s341, %s355
      %p357 = scmp.eq.s32.totalorder %s37, 0
      %p358 = por %p356, %p357
      %s360 = sadd.s32 %s359, 1
      %p363 = scmp.eq.s32.totalorder %s31, 3
      %p364 = scmp.ne.s32.totalorder %s359, %s361
      %p365 = scmp.eq.s32.totalorder %s31, 0
      %p366 = por %p364, %p365
      %p367 = scmp.ne.s32.totalorder %s359, %s361
      %p368 = scmp.eq.s32.totalorder %s36, 3
      %p369 = por %p367, %p368
      %p370 = scmp.ne.s32.totalorder %s361, %s362
      %p371 = scmp.eq.s32.totalorder %s36, 0
      %p372 = por %p370, %p371
      %p373 = scmp.ne.s32.totalorder %s361, %s362
      %p374 = scmp.eq.s32.totalorder %s37, 3
      %p375 = por %p373, %p374
      %p377 = scmp.ne.s32.totalorder %s362, %s376
      %p378 = scmp.eq.s32.totalorder %s37, 0
      %p379 = por %p377, %p378
      %s381 = sadd.s32 %s380, 1
      %p384 = scmp.eq.s32.totalorder %s31, 3
      %p385 = scmp.ne.s32.totalorder %s380, %s382
      %p386 = scmp.eq.s32.totalorder %s31, 0
      %p387 = por %p385, %p386
      %p388 = scmp.ne.s32.totalorder %s380, %s382
      %p389 = scmp.eq.s32.totalorder %s36, 3
      %p390 = por %p388, %p389
      %p391 = scmp.ne.s32.totalorder %s382, %s383
      %p392 = scmp.eq.s32.totalorder %s36, 0
      %p393 = por %p391, %p392
      %p394 = scmp.ne.s32.totalorder %s382, %s383
      %p395 = scmp.eq.s32.totalorder %s37, 3
      %p396 = por %p394, %p395
      %p398 = scmp.ne.s32.totalorder %s383, %s397
      %p399 = scmp.eq.s32.totalorder %s37, 0
      %p400 = por %p398, %p399
      %s402 = sadd.s32 %s401, 1
      %p405 = scmp.eq.s32.totalorder %s31, 3
      %p406 = scmp.ne.s32.totalorder %s401, %s403
      %p407 = scmp.eq.s32.totalorder %s31, 0
      %p408 = por %p406, %p407
      %p409 = scmp.ne.s32.totalorder %s401, %s403
      %p410 = scmp.eq.s32.totalorder %s36, 3
      %p411 = por %p409, %p410
      %p412 = scmp.ne.s32.totalorder %s403, %s404
      %p413 = scmp.eq.s32.totalorder %s36, 0
      %p414 = por %p412, %p413
      %p415 = scmp.ne.s32.totalorder %s403, %s404
      %p416 = scmp.eq.s32.totalorder %s37, 3
      %p417 = por %p415, %p416
      %p419 = scmp.ne.s32.totalorder %s404, %s418
      %p420 = scmp.eq.s32.totalorder %s37, 0
      %p421 = por %p419, %p420
      %s423 = sadd.s32 %s422, 1
      %p426 = scmp.eq.s32.totalorder %s31, 3
      %p427 = scmp.ne.s32.totalorder %s422, %s424
      %p428 = scmp.eq.s32.totalorder %s31, 0
      %p429 = por %p427, %p428
      %p430 = scmp.ne.s32.totalorder %s422, %s424
      %p431 = scmp.eq.s32.totalorder %s36, 3
      %p432 = por %p430, %p431
      %p433 = scmp.ne.s32.totalorder %s424, %s425
      %p434 = scmp.eq.s32.totalorder %s36, 0
      %p435 = por %p433, %p434
      %p436 = scmp.ne.s32.totalorder %s424, %s425
      %p437 = scmp.eq.s32.totalorder %s37, 3
      %p438 = por %p436, %p437
      %p440 = scmp.ne.s32.totalorder %s425, %s439
      %p441 = scmp.eq.s32.totalorder %s37, 0
      %p442 = por %p440, %p441
      %s444 = sadd.s32 %s443, 1
      %p447 = scmp.eq.s32.totalorder %s31, 3
      %p448 = scmp.ne.s32.totalorder %s443, %s445
      %p449 = scmp.eq.s32.totalorder %s31, 0
      %p450 = por %p448, %p449
      %p451 = scmp.ne.s32.totalorder %s443, %s445
      %p452 = scmp.eq.s32.totalorder %s36, 3
      %p453 = por %p451, %p452
      %p454 = scmp.ne.s32.totalorder %s445, %s446
      %p455 = scmp.eq.s32.totalorder %s36, 0
      %p456 = por %p454, %p455
      %p457 = scmp.ne.s32.totalorder %s445, %s446
      %p458 = scmp.eq.s32.totalorder %s37, 3
      %p459 = por %p457, %p458
      %p461 = scmp.ne.s32.totalorder %s446, %s460
      %p462 = scmp.eq.s32.totalorder %s37, 0
      %p463 = por %p461, %p462
      %s464 = ssub.s32 %s31, %s38
      %p465 = scmp.eq.s32.totalorder %s464, 0
      %s467 = sadd.s32 %s466, 1
      %s468 = scalar_select %p465, %s466, %s467
      %p471 = pneg %p465
      %p472 = scmp.eq.s32.totalorder %s31, 3
      %p473 = por %p471, %p472
      %p474 = scmp.ne.s32.totalorder %s466, %s469
      %p475 = scmp.eq.s32.totalorder %s31, 0
      %p476 = por %p474, %p475
      %p477 = scmp.ne.s32.totalorder %s466, %s469
      %p478 = scmp.eq.s32.totalorder %s36, 3
      %p479 = por %p477, %p478
      %p480 = scmp.ne.s32.totalorder %s469, %s470
      %p481 = scmp.eq.s32.totalorder %s36, 0
      %p482 = por %p480, %p481
      %p483 = scmp.ne.s32.totalorder %s469, %s470
      %p484 = scmp.eq.s32.totalorder %s37, 3
      %p485 = por %p483, %p484
      %p487 = scmp.ne.s32.totalorder %s470, %s486
      %p488 = scmp.eq.s32.totalorder %s37, 0
      %p489 = por %p487, %p488
      %p490 = scmp.le.s32.totalorder 1, %s31
      %p491 = scmp.lt.s32.totalorder %s31, 5
      %p492 = pnand %p490, %p491
      %p493 = pneg %p492
      // Predicated region
      $region9: #{tpu_custom_call.1} parent=5 // pred_check
        _
      $region10: #{tpu_custom_call.1} parent=5 // pred_check_branch
        %495 = sbr.rel (%p492) target = $region12
      $region11: #{tpu_custom_call.1} parent=5 // pred_region
        %s496 = ssub.s32 %s31, 1
        // Predicated region
        $region13: #{tpu_custom_call.1} parent=11 // pred_check
          %p497 = pneg %p78
        $region14: #{tpu_custom_call.1} parent=11 // pred_check_branch
          %499 = sbr.rel (%p497) target = $region16
        $region15: #{tpu_custom_call.1} parent=11 // pred_region
          _
        $region16: #{tpu_custom_call.1} parent=11 // pred_fallthru
          _
        // Predicated region
        $region17: #{tpu_custom_call.1} parent=11 // pred_check
          %p500 = pneg %p99
        $region18: #{tpu_custom_call.1} parent=11 // pred_check_branch
          %502 = sbr.rel (%p500) target = $region20
        $region19: #{tpu_custom_call.1} parent=11 // pred_region
          _
        $region20: #{tpu_custom_call.1} parent=11 // pred_fallthru
          _
        // Predicated region
        $region21: #{tpu_custom_call.1} parent=11 // pred_check
          %p503 = pneg %p120
        $region22: #{tpu_custom_call.1} parent=11 // pred_check_branch
          %505 = sbr.rel (%p503) target = $region24
        $region23: #{tpu_custom_call.1} parent=11 // pred_region
          _
        $region24: #{tpu_custom_call.1} parent=11 // pred_fallthru
          _
        // Predicated region
        $region25: #{tpu_custom_call.1} parent=11 // pred_check
          %p506 = pneg %p141
        $region26: #{tpu_custom_call.1} parent=11 // pred_check_branch
          %508 = sbr.rel (%p506) target = $region28
        $region27: #{tpu_custom_call.1} parent=11 // pred_region
          _
        $region28: #{tpu_custom_call.1} parent=11 // pred_fallthru
          _
        // Predicated region
        $region29: #{tpu_custom_call.1} parent=11 // pred_check
          %p509 = pneg %p162
        $region30: #{tpu_custom_call.1} parent=11 // pred_check_branch
          %511 = sbr.rel (%p509) target = $region32
        $region31: #{tpu_custom_call.1} parent=11 // pred_region
          _
        $region32: #{tpu_custom_call.1} parent=11 // pred_fallthru
          _
        // Predicated region
        $region33: #{tpu_custom_call.1} parent=11 // pred_check
          %p512 = pneg %p183
        $region34: #{tpu_custom_call.1} parent=11 // pred_check_branch
          %514 = sbr.rel (%p512) target = $region36
        $region35: #{tpu_custom_call.1} parent=11 // pred_region
          _
        $region36: #{tpu_custom_call.1} parent=11 // pred_fallthru
          _
        // Predicated region
        $region37: #{tpu_custom_call.1} parent=11 // pred_check
          %p515 = pneg %p204
        $region38: #{tpu_custom_call.1} parent=11 // pred_check_branch
          %517 = sbr.rel (%p515) target = $region40
        $region39: #{tpu_custom_call.1} parent=11 // pred_region
          _
        $region40: #{tpu_custom_call.1} parent=11 // pred_fallthru
          _
        // Predicated region
        $region41: #{tpu_custom_call.1} parent=11 // pred_check
          %p518 = pneg %p225
        $region42: #{tpu_custom_call.1} parent=11 // pred_check_branch
          %520 = sbr.rel (%p518) target = $region44
        $region43: #{tpu_custom_call.1} parent=11 // pred_region
          _
        $region44: #{tpu_custom_call.1} parent=11 // pred_fallthru
          _
        // Predicated region
        $region45: #{tpu_custom_call.1} parent=11 // pred_check
          %p521 = pneg %p246
        $region46: #{tpu_custom_call.1} parent=11 // pred_check_branch
          %523 = sbr.rel (%p521) target = $region48
        $region47: #{tpu_custom_call.1} parent=11 // pred_region
          _
        $region48: #{tpu_custom_call.1} parent=11 // pred_fallthru
          _
        // Predicated region
        $region49: #{tpu_custom_call.1} parent=11 // pred_check
          %p524 = pneg %p267
        $region50: #{tpu_custom_call.1} parent=11 // pred_check_branch
          %526 = sbr.rel (%p524) target = $region52
        $region51: #{tpu_custom_call.1} parent=11 // pred_region
          _
        $region52: #{tpu_custom_call.1} parent=11 // pred_fallthru
          _
        // Predicated region
        $region53: #{tpu_custom_call.1} parent=11 // pred_check
          %p527 = pneg %p288
        $region54: #{tpu_custom_call.1} parent=11 // pred_check_branch
          %529 = sbr.rel (%p527) target = $region56
        $region55: #{tpu_custom_call.1} parent=11 // pred_region
          _
        $region56: #{tpu_custom_call.1} parent=11 // pred_fallthru
          _
        // Predicated region
        $region57: #{tpu_custom_call.1} parent=11 // pred_check
          %p530 = pneg %p309
        $region58: #{tpu_custom_call.1} parent=11 // pred_check_branch
          %532 = sbr.rel (%p530) target = $region60
        $region59: #{tpu_custom_call.1} parent=11 // pred_region
          _
        $region60: #{tpu_custom_call.1} parent=11 // pred_fallthru
          _
        // Predicated region
        $region61: #{tpu_custom_call.1} parent=11 // pred_check
          %p533 = pneg %p330
        $region62: #{tpu_custom_call.1} parent=11 // pred_check_branch
          %535 = sbr.rel (%p533) target = $region64
        $region63: #{tpu_custom_call.1} parent=11 // pred_region
          _
        $region64: #{tpu_custom_call.1} parent=11 // pred_fallthru
          _
        // Predicated region
        $region65: #{tpu_custom_call.1} parent=11 // pred_check
          %p536 = pneg %p351
        $region66: #{tpu_custom_call.1} parent=11 // pred_check_branch
          %538 = sbr.rel (%p536) target = $region68
        $region67: #{tpu_custom_call.1} parent=11 // pred_region
          _
        $region68: #{tpu_custom_call.1} parent=11 // pred_fallthru
          _
        // Predicated region
        $region69: #{tpu_custom_call.1} parent=11 // pred_check
          %p539 = pneg %p372
        $region70: #{tpu_custom_call.1} parent=11 // pred_check_branch
          %541 = sbr.rel (%p539) target = $region72
        $region71: #{tpu_custom_call.1} parent=11 // pred_region
          _
        $region72: #{tpu_custom_call.1} parent=11 // pred_fallthru
          _
        // Predicated region
        $region73: #{tpu_custom_call.1} parent=11 // pred_check
          %p542 = pneg %p393
        $region74: #{tpu_custom_call.1} parent=11 // pred_check_branch
          %544 = sbr.rel (%p542) target = $region76
        $region75: #{tpu_custom_call.1} parent=11 // pred_region
          _
        $region76: #{tpu_custom_call.1} parent=11 // pred_fallthru
          _
        // Predicated region
        $region77: #{tpu_custom_call.1} parent=11 // pred_check
          %p545 = pneg %p414
        $region78: #{tpu_custom_call.1} parent=11 // pred_check_branch
          %547 = sbr.rel (%p545) target = $region80
        $region79: #{tpu_custom_call.1} parent=11 // pred_region
          _
        $region80: #{tpu_custom_call.1} parent=11 // pred_fallthru
          _
        // Predicated region
        $region81: #{tpu_custom_call.1} parent=11 // pred_check
          %p548 = pneg %p435
        $region82: #{tpu_custom_call.1} parent=11 // pred_check_branch
          %550 = sbr.rel (%p548) target = $region84
        $region83: #{tpu_custom_call.1} parent=11 // pred_region
          _
        $region84: #{tpu_custom_call.1} parent=11 // pred_fallthru
          _
        // Predicated region
        $region85: #{tpu_custom_call.1} parent=11 // pred_check
          %p551 = pneg %p456
        $region86: #{tpu_custom_call.1} parent=11 // pred_check_branch
          %553 = sbr.rel (%p551) target = $region88
        $region87: #{tpu_custom_call.1} parent=11 // pred_region
          _
        $region88: #{tpu_custom_call.1} parent=11 // pred_fallthru
          _
      $region12: #{tpu_custom_call.1} parent=5 // pred_fallthru
        _
      %p554 = scmp.lt.s32.totalorder %s31, 4
      // Predicated region
      $region89: #{tpu_custom_call.1} parent=5 // pred_check
        %p555 = pneg %p554
      $region90: #{tpu_custom_call.1} parent=5 // pred_check_branch
        %557 = sbr.rel (%p555) target = $region92
      $region91: #{tpu_custom_call.1} parent=5 // pred_region
        // Predicated region
        $region93: #{tpu_custom_call.1} parent=91 // pred_check
          %p558 = pneg %p51
        $region94: #{tpu_custom_call.1} parent=91 // pred_check_branch
          %560 = sbr.rel (%p558) target = $region96
        $region95: #{tpu_custom_call.1} parent=91 // pred_region
          %s561 = smul.u32 32, %s31
          %s562 = ssub.s32 125, %s561
          %p563 = scmp.lt.s32.totalorder %s562, 32
          %s564 = scalar_select %p563, %s562, 32
          %s565 = smul.u32 128, %s564
          %p566 = scmp.lt.s32.totalorder %s561, 124
          %s567 = scalar_select %p566, %s561, 124
          %s568 = smul.addr %s567, 8
          %s569 = scalar_lea.vmem %s0, %s568
          %s570 = smul.u32 32, %s31
          %s571 = ssub.s32 125, %s570
          %p572 = scmp.lt.s32.totalorder %s571, 32
          %s573 = scalar_select %p572, %s571, 32
          %s574 = smul.u32 128, %s573
        $region96: #{tpu_custom_call.1} parent=91 // pred_fallthru
          _
      $region92: #{tpu_custom_call.1} parent=5 // pred_fallthru
        _
      %p575 = scmp.le.s32.totalorder 1, %s31
      %p576 = scmp.lt.s32.totalorder %s31, 5
      %p577 = pnand %p575, %p576
      %p578 = pneg %p577
      // Predicated region
      $region97: #{tpu_custom_call.1} parent=5 // pred_check
        _
      $region98: #{tpu_custom_call.1} parent=5 // pred_check_branch
        %580 = sbr.rel (%p577) target = $region100
      $region99: #{tpu_custom_call.1} parent=5 // pred_region
        %s581 = ssub.s32 %s31, 1
        %s582 = smul.u32 32, %s36
        %s583 = ssub.s32 125, %s582
        %p584 = scmp.lt.s32.totalorder %s583, 32
        %s585 = scalar_select %p584, %s583, 32
        %s586 = smul.u32 128, %s585
        %p587 = scmp.lt.s32.totalorder %s582, 124
        %s588 = scalar_select %p587, %s582, 124
        %s589 = smul.addr %s588, 8
        %s590 = scalar_lea.vmem %s0, %s589
        %p591 = pneg %p57
        %p592 = pneg %p54
        %p593 = pneg %p78
        %p594 = pneg %p75
        %p595 = pneg %p99
        %p596 = pneg %p96
        %p597 = pneg %p120
        %p598 = pneg %p117
        %p599 = pneg %p141
        %p600 = pneg %p138
        %p601 = pneg %p162
        %p602 = pneg %p159
        %p603 = pneg %p183
        %p604 = pneg %p180
        %p605 = pneg %p204
        %p606 = pneg %p201
        %p607 = pneg %p225
        %p608 = pneg %p222
        %p609 = pneg %p246
        %p610 = pneg %p243
        %p611 = pneg %p267
        %p612 = pneg %p264
        %p613 = pneg %p288
        %p614 = pneg %p285
        %p615 = pneg %p309
        %p616 = pneg %p306
        %p617 = pneg %p330
        %p618 = pneg %p327
        %p619 = pneg %p351
        %p620 = pneg %p348
        %p621 = pneg %p372
        %p622 = pneg %p369
        %p623 = pneg %p393
        %p624 = pneg %p390
        %p625 = pneg %p414
        %p626 = pneg %p411
        %p627 = pneg %p435
        %p628 = pneg %p432
        %p629 = pneg %p456
        %p630 = pneg %p453
        %p631 = pneg %p482
        %p632 = pneg %p479
        %s633 = sand.u32 %s469, 1
        %s634 = scalar_lea.sflag [#allocation4], %s633
        %s635 = sand.u32 %s469, 1
        %s636 = smul.addr %s635, 2
        %s637 = scalar_lea.vmem [#allocation3], %s636
        %s638 = smul.u32 32, %s36
        %s639 = ssub.s32 125, %s638
        %p640 = scmp.lt.s32.totalorder %s639, 32
        %s641 = scalar_select %p640, %s639, 32
        %s642 = smul.u32 128, %s641
        %p643 = scmp.lt.s32.totalorder %s638, 124
        %s644 = scalar_select %p643, %s638, 124
        %s645 = smul.addr %s644, 8
        %s646 = scalar_lea.vmem %s0, %s645
        %s647 = smul.u32 32, %s36
        %s648 = ssub.s32 125, %s647
        %p649 = scmp.lt.s32.totalorder %s648, 32
        %s650 = scalar_select %p649, %s648, 32
        %s651 = smul.u32 128, %s650
        %s652 = smul.u32 2, %s36
        %v653 = vld [vmem:[%s1] sm:$0xff]
        %v654 = vld [vmem:[%s1 + $0x8] sm:$0xff]
        %v655 = vld [vmem:[%s1 + $0x10] sm:$0xff]
        %v656 = vld [vmem:[%s1 + $0x18] sm:$0xff]
        %v657 = vld [vmem:[%s646] sm:$0xff]
        %v658 = vld [vmem:[%s646 + $0x8] sm:$0xff]
        %v659 = vld [vmem:[%s646 + $0x10] sm:$0xff]
        %v660 = vld [vmem:[%s646 + $0x18] sm:$0xff]
        %v661 = vld [vmem:[%s646 + $0x20] sm:$0xff]
        %v662 = vld [vmem:[%s646 + $0x28] sm:$0xff]
        %v663 = vld [vmem:[%s646 + $0x30] sm:$0xff]
        %v664 = vld [vmem:[%s646 + $0x38] sm:$0xff]
        %v665 = vld [vmem:[%s646 + $0x40] sm:$0xff]
        %v666 = vld [vmem:[%s646 + $0x48] sm:$0xff]
        %v667 = vld [vmem:[%s646 + $0x50] sm:$0xff]
        %v668 = vld [vmem:[%s646 + $0x58] sm:$0xff]
        %v669 = vld [vmem:[%s646 + $0x60] sm:$0xff]
        %v670 = vld [vmem:[%s646 + $0x68] sm:$0xff]
        %v671 = vld [vmem:[%s646 + $0x70] sm:$0xff]
        %v672 = vld [vmem:[%s646 + $0x78] sm:$0xff]
        %v673 = vld [vmem:[%s646 + $0x80] sm:$0xff]
        %v674 = vld [vmem:[%s646 + $0x88] sm:$0xff]
        %v675 = vld [vmem:[%s646 + $0x90] sm:$0xff]
        %v676 = vld [vmem:[%s646 + $0x98] sm:$0xff]
        %v677 = vld [vmem:[%s646 + $0xa0] sm:$0xff]
        %v678 = vld [vmem:[%s646 + $0xa8] sm:$0xff]
        %v679 = vld [vmem:[%s646 + $0xb0] sm:$0xff]
        %v680 = vld [vmem:[%s646 + $0xb8] sm:$0xff]
        %v681 = vld [vmem:[%s646 + $0xc0] sm:$0xff]
        %v682 = vld [vmem:[%s646 + $0xc8] sm:$0xff]
        %v683 = vld [vmem:[%s646 + $0xd0] sm:$0xff]
        %v684 = vld [vmem:[%s646 + $0xd8] sm:$0xff]
        %v685 = vld [vmem:[%s646 + $0xe0] sm:$0xff]
        %v686 = vld [vmem:[%s646 + $0xe8] sm:$0xff]
        %v687 = vld [vmem:[%s646 + $0xf0] sm:$0xff]
        %v688 = vld [vmem:[%s646 + $0xf8] sm:$0xff]
        %v689 = vld [vmem:[%s2] sm:$0xff]
        %v690 = vld [vmem:[%s2 + $0x8] sm:$0xff]
        %v691 = vld [vmem:[%s2 + $0x10] sm:$0xff]
        %v692 = vld [vmem:[%s2 + $0x18] sm:$0xff]
        %694 = vset.pattern.permute.xlu0 0
        %695 = vperm.xlu0 %694, %v689
        %v696 = vpop.permute.xlu0 %695
        %699 = vset.pattern.permute.xlu0 0
        %700 = vperm.xlu0 %699, %v690
        %v701 = vpop.permute.xlu0 %700
        %704 = vset.pattern.permute.xlu0 0
        %705 = vperm.xlu0 %704, %v691
        %v706 = vpop.permute.xlu0 %705
        %709 = vset.pattern.permute.xlu0 0
        %710 = vperm.xlu0 %709, %v692
        %v711 = vpop.permute.xlu0 %710
        %vm713 = vcmask 154624
        %v715 = vsel %vm713, %v653, 0
        %v718 = vsel %vm713, %v654, 0
        %v721 = vsel %vm713, %v655, 0
        %v724 = vsel %vm713, %v656, 0
        %v727 = vsel %vm713, %v657, 0
        %v730 = vsel %vm713, %v658, 0
        %v733 = vsel %vm713, %v659, 0
        %v736 = vsel %vm713, %v660, 0
        %v739 = vsel %vm713, %v661, 0
        %v742 = vsel %vm713, %v662, 0
        %v745 = vsel %vm713, %v663, 0
        %v748 = vsel %vm713, %v664, 0
        %v751 = vsel %vm713, %v665, 0
        %v754 = vsel %vm713, %v666, 0
        %v757 = vsel %vm713, %v667, 0
        %v760 = vsel %vm713, %v668, 0
        %v763 = vsel %vm713, %v669, 0
        %v766 = vsel %vm713, %v670, 0
        %v769 = vsel %vm713, %v671, 0
        %v772 = vsel %vm713, %v672, 0
        %v775 = vsel %vm713, %v673, 0
        %v778 = vsel %vm713, %v674, 0
        %v781 = vsel %vm713, %v675, 0
        %v784 = vsel %vm713, %v676, 0
        %v787 = vsel %vm713, %v677, 0
        %v790 = vsel %vm713, %v678, 0
        %v793 = vsel %vm713, %v679, 0
        %v796 = vsel %vm713, %v680, 0
        %v799 = vsel %vm713, %v681, 0
        %v802 = vsel %vm713, %v682, 0
        %v805 = vsel %vm713, %v683, 0
        %v808 = vsel %vm713, %v684, 0
        %v811 = vsel %vm713, %v685, 0
        %v814 = vsel %vm713, %v686, 0
        %v817 = vsel %vm713, %v687, 0
        %v820 = vsel %vm713, %v688, 0
        %822 = vmatprep.subr.mxu0 0.0
        %823 = vmatpush1.xpose.msra.mxu0 %v727
        %824 = vmatprep.subr.mxu0 0.0
        %825 = vmatpush1.xpose.msra.mxu0 %v730
        %826 = vmatprep.subr.mxu0 0.0
        %827 = vmatpush1.xpose.msra.mxu0 %v733
        %828 = vmatprep.subr.mxu0 0.0
        %829 = vmatpush1.xpose.msra.mxu0 %v736
        %830 = vmatprep.subr.mxu0 0.0
        %831 = vmatpush1.xpose.msra.mxu0 %v739
        %832 = vmatprep.subr.mxu0 0.0
        %833 = vmatpush1.xpose.msra.mxu0 %v742
        %834 = vmatprep.subr.mxu0 0.0
        %835 = vmatpush1.xpose.msra.mxu0 %v745
        %836 = vmatprep.subr.mxu0 0.0
        %837 = vmatpush1.xpose.msra.mxu0 %v748
        %838 = vmatprep.subr.mxu0 0.0
        %839 = vmatpush1.xpose.msra.mxu0 %v751
        %840 = vmatprep.subr.mxu0 0.0
        %841 = vmatpush1.xpose.msra.mxu0 %v754
        %842 = vmatprep.subr.mxu0 0.0
        %843 = vmatpush1.xpose.msra.mxu0 %v757
        %844 = vmatprep.subr.mxu0 0.0
        %845 = vmatpush1.xpose.msra.mxu0 %v760
        %846 = vmatprep.subr.mxu0 0.0
        %847 = vmatpush1.xpose.msra.mxu0 %v763
        %848 = vmatprep.subr.mxu0 0.0
        %849 = vmatpush1.xpose.msra.mxu0 %v766
        %850 = vmatprep.subr.mxu0 0.0
        %851 = vmatpush1.xpose.msra.mxu0 %v769
        %852 = vmatprep.subr.mxu0 0.0
        %853 = vmatpush1.xpose.msra.mxu0 %v772
        %854 = vmatprep.subr.mxu0 0.0
        %855 = vmatpush1.xpose.msra.mxu0 %v775
        %856 = vmatprep.subr.mxu0 0.0
        %857 = vmatpush1.xpose.msra.mxu0 %v778
        %858 = vmatprep.subr.mxu0 0.0
        %859 = vmatpush1.xpose.msra.mxu0 %v781
        %860 = vmatprep.subr.mxu0 0.0
        %861 = vmatpush1.xpose.msra.mxu0 %v784
        %862 = vmatprep.subr.mxu0 0.0
        %863 = vmatpush1.xpose.msra.mxu0 %v787
        %864 = vmatprep.subr.mxu0 0.0
        %865 = vmatpush1.xpose.msra.mxu0 %v790
        %866 = vmatprep.subr.mxu0 0.0
        %867 = vmatpush1.xpose.msra.mxu0 %v793
        %868 = vmatprep.subr.mxu0 0.0
        %869 = vmatpush1.xpose.msra.mxu0 %v796
        %870 = vmatprep.subr.mxu0 0.0
        %871 = vmatpush1.xpose.msra.mxu0 %v799
        %872 = vmatprep.subr.mxu0 0.0
        %873 = vmatpush1.xpose.msra.mxu0 %v802
        %874 = vmatprep.subr.mxu0 0.0
        %875 = vmatpush1.xpose.msra.mxu0 %v805
        %876 = vmatprep.subr.mxu0 0.0
        %877 = vmatpush1.xpose.msra.mxu0 %v808
        %878 = vmatprep.subr.mxu0 0.0
        %879 = vmatpush1.xpose.msra.mxu0 %v811
        %880 = vmatprep.subr.mxu0 0.0
        %881 = vmatpush1.xpose.msra.mxu0 %v814
        %882 = vmatprep.subr.mxu0 0.0
        %883 = vmatpush1.xpose.msra.mxu0 %v817
        %884 = vmatprep.subr.mxu0 0.0
        %885 = vmatpush1.xpose.msra.mxu0 %v820
        %886 = vmatprep.mubr.f32.mxu0 0.0
        %887 = vmatmul.mubr.f32.gmra.mrb[0].mxu0 %v715
        %v888 = vpop.f32.mrb[0].mxu0
        %v889 = vadd.f32 %v696, %v888
        %v890 = vpop.f32.mrb[0].mxu0
        %v891 = vadd.f32 %v696, %v890
        %892 = vmatprep.mubr.f32.mxu0 0.0
        %893 = vmatmul.mubr.f32.gmra.mrb[0].mxu0 %v718
        %v894 = vpop.f32.mrb[0].mxu0
        %v895 = vadd.f32 %v701, %v894
        %v896 = vpop.f32.mrb[0].mxu0
        %v897 = vadd.f32 %v701, %v896
        %898 = vmatprep.mubr.f32.mxu0 0.0
        %899 = vmatmul.mubr.f32.gmra.mrb[0].mxu0 %v721
        %v900 = vpop.f32.mrb[0].mxu0
        %v901 = vadd.f32 %v706, %v900
        %v902 = vpop.f32.mrb[0].mxu0
        %v903 = vadd.f32 %v706, %v902
        %904 = vmatprep.mubr.f32.mxu0 0.0
        %905 = vmatmul.mubr.f32.gmra.mrb[0].mxu0 %v724
        %v906 = vpop.f32.mrb[0].mxu0
        %v907 = vadd.f32 %v711, %v906
        %v908 = vpop.f32.mrb[0].mxu0
        %v909 = vadd.f32 %v711, %v908
        %910 = vdwg.mxu0
        %v911 = vmul.f32 %v889, 100.0
        %v912 = vmul.f32 %v891, 100.0
        %v913 = vmul.f32 %v895, 100.0
        %v914 = vmul.f32 %v897, 100.0
        %v915 = vmul.f32 %v901, 100.0
        %v916 = vmul.f32 %v903, 100.0
        %v917 = vmul.f32 %v907, 100.0
        %v918 = vmul.f32 %v909, 100.0
        %v919 = vmin.f32 %v911, 20.0
        %v920 = vmin.f32 %v912, 20.0
        %v921 = vmin.f32 %v913, 20.0
        %v922 = vmin.f32 %v914, 20.0
        %v923 = vmin.f32 %v915, 20.0
        %v924 = vmin.f32 %v916, 20.0
        %v925 = vmin.f32 %v917, 20.0
        %v926 = vmin.f32 %v918, 20.0
        %v927 = vmul.f32 %v919, 1.442695
        %v928 = vpow.pop %v927
        %v929 = vmul.f32 %v920, 1.442695
        %v930 = vpow.pop %v929
        %v931 = vmul.f32 %v921, 1.442695
        %v932 = vpow.pop %v931
        %v933 = vmul.f32 %v922, 1.442695
        %v934 = vpow.pop %v933
        %v935 = vmul.f32 %v923, 1.442695
        %v936 = vpow.pop %v935
        %v937 = vmul.f32 %v924, 1.442695
        %v938 = vpow.pop %v937
        %v939 = vmul.f32 %v925, 1.442695
        %v940 = vpow.pop %v939
        %v941 = vmul.f32 %v926, 1.442695
        %v942 = vpow.pop %v941
        %v943 = vadd.f32 %v928, 1.0
        %v944 = vlog2.pop %v943
        %v945 = vmul.f32 %v944, 0.6931472
        %v946 = vmul.f32 -0.5, %v928
        %v947 = vadd.f32 %v946, 1.0
        %v948 = vmul.f32 %v947, %v928
        %v949 = vand.u32 2147483647, %v928
        %vm950 = vcmp.lt.f32.partialorder %v949, 0.0004427343
        %v951 = vsel %vm950, %v948, %v945
        %v952 = vadd.f32 %v930, 1.0
        %v953 = vlog2.pop %v952
        %v954 = vmul.f32 %v953, 0.6931472
        %v955 = vmul.f32 -0.5, %v930
        %v956 = vadd.f32 %v955, 1.0
        %v957 = vmul.f32 %v956, %v930
        %v958 = vand.u32 2147483647, %v930
        %vm959 = vcmp.lt.f32.partialorder %v958, 0.0004427343
        %v960 = vsel %vm959, %v957, %v954
        %v961 = vadd.f32 %v932, 1.0
        %v962 = vlog2.pop %v961
        %v963 = vmul.f32 %v962, 0.6931472
        %v964 = vmul.f32 -0.5, %v932
        %v965 = vadd.f32 %v964, 1.0
        %v966 = vmul.f32 %v965, %v932
        %v967 = vand.u32 2147483647, %v932
        %vm968 = vcmp.lt.f32.partialorder %v967, 0.0004427343
        %v969 = vsel %vm968, %v966, %v963
        %v970 = vadd.f32 %v934, 1.0
        %v971 = vlog2.pop %v970
        %v972 = vmul.f32 %v971, 0.6931472
        %v973 = vmul.f32 -0.5, %v934
        %v974 = vadd.f32 %v973, 1.0
        %v975 = vmul.f32 %v974, %v934
        %v976 = vand.u32 2147483647, %v934
        %vm977 = vcmp.lt.f32.partialorder %v976, 0.0004427343
        %v978 = vsel %vm977, %v975, %v972
        %v979 = vadd.f32 %v936, 1.0
        %v980 = vlog2.pop %v979
        %v981 = vmul.f32 %v980, 0.6931472
        %v982 = vmul.f32 -0.5, %v936
        %v983 = vadd.f32 %v982, 1.0
        %v984 = vmul.f32 %v983, %v936
        %v985 = vand.u32 2147483647, %v936
        %vm986 = vcmp.lt.f32.partialorder %v985, 0.0004427343
        %v987 = vsel %vm986, %v984, %v981
        %v988 = vadd.f32 %v938, 1.0
        %v989 = vlog2.pop %v988
        %v990 = vmul.f32 %v989, 0.6931472
        %v991 = vmul.f32 -0.5, %v938
        %v992 = vadd.f32 %v991, 1.0
        %v993 = vmul.f32 %v992, %v938
        %v994 = vand.u32 2147483647, %v938
        %vm995 = vcmp.lt.f32.partialorder %v994, 0.0004427343
        %v996 = vsel %vm995, %v993, %v990
        %v997 = vadd.f32 %v940, 1.0
        %v998 = vlog2.pop %v997
        %v999 = vmul.f32 %v998, 0.6931472
        %v1000 = vmul.f32 -0.5, %v940
        %v1001 = vadd.f32 %v1000, 1.0
        %v1002 = vmul.f32 %v1001, %v940
        %v1003 = vand.u32 2147483647, %v940
        %vm1004 = vcmp.lt.f32.partialorder %v1003, 0.0004427343
        %v1005 = vsel %vm1004, %v1002, %v999
        %v1006 = vadd.f32 %v942, 1.0
        %v1007 = vlog2.pop %v1006
        %v1008 = vmul.f32 %v1007, 0.6931472
        %v1009 = vmul.f32 -0.5, %v942
        %v1010 = vadd.f32 %v1009, 1.0
        %v1011 = vmul.f32 %v1010, %v942
        %v1012 = vand.u32 2147483647, %v942
        %vm1013 = vcmp.lt.f32.partialorder %v1012, 0.0004427343
        %v1014 = vsel %vm1013, %v1011, %v1008
        %v1015 = vmul.f32 %v951, 0.01
        %v1016 = vmul.f32 %v960, 0.01
        %v1017 = vmul.f32 %v969, 0.01
        %v1018 = vmul.f32 %v978, 0.01
        %v1019 = vmul.f32 %v987, 0.01
        %v1020 = vmul.f32 %v996, 0.01
        %v1021 = vmul.f32 %v1005, 0.01
        %v1022 = vmul.f32 %v1014, 0.01
        %vm1023 = vcmp.gt.f32.partialorder %v911, 20.0
        %vm1024 = vcmp.gt.f32.partialorder %v912, 20.0
        %vm1025 = vcmp.gt.f32.partialorder %v913, 20.0
        %vm1026 = vcmp.gt.f32.partialorder %v914, 20.0
        %vm1027 = vcmp.gt.f32.partialorder %v915, 20.0
        %vm1028 = vcmp.gt.f32.partialorder %v916, 20.0
        %vm1029 = vcmp.gt.f32.partialorder %v917, 20.0
        %vm1030 = vcmp.gt.f32.partialorder %v918, 20.0
        %v1031 = vsel %vm1023, %v889, %v1015
        %v1032 = vsel %vm1024, %v891, %v1016
        %v1033 = vsel %vm1025, %v895, %v1017
        %v1034 = vsel %vm1026, %v897, %v1018
        %v1035 = vsel %vm1027, %v901, %v1019
        %v1036 = vsel %vm1028, %v903, %v1020
        %v1037 = vsel %vm1029, %v907, %v1021
        %v1038 = vsel %vm1030, %v909, %v1022
        %v1039 = vld [vmem:[%s3] sm:$0xff]
        %v1040 = vld [vmem:[%s3 + $0x8] sm:$0xff]
        %v1041 = vld [vmem:[%s3 + $0x10] sm:$0xff]
        %v1042 = vld [vmem:[%s3 + $0x18] sm:$0xff]
        %v1043 = vld [vmem:[%s4] sm:$0xff]
        %v1044 = vld [vmem:[%s4 + $0x8] sm:$0xff]
        %v1045 = vld [vmem:[%s4 + $0x10] sm:$0xff]
        %v1046 = vld [vmem:[%s4 + $0x18] sm:$0xff]
        %1048 = vset.pattern.permute.xlu0 0
        %1049 = vperm.xlu0 %1048, %v1043
        %v1050 = vpop.permute.xlu0 %1049
        %1053 = vset.pattern.permute.xlu0 0
        %1054 = vperm.xlu0 %1053, %v1044
        %v1055 = vpop.permute.xlu0 %1054
        %1058 = vset.pattern.permute.xlu0 0
        %1059 = vperm.xlu0 %1058, %v1045
        %v1060 = vpop.permute.xlu0 %1059
        %1063 = vset.pattern.permute.xlu0 0
        %1064 = vperm.xlu0 %1063, %v1046
        %v1065 = vpop.permute.xlu0 %1064
        %vm1067 = vcmask 261120
        %v1069 = vsel %vm1067, %v1039, 0
        %v1072 = vsel %vm1067, %v1040, 0
        %v1075 = vsel %vm1067, %v1041, 0
        %v1078 = vsel %vm1067, %v1042, 0
        %1080 = vmatprep.subr.mxu0 %v1032
        %1081 = vmatpush1.msra.mxu0 %v1031
        %1082 = vmatprep.subr.mxu0 %v1034
        %1083 = vmatpush1.msra.mxu0 %v1033
        %1084 = vmatprep.subr.mxu0 %v1036
        %1085 = vmatpush1.msra.mxu0 %v1035
        %1086 = vmatprep.subr.mxu0 %v1038
        %1087 = vmatpush1.msra.mxu0 %v1037
        %1088 = vmatprep.subr.mxu0 0.0
        %1089 = vmatpush1.msra.mxu0 0.0
        %1090 = vmatprep.subr.mxu0 0.0
        %1091 = vmatpush1.msra.mxu0 0.0
        %1092 = vmatprep.subr.mxu0 0.0
        %1093 = vmatpush1.msra.mxu0 0.0
        %1094 = vmatprep.subr.mxu0 0.0
        %1095 = vmatpush1.msra.mxu0 0.0
        %1096 = vmatprep.subr.mxu0 0.0
        %1097 = vmatpush1.msra.mxu0 0.0
        %1098 = vmatprep.subr.mxu0 0.0
        %1099 = vmatpush1.msra.mxu0 0.0
        %1100 = vmatprep.subr.mxu0 0.0
        %1101 = vmatpush1.msra.mxu0 0.0
        %1102 = vmatprep.subr.mxu0 0.0
        %1103 = vmatpush1.msra.mxu0 0.0
        %1104 = vmatprep.subr.mxu0 0.0
        %1105 = vmatpush1.msra.mxu0 0.0
        %1106 = vmatprep.subr.mxu0 0.0
        %1107 = vmatpush1.msra.mxu0 0.0
        %1108 = vmatprep.subr.mxu0 0.0
        %1109 = vmatpush1.msra.mxu0 0.0
        %1110 = vmatprep.subr.mxu0 0.0
        %1111 = vmatpush1.msra.mxu0 0.0
        %1112 = vmatprep.subr.mxu0 0.0
        %1113 = vmatpush1.msra.mxu0 0.0
        %1114 = vmatprep.subr.mxu0 0.0
        %1115 = vmatpush1.msra.mxu0 0.0
        %1116 = vmatprep.subr.mxu0 0.0
        %1117 = vmatpush1.msra.mxu0 0.0
        %1118 = vmatprep.subr.mxu0 0.0
        %1119 = vmatpush1.msra.mxu0 0.0
        %1120 = vmatprep.subr.mxu0 0.0
        %1121 = vmatpush1.msra.mxu0 0.0
        %1122 = vmatprep.subr.mxu0 0.0
        %1123 = vmatpush1.msra.mxu0 0.0
        %1124 = vmatprep.subr.mxu0 0.0
        %1125 = vmatpush1.msra.mxu0 0.0
        %1126 = vmatprep.subr.mxu0 0.0
        %1127 = vmatpush1.msra.mxu0 0.0
        %1128 = vmatprep.subr.mxu0 0.0
        %1129 = vmatpush1.msra.mxu0 0.0
        %1130 = vmatprep.subr.mxu0 0.0
        %1131 = vmatpush1.msra.mxu0 0.0
        %1132 = vmatprep.subr.mxu0 0.0
        %1133 = vmatpush1.msra.mxu0 0.0
        %1134 = vmatprep.subr.mxu0 0.0
        %1135 = vmatpush1.msra.mxu0 0.0
        %1136 = vmatprep.subr.mxu0 0.0
        %1137 = vmatpush1.msra.mxu0 0.0
        %1138 = vmatprep.subr.mxu0 0.0
        %1139 = vmatpush1.msra.mxu0 0.0
        %1140 = vmatprep.subr.mxu0 0.0
        %1141 = vmatpush1.msra.mxu0 0.0
        %1142 = vmatprep.subr.mxu0 0.0
        %1143 = vmatpush1.msra.mxu0 0.0
        %1144 = vmatprep.mubr.f32.mxu0 0.0
        %1145 = vmatmul.mubr.f32.gmra.mrb[0].mxu0 %v1069
        %v1146 = vpop.f32.mrb[0].mxu0
        %v1147 = vadd.f32 %v1050, %v1146
        %v1148 = vpop.f32.mrb[0].mxu0
        %v1149 = vadd.f32 %v1050, %v1148
        %1150 = vmatprep.mubr.f32.mxu0 0.0
        %1151 = vmatmul.mubr.f32.gmra.mrb[0].mxu0 %v1072
        %v1152 = vpop.f32.mrb[0].mxu0
        %v1153 = vadd.f32 %v1055, %v1152
        %v1154 = vpop.f32.mrb[0].mxu0
        %v1155 = vadd.f32 %v1055, %v1154
        %1156 = vmatprep.mubr.f32.mxu0 0.0
        %1157 = vmatmul.mubr.f32.gmra.mrb[0].mxu0 %v1075
        %v1158 = vpop.f32.mrb[0].mxu0
        %v1159 = vadd.f32 %v1060, %v1158
        %v1160 = vpop.f32.mrb[0].mxu0
        %v1161 = vadd.f32 %v1060, %v1160
        %1162 = vmatprep.mubr.f32.mxu0 0.0
        %1163 = vmatmul.mubr.f32.gmra.mrb[0].mxu0 %v1078
        %v1164 = vpop.f32.mrb[0].mxu0
        %v1165 = vadd.f32 %v1065, %v1164
        %v1166 = vpop.f32.mrb[0].mxu0
        %v1167 = vadd.f32 %v1065, %v1166
        %1168 = vdwg.mxu0
        %v1169 = vmul.f32 %v1147, 100.0
        %v1170 = vmul.f32 %v1149, 100.0
        %v1171 = vmul.f32 %v1153, 100.0
        %v1172 = vmul.f32 %v1155, 100.0
        %v1173 = vmul.f32 %v1159, 100.0
        %v1174 = vmul.f32 %v1161, 100.0
        %v1175 = vmul.f32 %v1165, 100.0
        %v1176 = vmul.f32 %v1167, 100.0
        %v1177 = vmin.f32 %v1169, 20.0
        %v1178 = vmin.f32 %v1170, 20.0
        %v1179 = vmin.f32 %v1171, 20.0
        %v1180 = vmin.f32 %v1172, 20.0
        %v1181 = vmin.f32 %v1173, 20.0
        %v1182 = vmin.f32 %v1174, 20.0
        %v1183 = vmin.f32 %v1175, 20.0
        %v1184 = vmin.f32 %v1176, 20.0
        %v1185 = vmul.f32 %v1177, 1.442695
        %v1186 = vpow.pop %v1185
        %v1187 = vmul.f32 %v1178, 1.442695
        %v1188 = vpow.pop %v1187
        %v1189 = vmul.f32 %v1179, 1.442695
        %v1190 = vpow.pop %v1189
        %v1191 = vmul.f32 %v1180, 1.442695
        %v1192 = vpow.pop %v1191
        %v1193 = vmul.f32 %v1181, 1.442695
        %v1194 = vpow.pop %v1193
        %v1195 = vmul.f32 %v1182, 1.442695
        %v1196 = vpow.pop %v1195
        %v1197 = vmul.f32 %v1183, 1.442695
        %v1198 = vpow.pop %v1197
        %v1199 = vmul.f32 %v1184, 1.442695
        %v1200 = vpow.pop %v1199
        %v1201 = vadd.f32 %v1186, 1.0
        %v1202 = vlog2.pop %v1201
        %v1203 = vmul.f32 %v1202, 0.6931472
        %v1204 = vmul.f32 -0.5, %v1186
        %v1205 = vadd.f32 %v1204, 1.0
        %v1206 = vmul.f32 %v1205, %v1186
        %v1207 = vand.u32 2147483647, %v1186
        %vm1208 = vcmp.lt.f32.partialorder %v1207, 0.0004427343
        %v1209 = vsel %vm1208, %v1206, %v1203
        %v1210 = vadd.f32 %v1188, 1.0
        %v1211 = vlog2.pop %v1210
        %v1212 = vmul.f32 %v1211, 0.6931472
        %v1213 = vmul.f32 -0.5, %v1188
        %v1214 = vadd.f32 %v1213, 1.0
        %v1215 = vmul.f32 %v1214, %v1188
        %v1216 = vand.u32 2147483647, %v1188
        %vm1217 = vcmp.lt.f32.partialorder %v1216, 0.0004427343
        %v1218 = vsel %vm1217, %v1215, %v1212
        %v1219 = vadd.f32 %v1190, 1.0
        %v1220 = vlog2.pop %v1219
        %v1221 = vmul.f32 %v1220, 0.6931472
        %v1222 = vmul.f32 -0.5, %v1190
        %v1223 = vadd.f32 %v1222, 1.0
        %v1224 = vmul.f32 %v1223, %v1190
        %v1225 = vand.u32 2147483647, %v1190
        %vm1226 = vcmp.lt.f32.partialorder %v1225, 0.0004427343
        %v1227 = vsel %vm1226, %v1224, %v1221
        %v1228 = vadd.f32 %v1192, 1.0
        %v1229 = vlog2.pop %v1228
        %v1230 = vmul.f32 %v1229, 0.6931472
        %v1231 = vmul.f32 -0.5, %v1192
        %v1232 = vadd.f32 %v1231, 1.0
        %v1233 = vmul.f32 %v1232, %v1192
        %v1234 = vand.u32 2147483647, %v1192
        %vm1235 = vcmp.lt.f32.partialorder %v1234, 0.0004427343
        %v1236 = vsel %vm1235, %v1233, %v1230
        %v1237 = vadd.f32 %v1194, 1.0
        %v1238 = vlog2.pop %v1237
        %v1239 = vmul.f32 %v1238, 0.6931472
        %v1240 = vmul.f32 -0.5, %v1194
        %v1241 = vadd.f32 %v1240, 1.0
        %v1242 = vmul.f32 %v1241, %v1194
        %v1243 = vand.u32 2147483647, %v1194
        %vm1244 = vcmp.lt.f32.partialorder %v1243, 0.0004427343
        %v1245 = vsel %vm1244, %v1242, %v1239
        %v1246 = vadd.f32 %v1196, 1.0
        %v1247 = vlog2.pop %v1246
        %v1248 = vmul.f32 %v1247, 0.6931472
        %v1249 = vmul.f32 -0.5, %v1196
        %v1250 = vadd.f32 %v1249, 1.0
        %v1251 = vmul.f32 %v1250, %v1196
        %v1252 = vand.u32 2147483647, %v1196
        %vm1253 = vcmp.lt.f32.partialorder %v1252, 0.0004427343
        %v1254 = vsel %vm1253, %v1251, %v1248
        %v1255 = vadd.f32 %v1198, 1.0
        %v1256 = vlog2.pop %v1255
        %v1257 = vmul.f32 %v1256, 0.6931472
        %v1258 = vmul.f32 -0.5, %v1198
        %v1259 = vadd.f32 %v1258, 1.0
        %v1260 = vmul.f32 %v1259, %v1198
        %v1261 = vand.u32 2147483647, %v1198
        %vm1262 = vcmp.lt.f32.partialorder %v1261, 0.0004427343
        %v1263 = vsel %vm1262, %v1260, %v1257
        %v1264 = vadd.f32 %v1200, 1.0
        %v1265 = vlog2.pop %v1264
        %v1266 = vmul.f32 %v1265, 0.6931472
        %v1267 = vmul.f32 -0.5, %v1200
        %v1268 = vadd.f32 %v1267, 1.0
        %v1269 = vmul.f32 %v1268, %v1200
        %v1270 = vand.u32 2147483647, %v1200
        %vm1271 = vcmp.lt.f32.partialorder %v1270, 0.0004427343
        %v1272 = vsel %vm1271, %v1269, %v1266
        %v1273 = vmul.f32 %v1209, 0.01
        %v1274 = vmul.f32 %v1218, 0.01
        %v1275 = vmul.f32 %v1227, 0.01
        %v1276 = vmul.f32 %v1236, 0.01
        %v1277 = vmul.f32 %v1245, 0.01
        %v1278 = vmul.f32 %v1254, 0.01
        %v1279 = vmul.f32 %v1263, 0.01
        %v1280 = vmul.f32 %v1272, 0.01
        %vm1281 = vcmp.gt.f32.partialorder %v1169, 20.0
        %vm1282 = vcmp.gt.f32.partialorder %v1170, 20.0
        %vm1283 = vcmp.gt.f32.partialorder %v1171, 20.0
        %vm1284 = vcmp.gt.f32.partialorder %v1172, 20.0
        %vm1285 = vcmp.gt.f32.partialorder %v1173, 20.0
        %vm1286 = vcmp.gt.f32.partialorder %v1174, 20.0
        %vm1287 = vcmp.gt.f32.partialorder %v1175, 20.0
        %vm1288 = vcmp.gt.f32.partialorder %v1176, 20.0
        %v1289 = vsel %vm1281, %v1147, %v1273
        %v1290 = vsel %vm1282, %v1149, %v1274
        %v1291 = vsel %vm1283, %v1153, %v1275
        %v1292 = vsel %vm1284, %v1155, %v1276
        %v1293 = vsel %vm1285, %v1159, %v1277
        %v1294 = vsel %vm1286, %v1161, %v1278
        %v1295 = vsel %vm1287, %v1165, %v1279
        %v1296 = vsel %vm1288, %v1167, %v1280
        %v1297 = vld [vmem:[%s5] sm:$0xff]
        %v1298 = vld [vmem:[%s5 + $0x8] sm:$0xff]
        %v1299 = vld [vmem:[%s5 + $0x10] sm:$0xff]
        %v1300 = vld [vmem:[%s5 + $0x18] sm:$0xff]
        %v1301 = vld [vmem:[%s6] sm:$0xff]
        %v1302 = vld [vmem:[%s6 + $0x8] sm:$0xff]
        %v1303 = vld [vmem:[%s6 + $0x10] sm:$0xff]
        %v1304 = vld [vmem:[%s6 + $0x18] sm:$0xff]
        %1306 = vset.pattern.permute.xlu0 0
        %1307 = vperm.xlu0 %1306, %v1301
        %v1308 = vpop.permute.xlu0 %1307
        %1311 = vset.pattern.permute.xlu0 0
        %1312 = vperm.xlu0 %1311, %v1302
        %v1313 = vpop.permute.xlu0 %1312
        %1316 = vset.pattern.permute.xlu0 0
        %1317 = vperm.xlu0 %1316, %v1303
        %v1318 = vpop.permute.xlu0 %1317
        %1321 = vset.pattern.permute.xlu0 0
        %1322 = vperm.xlu0 %1321, %v1304
        %v1323 = vpop.permute.xlu0 %1322
        %v1326 = vsel %vm1067, %v1297, 0
        %v1329 = vsel %vm1067, %v1298, 0
        %v1332 = vsel %vm1067, %v1299, 0
        %v1335 = vsel %vm1067, %v1300, 0
        %1337 = vmatprep.subr.mxu0 %v1290
        %1338 = vmatpush1.msra.mxu0 %v1289
        %1339 = vmatprep.subr.mxu0 %v1292
        %1340 = vmatpush1.msra.mxu0 %v1291
        %1341 = vmatprep.subr.mxu0 %v1294
        %1342 = vmatpush1.msra.mxu0 %v1293
        %1343 = vmatprep.subr.mxu0 %v1296
        %1344 = vmatpush1.msra.mxu0 %v1295
        %1345 = vmatprep.subr.mxu0 0.0
        %1346 = vmatpush1.msra.mxu0 0.0
        %1347 = vmatprep.subr.mxu0 0.0
        %1348 = vmatpush1.msra.mxu0 0.0
        %1349 = vmatprep.subr.mxu0 0.0
        %1350 = vmatpush1.msra.mxu0 0.0
        %1351 = vmatprep.subr.mxu0 0.0
        %1352 = vmatpush1.msra.mxu0 0.0
        %1353 = vmatprep.subr.mxu0 0.0
        %1354 = vmatpush1.msra.mxu0 0.0
        %1355 = vmatprep.subr.mxu0 0.0
        %1356 = vmatpush1.msra.mxu0 0.0
        %1357 = vmatprep.subr.mxu0 0.0
        %1358 = vmatpush1.msra.mxu0 0.0
        %1359 = vmatprep.subr.mxu0 0.0
        %1360 = vmatpush1.msra.mxu0 0.0
        %1361 = vmatprep.subr.mxu0 0.0
        %1362 = vmatpush1.msra.mxu0 0.0
        %1363 = vmatprep.subr.mxu0 0.0
        %1364 = vmatpush1.msra.mxu0 0.0
        %1365 = vmatprep.subr.mxu0 0.0
        %1366 = vmatpush1.msra.mxu0 0.0
        %1367 = vmatprep.subr.mxu0 0.0
        %1368 = vmatpush1.msra.mxu0 0.0
        %1369 = vmatprep.subr.mxu0 0.0
        %1370 = vmatpush1.msra.mxu0 0.0
        %1371 = vmatprep.subr.mxu0 0.0
        %1372 = vmatpush1.msra.mxu0 0.0
        %1373 = vmatprep.subr.mxu0 0.0
        %1374 = vmatpush1.msra.mxu0 0.0
        %1375 = vmatprep.subr.mxu0 0.0
        %1376 = vmatpush1.msra.mxu0 0.0
        %1377 = vmatprep.subr.mxu0 0.0
        %1378 = vmatpush1.msra.mxu0 0.0
        %1379 = vmatprep.subr.mxu0 0.0
        %1380 = vmatpush1.msra.mxu0 0.0
        %1381 = vmatprep.subr.mxu0 0.0
        %1382 = vmatpush1.msra.mxu0 0.0
        %1383 = vmatprep.subr.mxu0 0.0
        %1384 = vmatpush1.msra.mxu0 0.0
        %1385 = vmatprep.subr.mxu0 0.0
        %1386 = vmatpush1.msra.mxu0 0.0
        %1387 = vmatprep.subr.mxu0 0.0
        %1388 = vmatpush1.msra.mxu0 0.0
        %1389 = vmatprep.subr.mxu0 0.0
        %1390 = vmatpush1.msra.mxu0 0.0
        %1391 = vmatprep.subr.mxu0 0.0
        %1392 = vmatpush1.msra.mxu0 0.0
        %1393 = vmatprep.subr.mxu0 0.0
        %1394 = vmatpush1.msra.mxu0 0.0
        %1395 = vmatprep.subr.mxu0 0.0
        %1396 = vmatpush1.msra.mxu0 0.0
        %1397 = vmatprep.subr.mxu0 0.0
        %1398 = vmatpush1.msra.mxu0 0.0
        %1399 = vmatprep.subr.mxu0 0.0
        %1400 = vmatpush1.msra.mxu0 0.0
        %1401 = vmatprep.mubr.f32.mxu0 0.0
        %1402 = vmatmul.mubr.f32.gmra.mrb[0].mxu0 %v1326
        %v1403 = vpop.f32.mrb[0].mxu0
        %v1404 = vadd.f32 %v1308, %v1403
        %v1405 = vpop.f32.mrb[0].mxu0
        %v1406 = vadd.f32 %v1308, %v1405
        %1407 = vmatprep.mubr.f32.mxu0 0.0
        %1408 = vmatmul.mubr.f32.gmra.mrb[0].mxu0 %v1329
        %v1409 = vpop.f32.mrb[0].mxu0
        %v1410 = vadd.f32 %v1313, %v1409
        %v1411 = vpop.f32.mrb[0].mxu0
        %v1412 = vadd.f32 %v1313, %v1411
        %1413 = vmatprep.mubr.f32.mxu0 0.0
        %1414 = vmatmul.mubr.f32.gmra.mrb[0].mxu0 %v1332
        %v1415 = vpop.f32.mrb[0].mxu0
        %v1416 = vadd.f32 %v1318, %v1415
        %v1417 = vpop.f32.mrb[0].mxu0
        %v1418 = vadd.f32 %v1318, %v1417
        %1419 = vmatprep.mubr.f32.mxu0 0.0
        %1420 = vmatmul.mubr.f32.gmra.mrb[0].mxu0 %v1335
        %v1421 = vpop.f32.mrb[0].mxu0
        %v1422 = vadd.f32 %v1323, %v1421
        %v1423 = vpop.f32.mrb[0].mxu0
        %v1424 = vadd.f32 %v1323, %v1423
        %1425 = vdwg.mxu0
        %v1426 = vmul.f32 %v1404, 100.0
        %v1427 = vmul.f32 %v1406, 100.0
        %v1428 = vmul.f32 %v1410, 100.0
        %v1429 = vmul.f32 %v1412, 100.0
        %v1430 = vmul.f32 %v1416, 100.0
        %v1431 = vmul.f32 %v1418, 100.0
        %v1432 = vmul.f32 %v1422, 100.0
        %v1433 = vmul.f32 %v1424, 100.0
        %v1434 = vmin.f32 %v1426, 20.0
        %v1435 = vmin.f32 %v1427, 20.0
        %v1436 = vmin.f32 %v1428, 20.0
        %v1437 = vmin.f32 %v1429, 20.0
        %v1438 = vmin.f32 %v1430, 20.0
        %v1439 = vmin.f32 %v1431, 20.0
        %v1440 = vmin.f32 %v1432, 20.0
        %v1441 = vmin.f32 %v1433, 20.0
        %v1442 = vmul.f32 %v1434, 1.442695
        %v1443 = vpow.pop %v1442
        %v1444 = vmul.f32 %v1435, 1.442695
        %v1445 = vpow.pop %v1444
        %v1446 = vmul.f32 %v1436, 1.442695
        %v1447 = vpow.pop %v1446
        %v1448 = vmul.f32 %v1437, 1.442695
        %v1449 = vpow.pop %v1448
        %v1450 = vmul.f32 %v1438, 1.442695
        %v1451 = vpow.pop %v1450
        %v1452 = vmul.f32 %v1439, 1.442695
        %v1453 = vpow.pop %v1452
        %v1454 = vmul.f32 %v1440, 1.442695
        %v1455 = vpow.pop %v1454
        %v1456 = vmul.f32 %v1441, 1.442695
        %v1457 = vpow.pop %v1456
        %v1458 = vadd.f32 %v1443, 1.0
        %v1459 = vlog2.pop %v1458
        %v1460 = vmul.f32 %v1459, 0.6931472
        %v1461 = vmul.f32 -0.5, %v1443
        %v1462 = vadd.f32 %v1461, 1.0
        %v1463 = vmul.f32 %v1462, %v1443
        %v1464 = vand.u32 2147483647, %v1443
        %vm1465 = vcmp.lt.f32.partialorder %v1464, 0.0004427343
        %v1466 = vsel %vm1465, %v1463, %v1460
        %v1467 = vadd.f32 %v1445, 1.0
        %v1468 = vlog2.pop %v1467
        %v1469 = vmul.f32 %v1468, 0.6931472
        %v1470 = vmul.f32 -0.5, %v1445
        %v1471 = vadd.f32 %v1470, 1.0
        %v1472 = vmul.f32 %v1471, %v1445
        %v1473 = vand.u32 2147483647, %v1445
        %vm1474 = vcmp.lt.f32.partialorder %v1473, 0.0004427343
        %v1475 = vsel %vm1474, %v1472, %v1469
        %v1476 = vadd.f32 %v1447, 1.0
        %v1477 = vlog2.pop %v1476
        %v1478 = vmul.f32 %v1477, 0.6931472
        %v1479 = vmul.f32 -0.5, %v1447
        %v1480 = vadd.f32 %v1479, 1.0
        %v1481 = vmul.f32 %v1480, %v1447
        %v1482 = vand.u32 2147483647, %v1447
        %vm1483 = vcmp.lt.f32.partialorder %v1482, 0.0004427343
        %v1484 = vsel %vm1483, %v1481, %v1478
        %v1485 = vadd.f32 %v1449, 1.0
        %v1486 = vlog2.pop %v1485
        %v1487 = vmul.f32 %v1486, 0.6931472
        %v1488 = vmul.f32 -0.5, %v1449
        %v1489 = vadd.f32 %v1488, 1.0
        %v1490 = vmul.f32 %v1489, %v1449
        %v1491 = vand.u32 2147483647, %v1449
        %vm1492 = vcmp.lt.f32.partialorder %v1491, 0.0004427343
        %v1493 = vsel %vm1492, %v1490, %v1487
        %v1494 = vadd.f32 %v1451, 1.0
        %v1495 = vlog2.pop %v1494
        %v1496 = vmul.f32 %v1495, 0.6931472
        %v1497 = vmul.f32 -0.5, %v1451
        %v1498 = vadd.f32 %v1497, 1.0
        %v1499 = vmul.f32 %v1498, %v1451
        %v1500 = vand.u32 2147483647, %v1451
        %vm1501 = vcmp.lt.f32.partialorder %v1500, 0.0004427343
        %v1502 = vsel %vm1501, %v1499, %v1496
        %v1503 = vadd.f32 %v1453, 1.0
        %v1504 = vlog2.pop %v1503
        %v1505 = vmul.f32 %v1504, 0.6931472
        %v1506 = vmul.f32 -0.5, %v1453
        %v1507 = vadd.f32 %v1506, 1.0
        %v1508 = vmul.f32 %v1507, %v1453
        %v1509 = vand.u32 2147483647, %v1453
        %vm1510 = vcmp.lt.f32.partialorder %v1509, 0.0004427343
        %v1511 = vsel %vm1510, %v1508, %v1505
        %v1512 = vadd.f32 %v1455, 1.0
        %v1513 = vlog2.pop %v1512
        %v1514 = vmul.f32 %v1513, 0.6931472
        %v1515 = vmul.f32 -0.5, %v1455
        %v1516 = vadd.f32 %v1515, 1.0
        %v1517 = vmul.f32 %v1516, %v1455
        %v1518 = vand.u32 2147483647, %v1455
        %vm1519 = vcmp.lt.f32.partialorder %v1518, 0.0004427343
        %v1520 = vsel %vm1519, %v1517, %v1514
        %v1521 = vadd.f32 %v1457, 1.0
        %v1522 = vlog2.pop %v1521
        %v1523 = vmul.f32 %v1522, 0.6931472
        %v1524 = vmul.f32 -0.5, %v1457
        %v1525 = vadd.f32 %v1524, 1.0
        %v1526 = vmul.f32 %v1525, %v1457
        %v1527 = vand.u32 2147483647, %v1457
        %vm1528 = vcmp.lt.f32.partialorder %v1527, 0.0004427343
        %v1529 = vsel %vm1528, %v1526, %v1523
        %v1530 = vmul.f32 %v1466, 0.01
        %v1531 = vmul.f32 %v1475, 0.01
        %v1532 = vmul.f32 %v1484, 0.01
        %v1533 = vmul.f32 %v1493, 0.01
        %v1534 = vmul.f32 %v1502, 0.01
        %v1535 = vmul.f32 %v1511, 0.01
        %v1536 = vmul.f32 %v1520, 0.01
        %v1537 = vmul.f32 %v1529, 0.01
        %vm1538 = vcmp.gt.f32.partialorder %v1426, 20.0
        %vm1539 = vcmp.gt.f32.partialorder %v1427, 20.0
        %vm1540 = vcmp.gt.f32.partialorder %v1428, 20.0
        %vm1541 = vcmp.gt.f32.partialorder %v1429, 20.0
        %vm1542 = vcmp.gt.f32.partialorder %v1430, 20.0
        %vm1543 = vcmp.gt.f32.partialorder %v1431, 20.0
        %vm1544 = vcmp.gt.f32.partialorder %v1432, 20.0
        %vm1545 = vcmp.gt.f32.partialorder %v1433, 20.0
        %v1546 = vsel %vm1538, %v1404, %v1530
        %v1547 = vsel %vm1539, %v1406, %v1531
        %v1548 = vsel %vm1540, %v1410, %v1532
        %v1549 = vsel %vm1541, %v1412, %v1533
        %v1550 = vsel %vm1542, %v1416, %v1534
        %v1551 = vsel %vm1543, %v1418, %v1535
        %v1552 = vsel %vm1544, %v1422, %v1536
        %v1553 = vsel %vm1545, %v1424, %v1537
        %v1554 = vld [vmem:[%s7] sm:$0xff]
        %v1555 = vld [vmem:[%s7 + $0x8] sm:$0x1f]
        %v1556 = vld [vmem:[%s8] sm:$0xff]
        %v1557 = vld [vmem:[%s8 + $0x8] sm:$0x1f]
        %1559 = vset.pattern.permute.xlu0 0
        %1560 = vperm.xlu0 %1559, %v1556
        %v1561 = vpop.permute.xlu0 %1560
        %1564 = vset.pattern.permute.xlu0 0
        %1565 = vperm.xlu0 %1564, %v1557
        %v1566 = vpop.permute.xlu0 %1565
        %v1569 = vsel %vm1067, %v1554, 0
        %v1572 = vsel %vm1067, %v1555, 0
        %1574 = vmatprep.subr.mxu0 %v1547
        %1575 = vmatpush1.msra.mxu0 %v1546
        %1576 = vmatprep.subr.mxu0 %v1549
        %1577 = vmatpush1.msra.mxu0 %v1548
        %1578 = vmatprep.subr.mxu0 %v1551
        %1579 = vmatpush1.msra.mxu0 %v1550
        %1580 = vmatprep.subr.mxu0 %v1553
        %1581 = vmatpush1.msra.mxu0 %v1552
        %1582 = vmatprep.subr.mxu0 0.0
        %1583 = vmatpush1.msra.mxu0 0.0
        %1584 = vmatprep.subr.mxu0 0.0
        %1585 = vmatpush1.msra.mxu0 0.0
        %1586 = vmatprep.subr.mxu0 0.0
        %1587 = vmatpush1.msra.mxu0 0.0
        %1588 = vmatprep.subr.mxu0 0.0
        %1589 = vmatpush1.msra.mxu0 0.0
        %1590 = vmatprep.subr.mxu0 0.0
        %1591 = vmatpush1.msra.mxu0 0.0
        %1592 = vmatprep.subr.mxu0 0.0
        %1593 = vmatpush1.msra.mxu0 0.0
        %1594 = vmatprep.subr.mxu0 0.0
        %1595 = vmatpush1.msra.mxu0 0.0
        %1596 = vmatprep.subr.mxu0 0.0
        %1597 = vmatpush1.msra.mxu0 0.0
        %1598 = vmatprep.subr.mxu0 0.0
        %1599 = vmatpush1.msra.mxu0 0.0
        %1600 = vmatprep.subr.mxu0 0.0
        %1601 = vmatpush1.msra.mxu0 0.0
        %1602 = vmatprep.subr.mxu0 0.0
        %1603 = vmatpush1.msra.mxu0 0.0
        %1604 = vmatprep.subr.mxu0 0.0
        %1605 = vmatpush1.msra.mxu0 0.0
        %1606 = vmatprep.subr.mxu0 0.0
        %1607 = vmatpush1.msra.mxu0 0.0
        %1608 = vmatprep.subr.mxu0 0.0
        %1609 = vmatpush1.msra.mxu0 0.0
        %1610 = vmatprep.subr.mxu0 0.0
        %1611 = vmatpush1.msra.mxu0 0.0
        %1612 = vmatprep.subr.mxu0 0.0
        %1613 = vmatpush1.msra.mxu0 0.0
        %1614 = vmatprep.subr.mxu0 0.0
        %1615 = vmatpush1.msra.mxu0 0.0
        %1616 = vmatprep.subr.mxu0 0.0
        %1617 = vmatpush1.msra.mxu0 0.0
        %1618 = vmatprep.subr.mxu0 0.0
        %1619 = vmatpush1.msra.mxu0 0.0
        %1620 = vmatprep.subr.mxu0 0.0
        %1621 = vmatpush1.msra.mxu0 0.0
        %1622 = vmatprep.subr.mxu0 0.0
        %1623 = vmatpush1.msra.mxu0 0.0
        %1624 = vmatprep.subr.mxu0 0.0
        %1625 = vmatpush1.msra.mxu0 0.0
        %1626 = vmatprep.subr.mxu0 0.0
        %1627 = vmatpush1.msra.mxu0 0.0
        %1628 = vmatprep.subr.mxu0 0.0
        %1629 = vmatpush1.msra.mxu0 0.0
        %1630 = vmatprep.subr.mxu0 0.0
        %1631 = vmatpush1.msra.mxu0 0.0
        %1632 = vmatprep.subr.mxu0 0.0
        %1633 = vmatpush1.msra.mxu0 0.0
        %1634 = vmatprep.subr.mxu0 0.0
        %1635 = vmatpush1.msra.mxu0 0.0
        %1636 = vmatprep.subr.mxu0 0.0
        %1637 = vmatpush1.msra.mxu0 0.0
        %1638 = vmatprep.mubr.f32.mxu0 0.0
        %1639 = vmatmul.mubr.f32.gmra.mrb[0].mxu0 %v1569
        %v1640 = vpop.f32.mrb[0].mxu0
        %v1641 = vadd.f32 %v1561, %v1640
        %v1642 = vpop.f32.mrb[0].mxu0
        %v1643 = vadd.f32 %v1561, %v1642
        %1644 = vmatprep.mubr.f32.mxu0 0.0
        %1645 = vmatmul.mubr.f32.gmra.mrb[0].mxu0 %v1572
        %v1646 = vpop.f32.mrb[0].mxu0
        %v1647 = vadd.f32 %v1566, %v1646
        %v1648 = vpop.f32.mrb[0].mxu0
        %v1649 = vadd.f32 %v1566, %v1648
        %1650 = vdwg.mxu0
        %v1651 = vmul.f32 %v1641, 100.0
        %v1652 = vmul.f32 %v1643, 100.0
        %v1653 = vmul.f32 %v1647, 100.0
        %v1654 = vmul.f32 %v1649, 100.0
        %v1655 = vmin.f32 %v1651, 20.0
        %v1656 = vmin.f32 %v1652, 20.0
        %v1657 = vmin.f32 %v1653, 20.0
        %v1658 = vmin.f32 %v1654, 20.0
        %v1659 = vmul.f32 %v1655, 1.442695
        %v1660 = vpow.pop %v1659
        %v1661 = vmul.f32 %v1656, 1.442695
        %v1662 = vpow.pop %v1661
        %v1663 = vmul.f32 %v1657, 1.442695
        %v1664 = vpow.pop %v1663
        %v1665 = vmul.f32 %v1658, 1.442695
        %v1666 = vpow.pop %v1665
        %v1667 = vadd.f32 %v1660, 1.0
        %v1668 = vlog2.pop %v1667
        %v1669 = vmul.f32 %v1668, 0.6931472
        %v1670 = vmul.f32 -0.5, %v1660
        %v1671 = vadd.f32 %v1670, 1.0
        %v1672 = vmul.f32 %v1671, %v1660
        %v1673 = vand.u32 2147483647, %v1660
        %vm1674 = vcmp.lt.f32.partialorder %v1673, 0.0004427343
        %v1675 = vsel %vm1674, %v1672, %v1669
        %v1676 = vadd.f32 %v1662, 1.0
        %v1677 = vlog2.pop %v1676
        %v1678 = vmul.f32 %v1677, 0.6931472
        %v1679 = vmul.f32 -0.5, %v1662
        %v1680 = vadd.f32 %v1679, 1.0
        %v1681 = vmul.f32 %v1680, %v1662
        %v1682 = vand.u32 2147483647, %v1662
        %vm1683 = vcmp.lt.f32.partialorder %v1682, 0.0004427343
        %v1684 = vsel %vm1683, %v1681, %v1678
        %v1685 = vadd.f32 %v1664, 1.0
        %v1686 = vlog2.pop %v1685
        %v1687 = vmul.f32 %v1686, 0.6931472
        %v1688 = vmul.f32 -0.5, %v1664
        %v1689 = vadd.f32 %v1688, 1.0
        %v1690 = vmul.f32 %v1689, %v1664
        %v1691 = vand.u32 2147483647, %v1664
        %vm1692 = vcmp.lt.f32.partialorder %v1691, 0.0004427343
        %v1693 = vsel %vm1692, %v1690, %v1687
        %v1694 = vadd.f32 %v1666, 1.0
        %v1695 = vlog2.pop %v1694
        %v1696 = vmul.f32 %v1695, 0.6931472
        %v1697 = vmul.f32 -0.5, %v1666
        %v1698 = vadd.f32 %v1697, 1.0
        %v1699 = vmul.f32 %v1698, %v1666
        %v1700 = vand.u32 2147483647, %v1666
        %vm1701 = vcmp.lt.f32.partialorder %v1700, 0.0004427343
        %v1702 = vsel %vm1701, %v1699, %v1696
        %v1703 = vmul.f32 %v1675, 0.01
        %v1704 = vmul.f32 %v1684, 0.01
        %v1705 = vmul.f32 %v1693, 0.01
        %v1706 = vmul.f32 %v1702, 0.01
        %vm1707 = vcmp.gt.f32.partialorder %v1651, 20.0
        %vm1708 = vcmp.gt.f32.partialorder %v1652, 20.0
        %vm1709 = vcmp.gt.f32.partialorder %v1653, 20.0
        %vm1710 = vcmp.gt.f32.partialorder %v1654, 20.0
        %v1711 = vsel %vm1707, %v1641, %v1703
        %v1712 = vsel %vm1708, %v1643, %v1704
        %v1713 = vsel %vm1709, %v1647, %v1705
        %v1714 = vsel %vm1710, %v1649, %v1706
        %v1715 = vld [vmem:[%s9] sm:$0xff]
        %v1716 = vld [vmem:[%s9 + $0x8] sm:$0xff]
        %v1717 = vld [vmem:[%s9 + $0x10] sm:$0xff]
        %v1718 = vld [vmem:[%s9 + $0x18] sm:$0xff]
        %v1719 = vld [vmem:[%s10] sm:$0xff]
        %v1720 = vld [vmem:[%s10 + $0x8] sm:$0xff]
        %v1721 = vld [vmem:[%s10 + $0x10] sm:$0xff]
        %v1722 = vld [vmem:[%s10 + $0x18] sm:$0xff]
        %v1724 = vsel %vm713, %v1719, 0
        %v1727 = vsel %vm713, %v1720, 0
        %v1730 = vsel %vm713, %v1721, 0
        %v1733 = vsel %vm713, %v1722, 0
        %1735 = vmatprep.subr.mxu0 0.0
        %1736 = vmatpush1.xpose.msra.mxu0 %v727
        %1737 = vmatprep.subr.mxu0 0.0
        %1738 = vmatpush1.xpose.msra.mxu0 %v730
        %1739 = vmatprep.subr.mxu0 0.0
        %1740 = vmatpush1.xpose.msra.mxu0 %v733
        %1741 = vmatprep.subr.mxu0 0.0
        %1742 = vmatpush1.xpose.msra.mxu0 %v736
        %1743 = vmatprep.subr.mxu0 0.0
        %1744 = vmatpush1.xpose.msra.mxu0 %v739
        %1745 = vmatprep.subr.mxu0 0.0
        %1746 = vmatpush1.xpose.msra.mxu0 %v742
        %1747 = vmatprep.subr.mxu0 0.0
        %1748 = vmatpush1.xpose.msra.mxu0 %v745
        %1749 = vmatprep.subr.mxu0 0.0
        %1750 = vmatpush1.xpose.msra.mxu0 %v748
        %1751 = vmatprep.subr.mxu0 0.0
        %1752 = vmatpush1.xpose.msra.mxu0 %v751
        %1753 = vmatprep.subr.mxu0 0.0
        %1754 = vmatpush1.xpose.msra.mxu0 %v754
        %1755 = vmatprep.subr.mxu0 0.0
        %1756 = vmatpush1.xpose.msra.mxu0 %v757
        %1757 = vmatprep.subr.mxu0 0.0
        %1758 = vmatpush1.xpose.msra.mxu0 %v760
        %1759 = vmatprep.subr.mxu0 0.0
        %1760 = vmatpush1.xpose.msra.mxu0 %v763
        %1761 = vmatprep.subr.mxu0 0.0
        %1762 = vmatpush1.xpose.msra.mxu0 %v766
        %1763 = vmatprep.subr.mxu0 0.0
        %1764 = vmatpush1.xpose.msra.mxu0 %v769
        %1765 = vmatprep.subr.mxu0 0.0
        %1766 = vmatpush1.xpose.msra.mxu0 %v772
        %1767 = vmatprep.subr.mxu0 0.0
        %1768 = vmatpush1.xpose.msra.mxu0 %v775
        %1769 = vmatprep.subr.mxu0 0.0
        %1770 = vmatpush1.xpose.msra.mxu0 %v778
        %1771 = vmatprep.subr.mxu0 0.0
        %1772 = vmatpush1.xpose.msra.mxu0 %v781
        %1773 = vmatprep.subr.mxu0 0.0
        %1774 = vmatpush1.xpose.msra.mxu0 %v784
        %1775 = vmatprep.subr.mxu0 0.0
        %1776 = vmatpush1.xpose.msra.mxu0 %v787
        %1777 = vmatprep.subr.mxu0 0.0
        %1778 = vmatpush1.xpose.msra.mxu0 %v790
        %1779 = vmatprep.subr.mxu0 0.0
        %1780 = vmatpush1.xpose.msra.mxu0 %v793
        %1781 = vmatprep.subr.mxu0 0.0
        %1782 = vmatpush1.xpose.msra.mxu0 %v796
        %1783 = vmatprep.subr.mxu0 0.0
        %1784 = vmatpush1.xpose.msra.mxu0 %v799
        %1785 = vmatprep.subr.mxu0 0.0
        %1786 = vmatpush1.xpose.msra.mxu0 %v802
        %1787 = vmatprep.subr.mxu0 0.0
        %1788 = vmatpush1.xpose.msra.mxu0 %v805
        %1789 = vmatprep.subr.mxu0 0.0
        %1790 = vmatpush1.xpose.msra.mxu0 %v808
        %1791 = vmatprep.subr.mxu0 0.0
        %1792 = vmatpush1.xpose.msra.mxu0 %v811
        %1793 = vmatprep.subr.mxu0 0.0
        %1794 = vmatpush1.xpose.msra.mxu0 %v814
        %1795 = vmatprep.subr.mxu0 0.0
        %1796 = vmatpush1.xpose.msra.mxu0 %v817
        %1797 = vmatprep.subr.mxu0 0.0
        %1798 = vmatpush1.xpose.msra.mxu0 %v820
        %1799 = vmatprep.mubr.f32.mxu0 0.0
        %1800 = vmatmul.mubr.f32.gmra.mrb[0].mxu0 %v1724
        %v1801 = vpop.f32.mrb[0].mxu0
        %v1802 = vadd.f32 0.0, %v1801
        %v1803 = vpop.f32.mrb[0].mxu0
        %v1804 = vadd.f32 0.0, %v1803
        %1805 = vmatprep.mubr.f32.mxu0 0.0
        %1806 = vmatmul.mubr.f32.gmra.mrb[0].mxu0 %v1727
        %v1807 = vpop.f32.mrb[0].mxu0
        %v1808 = vadd.f32 0.0, %v1807
        %v1809 = vpop.f32.mrb[0].mxu0
        %v1810 = vadd.f32 0.0, %v1809
        %1811 = vmatprep.mubr.f32.mxu0 0.0
        %1812 = vmatmul.mubr.f32.gmra.mrb[0].mxu0 %v1730
        %v1813 = vpop.f32.mrb[0].mxu0
        %v1814 = vadd.f32 0.0, %v1813
        %v1815 = vpop.f32.mrb[0].mxu0
        %v1816 = vadd.f32 0.0, %v1815
        %1817 = vmatprep.mubr.f32.mxu0 0.0
        %1818 = vmatmul.mubr.f32.gmra.mrb[0].mxu0 %v1733
        %v1819 = vpop.f32.mrb[0].mxu0
        %v1820 = vadd.f32 0.0, %v1819
        %v1821 = vpop.f32.mrb[0].mxu0
        %v1822 = vadd.f32 0.0, %v1821
        %1823 = vdwg.mxu0
        %vm1824 = vcmask 105472
        %v1826 = vsel %vm1824, %v1715, 0
        %v1829 = vsel %vm1824, %v1716, 0
        %v1832 = vsel %vm1824, %v1717, 0
        %v1835 = vsel %vm1824, %v1718, 0
        %vm1837 = vcmask 1044480
        %v1839 = vsel %vm1837, %v1713, 0
        %v1842 = vsel %vm1837, %v1714, 0
        %1844 = vmatprep.subr.mxu0 %v1712
        %1845 = vmatpush1.msra.mxu0 %v1711
        %1846 = vmatprep.subr.mxu0 %v1842
        %1847 = vmatpush1.msra.mxu0 %v1839
        %1848 = vmatprep.subr.mxu0 0.0
        %1849 = vmatpush1.msra.mxu0 0.0
        %1850 = vmatprep.subr.mxu0 0.0
        %1851 = vmatpush1.msra.mxu0 0.0
        %1852 = vmatprep.subr.mxu0 0.0
        %1853 = vmatpush1.msra.mxu0 0.0
        %1854 = vmatprep.subr.mxu0 0.0
        %1855 = vmatpush1.msra.mxu0 0.0
        %1856 = vmatprep.subr.mxu0 0.0
        %1857 = vmatpush1.msra.mxu0 0.0
        %1858 = vmatprep.subr.mxu0 0.0
        %1859 = vmatpush1.msra.mxu0 0.0
        %1860 = vmatprep.subr.mxu0 0.0
        %1861 = vmatpush1.msra.mxu0 0.0
        %1862 = vmatprep.subr.mxu0 0.0
        %1863 = vmatpush1.msra.mxu0 0.0
        %1864 = vmatprep.subr.mxu0 0.0
        %1865 = vmatpush1.msra.mxu0 0.0
        %1866 = vmatprep.subr.mxu0 0.0
        %1867 = vmatpush1.msra.mxu0 0.0
        %1868 = vmatprep.subr.mxu0 0.0
        %1869 = vmatpush1.msra.mxu0 0.0
        %1870 = vmatprep.subr.mxu0 0.0
        %1871 = vmatpush1.msra.mxu0 0.0
        %1872 = vmatprep.subr.mxu0 0.0
        %1873 = vmatpush1.msra.mxu0 0.0
        %1874 = vmatprep.subr.mxu0 0.0
        %1875 = vmatpush1.msra.mxu0 0.0
        %1876 = vmatprep.subr.mxu0 0.0
        %1877 = vmatpush1.msra.mxu0 0.0
        %1878 = vmatprep.subr.mxu0 0.0
        %1879 = vmatpush1.msra.mxu0 0.0
        %1880 = vmatprep.subr.mxu0 0.0
        %1881 = vmatpush1.msra.mxu0 0.0
        %1882 = vmatprep.subr.mxu0 0.0
        %1883 = vmatpush1.msra.mxu0 0.0
        %1884 = vmatprep.subr.mxu0 0.0
        %1885 = vmatpush1.msra.mxu0 0.0
        %1886 = vmatprep.subr.mxu0 0.0
        %1887 = vmatpush1.msra.mxu0 0.0
        %1888 = vmatprep.subr.mxu0 0.0
        %1889 = vmatpush1.msra.mxu0 0.0
        %1890 = vmatprep.subr.mxu0 0.0
        %1891 = vmatpush1.msra.mxu0 0.0
        %1892 = vmatprep.subr.mxu0 0.0
        %1893 = vmatpush1.msra.mxu0 0.0
        %1894 = vmatprep.subr.mxu0 0.0
        %1895 = vmatpush1.msra.mxu0 0.0
        %1896 = vmatprep.subr.mxu0 0.0
        %1897 = vmatpush1.msra.mxu0 0.0
        %1898 = vmatprep.subr.mxu0 0.0
        %1899 = vmatpush1.msra.mxu0 0.0
        %1900 = vmatprep.subr.mxu0 0.0
        %1901 = vmatpush1.msra.mxu0 0.0
        %1902 = vmatprep.subr.mxu0 0.0
        %1903 = vmatpush1.msra.mxu0 0.0
        %1904 = vmatprep.subr.mxu0 0.0
        %1905 = vmatpush1.msra.mxu0 0.0
        %1906 = vmatprep.subr.mxu0 0.0
        %1907 = vmatpush1.msra.mxu0 0.0
        %1908 = vmatprep.mubr.f32.mxu0 0.0
        %1909 = vmatmul.mubr.f32.gmra.mrb[0].mxu0 %v1826
        %v1910 = vpop.f32.mrb[0].mxu0
        %v1911 = vadd.f32 %v1802, %v1910
        %v1912 = vpop.f32.mrb[0].mxu0
        %v1913 = vadd.f32 %v1804, %v1912
        %1914 = vmatprep.mubr.f32.mxu0 0.0
        %1915 = vmatmul.mubr.f32.gmra.mrb[0].mxu0 %v1829
        %v1916 = vpop.f32.mrb[0].mxu0
        %v1917 = vadd.f32 %v1808, %v1916
        %v1918 = vpop.f32.mrb[0].mxu0
        %v1919 = vadd.f32 %v1810, %v1918
        %1920 = vmatprep.mubr.f32.mxu0 0.0
        %1921 = vmatmul.mubr.f32.gmra.mrb[0].mxu0 %v1832
        %v1922 = vpop.f32.mrb[0].mxu0
        %v1923 = vadd.f32 %v1814, %v1922
        %v1924 = vpop.f32.mrb[0].mxu0
        %v1925 = vadd.f32 %v1816, %v1924
        %1926 = vmatprep.mubr.f32.mxu0 0.0
        %1927 = vmatmul.mubr.f32.gmra.mrb[0].mxu0 %v1835
        %v1928 = vpop.f32.mrb[0].mxu0
        %v1929 = vadd.f32 %v1820, %v1928
        %v1930 = vpop.f32.mrb[0].mxu0
        %v1931 = vadd.f32 %v1822, %v1930
        %1932 = vdwg.mxu0
        %v1933 = vmul.f32 %v1911, 0.70710677
        %v1934 = vmul.f32 %v1913, 0.70710677
        %v1935 = vmul.f32 %v1917, 0.70710677
        %v1936 = vmul.f32 %v1919, 0.70710677
        %v1937 = vmul.f32 %v1923, 0.70710677
        %v1938 = vmul.f32 %v1925, 0.70710677
        %v1939 = vmul.f32 %v1929, 0.70710677
        %v1940 = vmul.f32 %v1931, 0.70710677
        %v1941 = vld [vmem:[%s11] sm:$0xff]
        %v1942 = vld [vmem:[%s11 + $0x8] sm:$0xff]
        %v1943 = vld [vmem:[%s11 + $0x10] sm:$0xff]
        %v1944 = vld [vmem:[%s11 + $0x18] sm:$0xff]
        %1946 = vset.pattern.permute.xlu0 0
        %1947 = vperm.xlu0 %1946, %v1941
        %v1948 = vpop.permute.xlu0 %1947
        %1951 = vset.pattern.permute.xlu0 0
        %1952 = vperm.xlu0 %1951, %v1942
        %v1953 = vpop.permute.xlu0 %1952
        %1956 = vset.pattern.permute.xlu0 0
        %1957 = vperm.xlu0 %1956, %v1943
        %v1958 = vpop.permute.xlu0 %1957
        %1961 = vset.pattern.permute.xlu0 0
        %1962 = vperm.xlu0 %1961, %v1944
        %v1963 = vpop.permute.xlu0 %1962
        %v1965 = vadd.f32 %v1933, %v1948
        %v1966 = vadd.f32 %v1934, %v1948
        %v1967 = vadd.f32 %v1935, %v1953
        %v1968 = vadd.f32 %v1936, %v1953
        %v1969 = vadd.f32 %v1937, %v1958
        %v1970 = vadd.f32 %v1938, %v1958
        %v1971 = vadd.f32 %v1939, %v1963
        %v1972 = vadd.f32 %v1940, %v1963
        %v1973 = vmul.f32 %v1965, 100.0
        %v1974 = vmul.f32 %v1966, 100.0
        %v1975 = vmul.f32 %v1967, 100.0
        %v1976 = vmul.f32 %v1968, 100.0
        %v1977 = vmul.f32 %v1969, 100.0
        %v1978 = vmul.f32 %v1970, 100.0
        %v1979 = vmul.f32 %v1971, 100.0
        %v1980 = vmul.f32 %v1972, 100.0
        %v1981 = vmin.f32 %v1973, 20.0
        %v1982 = vmin.f32 %v1974, 20.0
        %v1983 = vmin.f32 %v1975, 20.0
        %v1984 = vmin.f32 %v1976, 20.0
        %v1985 = vmin.f32 %v1977, 20.0
        %v1986 = vmin.f32 %v1978, 20.0
        %v1987 = vmin.f32 %v1979, 20.0
        %v1988 = vmin.f32 %v1980, 20.0
        %v1989 = vmul.f32 %v1981, 1.442695
        %v1990 = vpow.pop %v1989
        %v1991 = vmul.f32 %v1982, 1.442695
        %v1992 = vpow.pop %v1991
        %v1993 = vmul.f32 %v1983, 1.442695
        %v1994 = vpow.pop %v1993
        %v1995 = vmul.f32 %v1984, 1.442695
        %v1996 = vpow.pop %v1995
        %v1997 = vmul.f32 %v1985, 1.442695
        %v1998 = vpow.pop %v1997
        %v1999 = vmul.f32 %v1986, 1.442695
        %v2000 = vpow.pop %v1999
        %v2001 = vmul.f32 %v1987, 1.442695
        %v2002 = vpow.pop %v2001
        %v2003 = vmul.f32 %v1988, 1.442695
        %v2004 = vpow.pop %v2003
        %v2005 = vadd.f32 %v1990, 1.0
        %v2006 = vlog2.pop %v2005
        %v2007 = vmul.f32 %v2006, 0.6931472
        %v2008 = vmul.f32 -0.5, %v1990
        %v2009 = vadd.f32 %v2008, 1.0
        %v2010 = vmul.f32 %v2009, %v1990
        %v2011 = vand.u32 2147483647, %v1990
        %vm2012 = vcmp.lt.f32.partialorder %v2011, 0.0004427343
        %v2013 = vsel %vm2012, %v2010, %v2007
        %v2014 = vadd.f32 %v1992, 1.0
        %v2015 = vlog2.pop %v2014
        %v2016 = vmul.f32 %v2015, 0.6931472
        %v2017 = vmul.f32 -0.5, %v1992
        %v2018 = vadd.f32 %v2017, 1.0
        %v2019 = vmul.f32 %v2018, %v1992
        %v2020 = vand.u32 2147483647, %v1992
        %vm2021 = vcmp.lt.f32.partialorder %v2020, 0.0004427343
        %v2022 = vsel %vm2021, %v2019, %v2016
        %v2023 = vadd.f32 %v1994, 1.0
        %v2024 = vlog2.pop %v2023
        %v2025 = vmul.f32 %v2024, 0.6931472
        %v2026 = vmul.f32 -0.5, %v1994
        %v2027 = vadd.f32 %v2026, 1.0
        %v2028 = vmul.f32 %v2027, %v1994
        %v2029 = vand.u32 2147483647, %v1994
        %vm2030 = vcmp.lt.f32.partialorder %v2029, 0.0004427343
        %v2031 = vsel %vm2030, %v2028, %v2025
        %v2032 = vadd.f32 %v1996, 1.0
        %v2033 = vlog2.pop %v2032
        %v2034 = vmul.f32 %v2033, 0.6931472
        %v2035 = vmul.f32 -0.5, %v1996
        %v2036 = vadd.f32 %v2035, 1.0
        %v2037 = vmul.f32 %v2036, %v1996
        %v2038 = vand.u32 2147483647, %v1996
        %vm2039 = vcmp.lt.f32.partialorder %v2038, 0.0004427343
        %v2040 = vsel %vm2039, %v2037, %v2034
        %v2041 = vadd.f32 %v1998, 1.0
        %v2042 = vlog2.pop %v2041
        %v2043 = vmul.f32 %v2042, 0.6931472
        %v2044 = vmul.f32 -0.5, %v1998
        %v2045 = vadd.f32 %v2044, 1.0
        %v2046 = vmul.f32 %v2045, %v1998
        %v2047 = vand.u32 2147483647, %v1998
        %vm2048 = vcmp.lt.f32.partialorder %v2047, 0.0004427343
        %v2049 = vsel %vm2048, %v2046, %v2043
        %v2050 = vadd.f32 %v2000, 1.0
        %v2051 = vlog2.pop %v2050
        %v2052 = vmul.f32 %v2051, 0.6931472
        %v2053 = vmul.f32 -0.5, %v2000
        %v2054 = vadd.f32 %v2053, 1.0
        %v2055 = vmul.f32 %v2054, %v2000
        %v2056 = vand.u32 2147483647, %v2000
        %vm2057 = vcmp.lt.f32.partialorder %v2056, 0.0004427343
        %v2058 = vsel %vm2057, %v2055, %v2052
        %v2059 = vadd.f32 %v2002, 1.0
        %v2060 = vlog2.pop %v2059
        %v2061 = vmul.f32 %v2060, 0.6931472
        %v2062 = vmul.f32 -0.5, %v2002
        %v2063 = vadd.f32 %v2062, 1.0
        %v2064 = vmul.f32 %v2063, %v2002
        %v2065 = vand.u32 2147483647, %v2002
        %vm2066 = vcmp.lt.f32.partialorder %v2065, 0.0004427343
        %v2067 = vsel %vm2066, %v2064, %v2061
        %v2068 = vadd.f32 %v2004, 1.0
        %v2069 = vlog2.pop %v2068
        %v2070 = vmul.f32 %v2069, 0.6931472
        %v2071 = vmul.f32 -0.5, %v2004
        %v2072 = vadd.f32 %v2071, 1.0
        %v2073 = vmul.f32 %v2072, %v2004
        %v2074 = vand.u32 2147483647, %v2004
        %vm2075 = vcmp.lt.f32.partialorder %v2074, 0.0004427343
        %v2076 = vsel %vm2075, %v2073, %v2070
        %v2077 = vmul.f32 %v2013, 0.01
        %v2078 = vmul.f32 %v2022, 0.01
        %v2079 = vmul.f32 %v2031, 0.01
        %v2080 = vmul.f32 %v2040, 0.01
        %v2081 = vmul.f32 %v2049, 0.01
        %v2082 = vmul.f32 %v2058, 0.01
        %v2083 = vmul.f32 %v2067, 0.01
        %v2084 = vmul.f32 %v2076, 0.01
        %vm2085 = vcmp.gt.f32.partialorder %v1973, 20.0
        %vm2086 = vcmp.gt.f32.partialorder %v1974, 20.0
        %vm2087 = vcmp.gt.f32.partialorder %v1975, 20.0
        %vm2088 = vcmp.gt.f32.partialorder %v1976, 20.0
        %vm2089 = vcmp.gt.f32.partialorder %v1977, 20.0
        %vm2090 = vcmp.gt.f32.partialorder %v1978, 20.0
        %vm2091 = vcmp.gt.f32.partialorder %v1979, 20.0
        %vm2092 = vcmp.gt.f32.partialorder %v1980, 20.0
        %v2093 = vsel %vm2085, %v1965, %v2077
        %v2094 = vsel %vm2086, %v1966, %v2078
        %v2095 = vsel %vm2087, %v1967, %v2079
        %v2096 = vsel %vm2088, %v1968, %v2080
        %v2097 = vsel %vm2089, %v1969, %v2081
        %v2098 = vsel %vm2090, %v1970, %v2082
        %v2099 = vsel %vm2091, %v1971, %v2083
        %v2100 = vsel %vm2092, %v1972, %v2084
        %v2101 = vld [vmem:[%s12] sm:$0xff]
        %v2102 = vld [vmem:[%s12 + $0x8] sm:$0xff]
        %v2103 = vld [vmem:[%s12 + $0x10] sm:$0xff]
        %v2104 = vld [vmem:[%s12 + $0x18] sm:$0xff]
        %v2105 = vld [vmem:[%s13] sm:$0xff]
        %v2106 = vld [vmem:[%s13 + $0x8] sm:$0xff]
        %v2107 = vld [vmem:[%s13 + $0x10] sm:$0xff]
        %v2108 = vld [vmem:[%s13 + $0x18] sm:$0xff]
        %2110 = vset.pattern.permute.xlu0 0
        %2111 = vperm.xlu0 %2110, %v2105
        %v2112 = vpop.permute.xlu0 %2111
        %2115 = vset.pattern.permute.xlu0 0
        %2116 = vperm.xlu0 %2115, %v2106
        %v2117 = vpop.permute.xlu0 %2116
        %2120 = vset.pattern.permute.xlu0 0
        %2121 = vperm.xlu0 %2120, %v2107
        %v2122 = vpop.permute.xlu0 %2121
        %2125 = vset.pattern.permute.xlu0 0
        %2126 = vperm.xlu0 %2125, %v2108
        %v2127 = vpop.permute.xlu0 %2126
        %v2130 = vsel %vm1067, %v2101, 0
        %v2133 = vsel %vm1067, %v2102, 0
        %v2136 = vsel %vm1067, %v2103, 0
        %v2139 = vsel %vm1067, %v2104, 0
        %2141 = vmatprep.subr.mxu0 %v2094
        %2142 = vmatpush1.msra.mxu0 %v2093
        %2143 = vmatprep.subr.mxu0 %v2096
        %2144 = vmatpush1.msra.mxu0 %v2095
        %2145 = vmatprep.subr.mxu0 %v2098
        %2146 = vmatpush1.msra.mxu0 %v2097
        %2147 = vmatprep.subr.mxu0 %v2100
        %2148 = vmatpush1.msra.mxu0 %v2099
        %2149 = vmatprep.subr.mxu0 0.0
        %2150 = vmatpush1.msra.mxu0 0.0
        %2151 = vmatprep.subr.mxu0 0.0
        %2152 = vmatpush1.msra.mxu0 0.0
        %2153 = vmatprep.subr.mxu0 0.0
        %2154 = vmatpush1.msra.mxu0 0.0
        %2155 = vmatprep.subr.mxu0 0.0
        %2156 = vmatpush1.msra.mxu0 0.0
        %2157 = vmatprep.subr.mxu0 0.0
        %2158 = vmatpush1.msra.mxu0 0.0
        %2159 = vmatprep.subr.mxu0 0.0
        %2160 = vmatpush1.msra.mxu0 0.0
        %2161 = vmatprep.subr.mxu0 0.0
        %2162 = vmatpush1.msra.mxu0 0.0
        %2163 = vmatprep.subr.mxu0 0.0
        %2164 = vmatpush1.msra.mxu0 0.0
        %2165 = vmatprep.subr.mxu0 0.0
        %2166 = vmatpush1.msra.mxu0 0.0
        %2167 = vmatprep.subr.mxu0 0.0
        %2168 = vmatpush1.msra.mxu0 0.0
        %2169 = vmatprep.subr.mxu0 0.0
        %2170 = vmatpush1.msra.mxu0 0.0
        %2171 = vmatprep.subr.mxu0 0.0
        %2172 = vmatpush1.msra.mxu0 0.0
        %2173 = vmatprep.subr.mxu0 0.0
        %2174 = vmatpush1.msra.mxu0 0.0
        %2175 = vmatprep.subr.mxu0 0.0
        %2176 = vmatpush1.msra.mxu0 0.0
        %2177 = vmatprep.subr.mxu0 0.0
        %2178 = vmatpush1.msra.mxu0 0.0
        %2179 = vmatprep.subr.mxu0 0.0
        %2180 = vmatpush1.msra.mxu0 0.0
        %2181 = vmatprep.subr.mxu0 0.0
        %2182 = vmatpush1.msra.mxu0 0.0
        %2183 = vmatprep.subr.mxu0 0.0
        %2184 = vmatpush1.msra.mxu0 0.0
        %2185 = vmatprep.subr.mxu0 0.0
        %2186 = vmatpush1.msra.mxu0 0.0
        %2187 = vmatprep.subr.mxu0 0.0
        %2188 = vmatpush1.msra.mxu0 0.0
        %2189 = vmatprep.subr.mxu0 0.0
        %2190 = vmatpush1.msra.mxu0 0.0
        %2191 = vmatprep.subr.mxu0 0.0
        %2192 = vmatpush1.msra.mxu0 0.0
        %2193 = vmatprep.subr.mxu0 0.0
        %2194 = vmatpush1.msra.mxu0 0.0
        %2195 = vmatprep.subr.mxu0 0.0
        %2196 = vmatpush1.msra.mxu0 0.0
        %2197 = vmatprep.subr.mxu0 0.0
        %2198 = vmatpush1.msra.mxu0 0.0
        %2199 = vmatprep.subr.mxu0 0.0
        %2200 = vmatpush1.msra.mxu0 0.0
        %2201 = vmatprep.subr.mxu0 0.0
        %2202 = vmatpush1.msra.mxu0 0.0
        %2203 = vmatprep.subr.mxu0 0.0
        %2204 = vmatpush1.msra.mxu0 0.0
        %2205 = vmatprep.mubr.f32.mxu0 0.0
        %2206 = vmatmul.mubr.f32.gmra.mrb[0].mxu0 %v2130
        %v2207 = vpop.f32.mrb[0].mxu0
        %v2208 = vadd.f32 %v2112, %v2207
        %v2209 = vpop.f32.mrb[0].mxu0
        %v2210 = vadd.f32 %v2112, %v2209
        %2211 = vmatprep.mubr.f32.mxu0 0.0
        %2212 = vmatmul.mubr.f32.gmra.mrb[0].mxu0 %v2133
        %v2213 = vpop.f32.mrb[0].mxu0
        %v2214 = vadd.f32 %v2117, %v2213
        %v2215 = vpop.f32.mrb[0].mxu0
        %v2216 = vadd.f32 %v2117, %v2215
        %2217 = vmatprep.mubr.f32.mxu0 0.0
        %2218 = vmatmul.mubr.f32.gmra.mrb[0].mxu0 %v2136
        %v2219 = vpop.f32.mrb[0].mxu0
        %v2220 = vadd.f32 %v2122, %v2219
        %v2221 = vpop.f32.mrb[0].mxu0
        %v2222 = vadd.f32 %v2122, %v2221
        %2223 = vmatprep.mubr.f32.mxu0 0.0
        %2224 = vmatmul.mubr.f32.gmra.mrb[0].mxu0 %v2139
        %v2225 = vpop.f32.mrb[0].mxu0
        %v2226 = vadd.f32 %v2127, %v2225
        %v2227 = vpop.f32.mrb[0].mxu0
        %v2228 = vadd.f32 %v2127, %v2227
        %2229 = vdwg.mxu0
        %v2230 = vmul.f32 %v2208, 100.0
        %v2231 = vmul.f32 %v2210, 100.0
        %v2232 = vmul.f32 %v2214, 100.0
        %v2233 = vmul.f32 %v2216, 100.0
        %v2234 = vmul.f32 %v2220, 100.0
        %v2235 = vmul.f32 %v2222, 100.0
        %v2236 = vmul.f32 %v2226, 100.0
        %v2237 = vmul.f32 %v2228, 100.0
        %v2238 = vmin.f32 %v2230, 20.0
        %v2239 = vmin.f32 %v2231, 20.0
        %v2240 = vmin.f32 %v2232, 20.0
        %v2241 = vmin.f32 %v2233, 20.0
        %v2242 = vmin.f32 %v2234, 20.0
        %v2243 = vmin.f32 %v2235, 20.0
        %v2244 = vmin.f32 %v2236, 20.0
        %v2245 = vmin.f32 %v2237, 20.0
        %v2246 = vmul.f32 %v2238, 1.442695
        %v2247 = vpow.pop %v2246
        %v2248 = vmul.f32 %v2239, 1.442695
        %v2249 = vpow.pop %v2248
        %v2250 = vmul.f32 %v2240, 1.442695
        %v2251 = vpow.pop %v2250
        %v2252 = vmul.f32 %v2241, 1.442695
        %v2253 = vpow.pop %v2252
        %v2254 = vmul.f32 %v2242, 1.442695
        %v2255 = vpow.pop %v2254
        %v2256 = vmul.f32 %v2243, 1.442695
        %v2257 = vpow.pop %v2256
        %v2258 = vmul.f32 %v2244, 1.442695
        %v2259 = vpow.pop %v2258
        %v2260 = vmul.f32 %v2245, 1.442695
        %v2261 = vpow.pop %v2260
        %v2262 = vadd.f32 %v2247, 1.0
        %v2263 = vlog2.pop %v2262
        %v2264 = vmul.f32 %v2263, 0.6931472
        %v2265 = vmul.f32 -0.5, %v2247
        %v2266 = vadd.f32 %v2265, 1.0
        %v2267 = vmul.f32 %v2266, %v2247
        %v2268 = vand.u32 2147483647, %v2247
        %vm2269 = vcmp.lt.f32.partialorder %v2268, 0.0004427343
        %v2270 = vsel %vm2269, %v2267, %v2264
        %v2271 = vadd.f32 %v2249, 1.0
        %v2272 = vlog2.pop %v2271
        %v2273 = vmul.f32 %v2272, 0.6931472
        %v2274 = vmul.f32 -0.5, %v2249
        %v2275 = vadd.f32 %v2274, 1.0
        %v2276 = vmul.f32 %v2275, %v2249
        %v2277 = vand.u32 2147483647, %v2249
        %vm2278 = vcmp.lt.f32.partialorder %v2277, 0.0004427343
        %v2279 = vsel %vm2278, %v2276, %v2273
        %v2280 = vadd.f32 %v2251, 1.0
        %v2281 = vlog2.pop %v2280
        %v2282 = vmul.f32 %v2281, 0.6931472
        %v2283 = vmul.f32 -0.5, %v2251
        %v2284 = vadd.f32 %v2283, 1.0
        %v2285 = vmul.f32 %v2284, %v2251
        %v2286 = vand.u32 2147483647, %v2251
        %vm2287 = vcmp.lt.f32.partialorder %v2286, 0.0004427343
        %v2288 = vsel %vm2287, %v2285, %v2282
        %v2289 = vadd.f32 %v2253, 1.0
        %v2290 = vlog2.pop %v2289
        %v2291 = vmul.f32 %v2290, 0.6931472
        %v2292 = vmul.f32 -0.5, %v2253
        %v2293 = vadd.f32 %v2292, 1.0
        %v2294 = vmul.f32 %v2293, %v2253
        %v2295 = vand.u32 2147483647, %v2253
        %vm2296 = vcmp.lt.f32.partialorder %v2295, 0.0004427343
        %v2297 = vsel %vm2296, %v2294, %v2291
        %v2298 = vadd.f32 %v2255, 1.0
        %v2299 = vlog2.pop %v2298
        %v2300 = vmul.f32 %v2299, 0.6931472
        %v2301 = vmul.f32 -0.5, %v2255
        %v2302 = vadd.f32 %v2301, 1.0
        %v2303 = vmul.f32 %v2302, %v2255
        %v2304 = vand.u32 2147483647, %v2255
        %vm2305 = vcmp.lt.f32.partialorder %v2304, 0.0004427343
        %v2306 = vsel %vm2305, %v2303, %v2300
        %v2307 = vadd.f32 %v2257, 1.0
        %v2308 = vlog2.pop %v2307
        %v2309 = vmul.f32 %v2308, 0.6931472
        %v2310 = vmul.f32 -0.5, %v2257
        %v2311 = vadd.f32 %v2310, 1.0
        %v2312 = vmul.f32 %v2311, %v2257
        %v2313 = vand.u32 2147483647, %v2257
        %vm2314 = vcmp.lt.f32.partialorder %v2313, 0.0004427343
        %v2315 = vsel %vm2314, %v2312, %v2309
        %v2316 = vadd.f32 %v2259, 1.0
        %v2317 = vlog2.pop %v2316
        %v2318 = vmul.f32 %v2317, 0.6931472
        %v2319 = vmul.f32 -0.5, %v2259
        %v2320 = vadd.f32 %v2319, 1.0
        %v2321 = vmul.f32 %v2320, %v2259
        %v2322 = vand.u32 2147483647, %v2259
        %vm2323 = vcmp.lt.f32.partialorder %v2322, 0.0004427343
        %v2324 = vsel %vm2323, %v2321, %v2318
        %v2325 = vadd.f32 %v2261, 1.0
        %v2326 = vlog2.pop %v2325
        %v2327 = vmul.f32 %v2326, 0.6931472
        %v2328 = vmul.f32 -0.5, %v2261
        %v2329 = vadd.f32 %v2328, 1.0
        %v2330 = vmul.f32 %v2329, %v2261
        %v2331 = vand.u32 2147483647, %v2261
        %vm2332 = vcmp.lt.f32.partialorder %v2331, 0.0004427343
        %v2333 = vsel %vm2332, %v2330, %v2327
        %v2334 = vmul.f32 %v2270, 0.01
        %v2335 = vmul.f32 %v2279, 0.01
        %v2336 = vmul.f32 %v2288, 0.01
        %v2337 = vmul.f32 %v2297, 0.01
        %v2338 = vmul.f32 %v2306, 0.01
        %v2339 = vmul.f32 %v2315, 0.01
        %v2340 = vmul.f32 %v2324, 0.01
        %v2341 = vmul.f32 %v2333, 0.01
        %vm2342 = vcmp.gt.f32.partialorder %v2230, 20.0
        %vm2343 = vcmp.gt.f32.partialorder %v2231, 20.0
        %vm2344 = vcmp.gt.f32.partialorder %v2232, 20.0
        %vm2345 = vcmp.gt.f32.partialorder %v2233, 20.0
        %vm2346 = vcmp.gt.f32.partialorder %v2234, 20.0
        %vm2347 = vcmp.gt.f32.partialorder %v2235, 20.0
        %vm2348 = vcmp.gt.f32.partialorder %v2236, 20.0
        %vm2349 = vcmp.gt.f32.partialorder %v2237, 20.0
        %v2350 = vsel %vm2342, %v2208, %v2334
        %v2351 = vsel %vm2343, %v2210, %v2335
        %v2352 = vsel %vm2344, %v2214, %v2336
        %v2353 = vsel %vm2345, %v2216, %v2337
        %v2354 = vsel %vm2346, %v2220, %v2338
        %v2355 = vsel %vm2347, %v2222, %v2339
        %v2356 = vsel %vm2348, %v2226, %v2340
        %v2357 = vsel %vm2349, %v2228, %v2341
        %v2358 = vld [vmem:[%s14] sm:$0xff]
        %v2359 = vld [vmem:[%s14 + $0x8] sm:$0xff]
        %v2360 = vld [vmem:[%s14 + $0x10] sm:$0xff]
        %v2361 = vld [vmem:[%s14 + $0x18] sm:$0xff]
        %v2362 = vld [vmem:[%s15] sm:$0xff]
        %v2363 = vld [vmem:[%s15 + $0x8] sm:$0xff]
        %v2364 = vld [vmem:[%s15 + $0x10] sm:$0xff]
        %v2365 = vld [vmem:[%s15 + $0x18] sm:$0xff]
        %2367 = vset.pattern.permute.xlu0 0
        %2368 = vperm.xlu0 %2367, %v2362
        %v2369 = vpop.permute.xlu0 %2368
        %2372 = vset.pattern.permute.xlu0 0
        %2373 = vperm.xlu0 %2372, %v2363
        %v2374 = vpop.permute.xlu0 %2373
        %2377 = vset.pattern.permute.xlu0 0
        %2378 = vperm.xlu0 %2377, %v2364
        %v2379 = vpop.permute.xlu0 %2378
        %2382 = vset.pattern.permute.xlu0 0
        %2383 = vperm.xlu0 %2382, %v2365
        %v2384 = vpop.permute.xlu0 %2383
        %v2387 = vsel %vm1067, %v2358, 0
        %v2390 = vsel %vm1067, %v2359, 0
        %v2393 = vsel %vm1067, %v2360, 0
        %v2396 = vsel %vm1067, %v2361, 0
        %2398 = vmatprep.subr.mxu0 %v2351
        %2399 = vmatpush1.msra.mxu0 %v2350
        %2400 = vmatprep.subr.mxu0 %v2353
        %2401 = vmatpush1.msra.mxu0 %v2352
        %2402 = vmatprep.subr.mxu0 %v2355
        %2403 = vmatpush1.msra.mxu0 %v2354
        %2404 = vmatprep.subr.mxu0 %v2357
        %2405 = vmatpush1.msra.mxu0 %v2356
        %2406 = vmatprep.subr.mxu0 0.0
        %2407 = vmatpush1.msra.mxu0 0.0
        %2408 = vmatprep.subr.mxu0 0.0
        %2409 = vmatpush1.msra.mxu0 0.0
        %2410 = vmatprep.subr.mxu0 0.0
        %2411 = vmatpush1.msra.mxu0 0.0
        %2412 = vmatprep.subr.mxu0 0.0
        %2413 = vmatpush1.msra.mxu0 0.0
        %2414 = vmatprep.subr.mxu0 0.0
        %2415 = vmatpush1.msra.mxu0 0.0
        %2416 = vmatprep.subr.mxu0 0.0
        %2417 = vmatpush1.msra.mxu0 0.0
        %2418 = vmatprep.subr.mxu0 0.0
        %2419 = vmatpush1.msra.mxu0 0.0
        %2420 = vmatprep.subr.mxu0 0.0
        %2421 = vmatpush1.msra.mxu0 0.0
        %2422 = vmatprep.subr.mxu0 0.0
        %2423 = vmatpush1.msra.mxu0 0.0
        %2424 = vmatprep.subr.mxu0 0.0
        %2425 = vmatpush1.msra.mxu0 0.0
        %2426 = vmatprep.subr.mxu0 0.0
        %2427 = vmatpush1.msra.mxu0 0.0
        %2428 = vmatprep.subr.mxu0 0.0
        %2429 = vmatpush1.msra.mxu0 0.0
        %2430 = vmatprep.subr.mxu0 0.0
        %2431 = vmatpush1.msra.mxu0 0.0
        %2432 = vmatprep.subr.mxu0 0.0
        %2433 = vmatpush1.msra.mxu0 0.0
        %2434 = vmatprep.subr.mxu0 0.0
        %2435 = vmatpush1.msra.mxu0 0.0
        %2436 = vmatprep.subr.mxu0 0.0
        %2437 = vmatpush1.msra.mxu0 0.0
        %2438 = vmatprep.subr.mxu0 0.0
        %2439 = vmatpush1.msra.mxu0 0.0
        %2440 = vmatprep.subr.mxu0 0.0
        %2441 = vmatpush1.msra.mxu0 0.0
        %2442 = vmatprep.subr.mxu0 0.0
        %2443 = vmatpush1.msra.mxu0 0.0
        %2444 = vmatprep.subr.mxu0 0.0
        %2445 = vmatpush1.msra.mxu0 0.0
        %2446 = vmatprep.subr.mxu0 0.0
        %2447 = vmatpush1.msra.mxu0 0.0
        %2448 = vmatprep.subr.mxu0 0.0
        %2449 = vmatpush1.msra.mxu0 0.0
        %2450 = vmatprep.subr.mxu0 0.0
        %2451 = vmatpush1.msra.mxu0 0.0
        %2452 = vmatprep.subr.mxu0 0.0
        %2453 = vmatpush1.msra.mxu0 0.0
        %2454 = vmatprep.subr.mxu0 0.0
        %2455 = vmatpush1.msra.mxu0 0.0
        %2456 = vmatprep.subr.mxu0 0.0
        %2457 = vmatpush1.msra.mxu0 0.0
        %2458 = vmatprep.subr.mxu0 0.0
        %2459 = vmatpush1.msra.mxu0 0.0
        %2460 = vmatprep.subr.mxu0 0.0
        %2461 = vmatpush1.msra.mxu0 0.0
        %2462 = vmatprep.mubr.f32.mxu0 0.0
        %2463 = vmatmul.mubr.f32.gmra.mrb[0].mxu0 %v2387
        %v2464 = vpop.f32.mrb[0].mxu0
        %v2465 = vadd.f32 %v2369, %v2464
        %v2466 = vpop.f32.mrb[0].mxu0
        %v2467 = vadd.f32 %v2369, %v2466
        %2468 = vmatprep.mubr.f32.mxu0 0.0
        %2469 = vmatmul.mubr.f32.gmra.mrb[0].mxu0 %v2390
        %v2470 = vpop.f32.mrb[0].mxu0
        %v2471 = vadd.f32 %v2374, %v2470
        %v2472 = vpop.f32.mrb[0].mxu0
        %v2473 = vadd.f32 %v2374, %v2472
        %2474 = vmatprep.mubr.f32.mxu0 0.0
        %2475 = vmatmul.mubr.f32.gmra.mrb[0].mxu0 %v2393
        %v2476 = vpop.f32.mrb[0].mxu0
        %v2477 = vadd.f32 %v2379, %v2476
        %v2478 = vpop.f32.mrb[0].mxu0
        %v2479 = vadd.f32 %v2379, %v2478
        %2480 = vmatprep.mubr.f32.mxu0 0.0
        %2481 = vmatmul.mubr.f32.gmra.mrb[0].mxu0 %v2396
        %v2482 = vpop.f32.mrb[0].mxu0
        %v2483 = vadd.f32 %v2384, %v2482
        %v2484 = vpop.f32.mrb[0].mxu0
        %v2485 = vadd.f32 %v2384, %v2484
        %2486 = vdwg.mxu0
        %v2487 = vmul.f32 %v2465, 100.0
        %v2488 = vmul.f32 %v2467, 100.0
        %v2489 = vmul.f32 %v2471, 100.0
        %v2490 = vmul.f32 %v2473, 100.0
        %v2491 = vmul.f32 %v2477, 100.0
        %v2492 = vmul.f32 %v2479, 100.0
        %v2493 = vmul.f32 %v2483, 100.0
        %v2494 = vmul.f32 %v2485, 100.0
        %v2495 = vmin.f32 %v2487, 20.0
        %v2496 = vmin.f32 %v2488, 20.0
        %v2497 = vmin.f32 %v2489, 20.0
        %v2498 = vmin.f32 %v2490, 20.0
        %v2499 = vmin.f32 %v2491, 20.0
        %v2500 = vmin.f32 %v2492, 20.0
        %v2501 = vmin.f32 %v2493, 20.0
        %v2502 = vmin.f32 %v2494, 20.0
        %v2503 = vmul.f32 %v2495, 1.442695
        %v2504 = vpow.pop %v2503
        %v2505 = vmul.f32 %v2496, 1.442695
        %v2506 = vpow.pop %v2505
        %v2507 = vmul.f32 %v2497, 1.442695
        %v2508 = vpow.pop %v2507
        %v2509 = vmul.f32 %v2498, 1.442695
        %v2510 = vpow.pop %v2509
        %v2511 = vmul.f32 %v2499, 1.442695
        %v2512 = vpow.pop %v2511
        %v2513 = vmul.f32 %v2500, 1.442695
        %v2514 = vpow.pop %v2513
        %v2515 = vmul.f32 %v2501, 1.442695
        %v2516 = vpow.pop %v2515
        %v2517 = vmul.f32 %v2502, 1.442695
        %v2518 = vpow.pop %v2517
        %v2519 = vadd.f32 %v2504, 1.0
        %v2520 = vlog2.pop %v2519
        %v2521 = vmul.f32 %v2520, 0.6931472
        %v2522 = vmul.f32 -0.5, %v2504
        %v2523 = vadd.f32 %v2522, 1.0
        %v2524 = vmul.f32 %v2523, %v2504
        %v2525 = vand.u32 2147483647, %v2504
        %vm2526 = vcmp.lt.f32.partialorder %v2525, 0.0004427343
        %v2527 = vsel %vm2526, %v2524, %v2521
        %v2528 = vadd.f32 %v2506, 1.0
        %v2529 = vlog2.pop %v2528
        %v2530 = vmul.f32 %v2529, 0.6931472
        %v2531 = vmul.f32 -0.5, %v2506
        %v2532 = vadd.f32 %v2531, 1.0
        %v2533 = vmul.f32 %v2532, %v2506
        %v2534 = vand.u32 2147483647, %v2506
        %vm2535 = vcmp.lt.f32.partialorder %v2534, 0.0004427343
        %v2536 = vsel %vm2535, %v2533, %v2530
        %v2537 = vadd.f32 %v2508, 1.0
        %v2538 = vlog2.pop %v2537
        %v2539 = vmul.f32 %v2538, 0.6931472
        %v2540 = vmul.f32 -0.5, %v2508
        %v2541 = vadd.f32 %v2540, 1.0
        %v2542 = vmul.f32 %v2541, %v2508
        %v2543 = vand.u32 2147483647, %v2508
        %vm2544 = vcmp.lt.f32.partialorder %v2543, 0.0004427343
        %v2545 = vsel %vm2544, %v2542, %v2539
        %v2546 = vadd.f32 %v2510, 1.0
        %v2547 = vlog2.pop %v2546
        %v2548 = vmul.f32 %v2547, 0.6931472
        %v2549 = vmul.f32 -0.5, %v2510
        %v2550 = vadd.f32 %v2549, 1.0
        %v2551 = vmul.f32 %v2550, %v2510
        %v2552 = vand.u32 2147483647, %v2510
        %vm2553 = vcmp.lt.f32.partialorder %v2552, 0.0004427343
        %v2554 = vsel %vm2553, %v2551, %v2548
        %v2555 = vadd.f32 %v2512, 1.0
        %v2556 = vlog2.pop %v2555
        %v2557 = vmul.f32 %v2556, 0.6931472
        %v2558 = vmul.f32 -0.5, %v2512
        %v2559 = vadd.f32 %v2558, 1.0
        %v2560 = vmul.f32 %v2559, %v2512
        %v2561 = vand.u32 2147483647, %v2512
        %vm2562 = vcmp.lt.f32.partialorder %v2561, 0.0004427343
        %v2563 = vsel %vm2562, %v2560, %v2557
        %v2564 = vadd.f32 %v2514, 1.0
        %v2565 = vlog2.pop %v2564
        %v2566 = vmul.f32 %v2565, 0.6931472
        %v2567 = vmul.f32 -0.5, %v2514
        %v2568 = vadd.f32 %v2567, 1.0
        %v2569 = vmul.f32 %v2568, %v2514
        %v2570 = vand.u32 2147483647, %v2514
        %vm2571 = vcmp.lt.f32.partialorder %v2570, 0.0004427343
        %v2572 = vsel %vm2571, %v2569, %v2566
        %v2573 = vadd.f32 %v2516, 1.0
        %v2574 = vlog2.pop %v2573
        %v2575 = vmul.f32 %v2574, 0.6931472
        %v2576 = vmul.f32 -0.5, %v2516
        %v2577 = vadd.f32 %v2576, 1.0
        %v2578 = vmul.f32 %v2577, %v2516
        %v2579 = vand.u32 2147483647, %v2516
        %vm2580 = vcmp.lt.f32.partialorder %v2579, 0.0004427343
        %v2581 = vsel %vm2580, %v2578, %v2575
        %v2582 = vadd.f32 %v2518, 1.0
        %v2583 = vlog2.pop %v2582
        %v2584 = vmul.f32 %v2583, 0.6931472
        %v2585 = vmul.f32 -0.5, %v2518
        %v2586 = vadd.f32 %v2585, 1.0
        %v2587 = vmul.f32 %v2586, %v2518
        %v2588 = vand.u32 2147483647, %v2518
        %vm2589 = vcmp.lt.f32.partialorder %v2588, 0.0004427343
        %v2590 = vsel %vm2589, %v2587, %v2584
        %v2591 = vmul.f32 %v2527, 0.01
        %v2592 = vmul.f32 %v2536, 0.01
        %v2593 = vmul.f32 %v2545, 0.01
        %v2594 = vmul.f32 %v2554, 0.01
        %v2595 = vmul.f32 %v2563, 0.01
        %v2596 = vmul.f32 %v2572, 0.01
        %v2597 = vmul.f32 %v2581, 0.01
        %v2598 = vmul.f32 %v2590, 0.01
        %vm2599 = vcmp.gt.f32.partialorder %v2487, 20.0
        %vm2600 = vcmp.gt.f32.partialorder %v2488, 20.0
        %vm2601 = vcmp.gt.f32.partialorder %v2489, 20.0
        %vm2602 = vcmp.gt.f32.partialorder %v2490, 20.0
        %vm2603 = vcmp.gt.f32.partialorder %v2491, 20.0
        %vm2604 = vcmp.gt.f32.partialorder %v2492, 20.0
        %vm2605 = vcmp.gt.f32.partialorder %v2493, 20.0
        %vm2606 = vcmp.gt.f32.partialorder %v2494, 20.0
        %v2607 = vsel %vm2599, %v2465, %v2591
        %v2608 = vsel %vm2600, %v2467, %v2592
        %v2609 = vsel %vm2601, %v2471, %v2593
        %v2610 = vsel %vm2602, %v2473, %v2594
        %v2611 = vsel %vm2603, %v2477, %v2595
        %v2612 = vsel %vm2604, %v2479, %v2596
        %v2613 = vsel %vm2605, %v2483, %v2597
        %v2614 = vsel %vm2606, %v2485, %v2598
        %v2615 = vld [vmem:[%s16] sm:$0xff]
        %v2616 = vld [vmem:[%s16 + $0x8] sm:$0xff]
        %v2617 = vld [vmem:[%s16 + $0x10] sm:$0xff]
        %v2618 = vld [vmem:[%s16 + $0x18] sm:$0xff]
        %v2619 = vld [vmem:[%s17] sm:$0xff]
        %v2620 = vld [vmem:[%s17 + $0x8] sm:$0xff]
        %v2621 = vld [vmem:[%s17 + $0x10] sm:$0xff]
        %v2622 = vld [vmem:[%s17 + $0x18] sm:$0xff]
        %2624 = vset.pattern.permute.xlu0 0
        %2625 = vperm.xlu0 %2624, %v2619
        %v2626 = vpop.permute.xlu0 %2625
        %2629 = vset.pattern.permute.xlu0 0
        %2630 = vperm.xlu0 %2629, %v2620
        %v2631 = vpop.permute.xlu0 %2630
        %2634 = vset.pattern.permute.xlu0 0
        %2635 = vperm.xlu0 %2634, %v2621
        %v2636 = vpop.permute.xlu0 %2635
        %2639 = vset.pattern.permute.xlu0 0
        %2640 = vperm.xlu0 %2639, %v2622
        %v2641 = vpop.permute.xlu0 %2640
        %v2644 = vsel %vm1067, %v2615, 0
        %v2647 = vsel %vm1067, %v2616, 0
        %v2650 = vsel %vm1067, %v2617, 0
        %v2653 = vsel %vm1067, %v2618, 0
        %2655 = vmatprep.subr.mxu0 %v2608
        %2656 = vmatpush1.msra.mxu0 %v2607
        %2657 = vmatprep.subr.mxu0 %v2610
        %2658 = vmatpush1.msra.mxu0 %v2609
        %2659 = vmatprep.subr.mxu0 %v2612
        %2660 = vmatpush1.msra.mxu0 %v2611
        %2661 = vmatprep.subr.mxu0 %v2614
        %2662 = vmatpush1.msra.mxu0 %v2613
        %2663 = vmatprep.subr.mxu0 0.0
        %2664 = vmatpush1.msra.mxu0 0.0
        %2665 = vmatprep.subr.mxu0 0.0
        %2666 = vmatpush1.msra.mxu0 0.0
        %2667 = vmatprep.subr.mxu0 0.0
        %2668 = vmatpush1.msra.mxu0 0.0
        %2669 = vmatprep.subr.mxu0 0.0
        %2670 = vmatpush1.msra.mxu0 0.0
        %2671 = vmatprep.subr.mxu0 0.0
        %2672 = vmatpush1.msra.mxu0 0.0
        %2673 = vmatprep.subr.mxu0 0.0
        %2674 = vmatpush1.msra.mxu0 0.0
        %2675 = vmatprep.subr.mxu0 0.0
        %2676 = vmatpush1.msra.mxu0 0.0
        %2677 = vmatprep.subr.mxu0 0.0
        %2678 = vmatpush1.msra.mxu0 0.0
        %2679 = vmatprep.subr.mxu0 0.0
        %2680 = vmatpush1.msra.mxu0 0.0
        %2681 = vmatprep.subr.mxu0 0.0
        %2682 = vmatpush1.msra.mxu0 0.0
        %2683 = vmatprep.subr.mxu0 0.0
        %2684 = vmatpush1.msra.mxu0 0.0
        %2685 = vmatprep.subr.mxu0 0.0
        %2686 = vmatpush1.msra.mxu0 0.0
        %2687 = vmatprep.subr.mxu0 0.0
        %2688 = vmatpush1.msra.mxu0 0.0
        %2689 = vmatprep.subr.mxu0 0.0
        %2690 = vmatpush1.msra.mxu0 0.0
        %2691 = vmatprep.subr.mxu0 0.0
        %2692 = vmatpush1.msra.mxu0 0.0
        %2693 = vmatprep.subr.mxu0 0.0
        %2694 = vmatpush1.msra.mxu0 0.0
        %2695 = vmatprep.subr.mxu0 0.0
        %2696 = vmatpush1.msra.mxu0 0.0
        %2697 = vmatprep.subr.mxu0 0.0
        %2698 = vmatpush1.msra.mxu0 0.0
        %2699 = vmatprep.subr.mxu0 0.0
        %2700 = vmatpush1.msra.mxu0 0.0
        %2701 = vmatprep.subr.mxu0 0.0
        %2702 = vmatpush1.msra.mxu0 0.0
        %2703 = vmatprep.subr.mxu0 0.0
        %2704 = vmatpush1.msra.mxu0 0.0
        %2705 = vmatprep.subr.mxu0 0.0
        %2706 = vmatpush1.msra.mxu0 0.0
        %2707 = vmatprep.subr.mxu0 0.0
        %2708 = vmatpush1.msra.mxu0 0.0
        %2709 = vmatprep.subr.mxu0 0.0
        %2710 = vmatpush1.msra.mxu0 0.0
        %2711 = vmatprep.subr.mxu0 0.0
        %2712 = vmatpush1.msra.mxu0 0.0
        %2713 = vmatprep.subr.mxu0 0.0
        %2714 = vmatpush1.msra.mxu0 0.0
        %2715 = vmatprep.subr.mxu0 0.0
        %2716 = vmatpush1.msra.mxu0 0.0
        %2717 = vmatprep.subr.mxu0 0.0
        %2718 = vmatpush1.msra.mxu0 0.0
        %2719 = vmatprep.mubr.f32.mxu0 0.0
        %2720 = vmatmul.mubr.f32.gmra.mrb[0].mxu0 %v2644
        %v2721 = vpop.f32.mrb[0].mxu0
        %v2722 = vadd.f32 %v2626, %v2721
        %v2723 = vpop.f32.mrb[0].mxu0
        %v2724 = vadd.f32 %v2626, %v2723
        %2725 = vmatprep.mubr.f32.mxu0 0.0
        %2726 = vmatmul.mubr.f32.gmra.mrb[0].mxu0 %v2647
        %v2727 = vpop.f32.mrb[0].mxu0
        %v2728 = vadd.f32 %v2631, %v2727
        %v2729 = vpop.f32.mrb[0].mxu0
        %v2730 = vadd.f32 %v2631, %v2729
        %2731 = vmatprep.mubr.f32.mxu0 0.0
        %2732 = vmatmul.mubr.f32.gmra.mrb[0].mxu0 %v2650
        %v2733 = vpop.f32.mrb[0].mxu0
        %v2734 = vadd.f32 %v2636, %v2733
        %v2735 = vpop.f32.mrb[0].mxu0
        %v2736 = vadd.f32 %v2636, %v2735
        %2737 = vmatprep.mubr.f32.mxu0 0.0
        %2738 = vmatmul.mubr.f32.gmra.mrb[0].mxu0 %v2653
        %v2739 = vpop.f32.mrb[0].mxu0
        %v2740 = vadd.f32 %v2641, %v2739
        %v2741 = vpop.f32.mrb[0].mxu0
        %v2742 = vadd.f32 %v2641, %v2741
        %2743 = vdwg.mxu0
        %v2744 = vmul.f32 %v2722, 100.0
        %v2745 = vmul.f32 %v2724, 100.0
        %v2746 = vmul.f32 %v2728, 100.0
        %v2747 = vmul.f32 %v2730, 100.0
        %v2748 = vmul.f32 %v2734, 100.0
        %v2749 = vmul.f32 %v2736, 100.0
        %v2750 = vmul.f32 %v2740, 100.0
        %v2751 = vmul.f32 %v2742, 100.0
        %v2752 = vmin.f32 %v2744, 20.0
        %v2753 = vmin.f32 %v2745, 20.0
        %v2754 = vmin.f32 %v2746, 20.0
        %v2755 = vmin.f32 %v2747, 20.0
        %v2756 = vmin.f32 %v2748, 20.0
        %v2757 = vmin.f32 %v2749, 20.0
        %v2758 = vmin.f32 %v2750, 20.0
        %v2759 = vmin.f32 %v2751, 20.0
        %v2760 = vmul.f32 %v2752, 1.442695
        %v2761 = vpow.pop %v2760
        %v2762 = vmul.f32 %v2753, 1.442695
        %v2763 = vpow.pop %v2762
        %v2764 = vmul.f32 %v2754, 1.442695
        %v2765 = vpow.pop %v2764
        %v2766 = vmul.f32 %v2755, 1.442695
        %v2767 = vpow.pop %v2766
        %v2768 = vmul.f32 %v2756, 1.442695
        %v2769 = vpow.pop %v2768
        %v2770 = vmul.f32 %v2757, 1.442695
        %v2771 = vpow.pop %v2770
        %v2772 = vmul.f32 %v2758, 1.442695
        %v2773 = vpow.pop %v2772
        %v2774 = vmul.f32 %v2759, 1.442695
        %v2775 = vpow.pop %v2774
        %v2776 = vadd.f32 %v2761, 1.0
        %v2777 = vlog2.pop %v2776
        %v2778 = vmul.f32 %v2777, 0.6931472
        %v2779 = vmul.f32 -0.5, %v2761
        %v2780 = vadd.f32 %v2779, 1.0
        %v2781 = vmul.f32 %v2780, %v2761
        %v2782 = vand.u32 2147483647, %v2761
        %vm2783 = vcmp.lt.f32.partialorder %v2782, 0.0004427343
        %v2784 = vsel %vm2783, %v2781, %v2778
        %v2785 = vadd.f32 %v2763, 1.0
        %v2786 = vlog2.pop %v2785
        %v2787 = vmul.f32 %v2786, 0.6931472
        %v2788 = vmul.f32 -0.5, %v2763
        %v2789 = vadd.f32 %v2788, 1.0
        %v2790 = vmul.f32 %v2789, %v2763
        %v2791 = vand.u32 2147483647, %v2763
        %vm2792 = vcmp.lt.f32.partialorder %v2791, 0.0004427343
        %v2793 = vsel %vm2792, %v2790, %v2787
        %v2794 = vadd.f32 %v2765, 1.0
        %v2795 = vlog2.pop %v2794
        %v2796 = vmul.f32 %v2795, 0.6931472
        %v2797 = vmul.f32 -0.5, %v2765
        %v2798 = vadd.f32 %v2797, 1.0
        %v2799 = vmul.f32 %v2798, %v2765
        %v2800 = vand.u32 2147483647, %v2765
        %vm2801 = vcmp.lt.f32.partialorder %v2800, 0.0004427343
        %v2802 = vsel %vm2801, %v2799, %v2796
        %v2803 = vadd.f32 %v2767, 1.0
        %v2804 = vlog2.pop %v2803
        %v2805 = vmul.f32 %v2804, 0.6931472
        %v2806 = vmul.f32 -0.5, %v2767
        %v2807 = vadd.f32 %v2806, 1.0
        %v2808 = vmul.f32 %v2807, %v2767
        %v2809 = vand.u32 2147483647, %v2767
        %vm2810 = vcmp.lt.f32.partialorder %v2809, 0.0004427343
        %v2811 = vsel %vm2810, %v2808, %v2805
        %v2812 = vadd.f32 %v2769, 1.0
        %v2813 = vlog2.pop %v2812
        %v2814 = vmul.f32 %v2813, 0.6931472
        %v2815 = vmul.f32 -0.5, %v2769
        %v2816 = vadd.f32 %v2815, 1.0
        %v2817 = vmul.f32 %v2816, %v2769
        %v2818 = vand.u32 2147483647, %v2769
        %vm2819 = vcmp.lt.f32.partialorder %v2818, 0.0004427343
        %v2820 = vsel %vm2819, %v2817, %v2814
        %v2821 = vadd.f32 %v2771, 1.0
        %v2822 = vlog2.pop %v2821
        %v2823 = vmul.f32 %v2822, 0.6931472
        %v2824 = vmul.f32 -0.5, %v2771
        %v2825 = vadd.f32 %v2824, 1.0
        %v2826 = vmul.f32 %v2825, %v2771
        %v2827 = vand.u32 2147483647, %v2771
        %vm2828 = vcmp.lt.f32.partialorder %v2827, 0.0004427343
        %v2829 = vsel %vm2828, %v2826, %v2823
        %v2830 = vadd.f32 %v2773, 1.0
        %v2831 = vlog2.pop %v2830
        %v2832 = vmul.f32 %v2831, 0.6931472
        %v2833 = vmul.f32 -0.5, %v2773
        %v2834 = vadd.f32 %v2833, 1.0
        %v2835 = vmul.f32 %v2834, %v2773
        %v2836 = vand.u32 2147483647, %v2773
        %vm2837 = vcmp.lt.f32.partialorder %v2836, 0.0004427343
        %v2838 = vsel %vm2837, %v2835, %v2832
        %v2839 = vadd.f32 %v2775, 1.0
        %v2840 = vlog2.pop %v2839
        %v2841 = vmul.f32 %v2840, 0.6931472
        %v2842 = vmul.f32 -0.5, %v2775
        %v2843 = vadd.f32 %v2842, 1.0
        %v2844 = vmul.f32 %v2843, %v2775
        %v2845 = vand.u32 2147483647, %v2775
        %vm2846 = vcmp.lt.f32.partialorder %v2845, 0.0004427343
        %v2847 = vsel %vm2846, %v2844, %v2841
        %v2848 = vmul.f32 %v2784, 0.01
        %v2849 = vmul.f32 %v2793, 0.01
        %v2850 = vmul.f32 %v2802, 0.01
        %v2851 = vmul.f32 %v2811, 0.01
        %v2852 = vmul.f32 %v2820, 0.01
        %v2853 = vmul.f32 %v2829, 0.01
        %v2854 = vmul.f32 %v2838, 0.01
        %v2855 = vmul.f32 %v2847, 0.01
        %vm2856 = vcmp.gt.f32.partialorder %v2744, 20.0
        %vm2857 = vcmp.gt.f32.partialorder %v2745, 20.0
        %vm2858 = vcmp.gt.f32.partialorder %v2746, 20.0
        %vm2859 = vcmp.gt.f32.partialorder %v2747, 20.0
        %vm2860 = vcmp.gt.f32.partialorder %v2748, 20.0
        %vm2861 = vcmp.gt.f32.partialorder %v2749, 20.0
        %vm2862 = vcmp.gt.f32.partialorder %v2750, 20.0
        %vm2863 = vcmp.gt.f32.partialorder %v2751, 20.0
        %v2864 = vsel %vm2856, %v2722, %v2848
        %v2865 = vsel %vm2857, %v2724, %v2849
        %v2866 = vsel %vm2858, %v2728, %v2850
        %v2867 = vsel %vm2859, %v2730, %v2851
        %v2868 = vsel %vm2860, %v2734, %v2852
        %v2869 = vsel %vm2861, %v2736, %v2853
        %v2870 = vsel %vm2862, %v2740, %v2854
        %v2871 = vsel %vm2863, %v2742, %v2855
        %v2872 = vld [vmem:[%s18] sm:$0xff]
        %v2873 = vld [vmem:[%s18 + $0x8] sm:$0xff]
        %v2874 = vld [vmem:[%s18 + $0x10] sm:$0xff]
        %v2875 = vld [vmem:[%s18 + $0x18] sm:$0xff]
        %2877 = vset.pattern.permute.xlu0 0
        %2878 = vperm.xlu0 %2877, %v2872
        %v2879 = vpop.permute.xlu0 %2878
        %2882 = vset.pattern.permute.xlu0 0
        %2883 = vperm.xlu0 %2882, %v2873
        %v2884 = vpop.permute.xlu0 %2883
        %2887 = vset.pattern.permute.xlu0 0
        %2888 = vperm.xlu0 %2887, %v2874
        %v2889 = vpop.permute.xlu0 %2888
        %2892 = vset.pattern.permute.xlu0 0
        %2893 = vperm.xlu0 %2892, %v2875
        %v2894 = vpop.permute.xlu0 %2893
        %v2896 = vmul.f32 %v2879, %v2864
        %v2897 = vmul.f32 %v2879, %v2865
        %v2898 = vmul.f32 %v2884, %v2866
        %v2899 = vmul.f32 %v2884, %v2867
        %v2900 = vmul.f32 %v2889, %v2868
        %v2901 = vmul.f32 %v2889, %v2869
        %v2902 = vmul.f32 %v2894, %v2870
        %v2903 = vmul.f32 %v2894, %v2871
        %v2904 = vadd.f32 %v2896, %v2898
        %v2905 = vadd.f32 %v2904, %v2900
        %v2906 = vadd.f32 %v2905, %v2902
        %v2907 = vrot.slane %v2906, 4
        %v2908 = vadd.f32 %v2906, %v2907
        %v2909 = vrot.slane %v2908, 2
        %v2910 = vadd.f32 %v2908, %v2909
        %v2911 = vrot.slane %v2910, 1
        %v2912 = vadd.f32 %v2910, %v2911
        %v2913 = vadd.f32 %v2897, %v2899
        %v2914 = vadd.f32 %v2913, %v2901
        %v2915 = vadd.f32 %v2914, %v2903
        %v2916 = vrot.slane %v2915, 4
        %v2917 = vadd.f32 %v2915, %v2916
        %v2918 = vrot.slane %v2917, 2
        %v2919 = vadd.f32 %v2917, %v2918
        %v2920 = vrot.slane %v2919, 1
        %v2921 = vadd.f32 %v2919, %v2920
        %v2922 = vld [vmem:[#allocation2] sm:$0x1]
        %2924 = vset.pattern.permute.xlu0 0
        %2925 = vperm.xlu0 %2924, %v2922
        %v2926 = vpop.permute.xlu0 %2925
        %v2928 = vlaneseq
        %v2929 = vshrl.u32 %v2928, 7
        %v2930 = vsub.s32 0, %v2929
        %v2931 = vrot.slane %v2926, %v2930
        %v2932 = vadd.f32 %v2912, %v2931
        %v2933 = vadd.f32 %v2921, %v2931
        %v2936 = vcombine.low %v2932, %v2933
        %v2938 = vunpack.c.l.s4 1966171168
        %v2939 = vunpack.c.0.s8 %v2938
        %v2940 = vlaneseq
        %v2941 = vshrl.u32 %v2940, 7
        %v2942 = vsub.s32 %v2939, %v2941
        %v2943 = vrot.slane %v2936, %v2942
        %v2945 = vunpack.c.l.s4 1966171168
        %v2946 = vunpack.c.0.s8 %v2945
        %v2947 = vlaneseq
        %v2948 = vshrl.u32 %v2947, 7
        %v2949 = vsub.s32 %v2946, %v2948
        %v2950 = vrot.slane %v2943, %v2949
        %v2952 = vlaneseq
        %vm2953 = vcmp.ge.s32.totalorder %v2952, 0
        %vm2954 = vcmp.lt.s32.totalorder %v2952, 256
        %vm2955 = vmand %vm2953, %vm2954
        %2956 = vst.msk [vmem:[%s637] sm:$0x3] %vm2955, %v2950
        %s2957 = sand.u32 %s469, 1
        %s2958 = scalar_lea.sflag [#allocation4], %s2957
        %s2959 = sand.u32 %s469, 1
        %s2960 = smul.addr %s2959, 2
        %s2961 = scalar_lea.vmem [#allocation3], %s2960
        // Predicated region
        $region101: #{tpu_custom_call.1} parent=99 // pred_check
          %p2962 = pneg %p479
        $region102: #{tpu_custom_call.1} parent=99 // pred_check_branch
          %2964 = sbr.rel (%p2962) target = $region104
        $region103: #{tpu_custom_call.1} parent=99 // pred_region
          %s2965 = smul.u32 2, %s36
          %s2967 = ssub.s32 32, 32
          %2968 = vsyncadd %s2958, %s2967
          %s2969 = smul.addr %s2965, 16
          %s2970 = scalar_lea.hbm %s20, %s2969
          %s2972 = sshll.u32 %s2961, 4
          %s2973 = int_to_ptr.vmem [resolvable:$true] %s2972
          %2975 = dma.vmem_to_hbm [thread:$0]  %s2973, 32, %s2970, %s2958
        $region104: #{tpu_custom_call.1} parent=99 // pred_fallthru
          _
      $region100: #{tpu_custom_call.1} parent=5 // pred_fallthru
        _
      %p2976 = scmp.le.s32.totalorder 2, %s31
      // Predicated region
      $region105: #{tpu_custom_call.1} parent=5 // pred_check
        %p2977 = pneg %p2976
      $region106: #{tpu_custom_call.1} parent=5 // pred_check_branch
        %2979 = sbr.rel (%p2977) target = $region108
      $region107: #{tpu_custom_call.1} parent=5 // pred_region
        %s2980 = ssub.s32 %s31, 2
        // Predicated region
        $region109: #{tpu_custom_call.1} parent=107 // pred_check
          %p2981 = pneg %p485
        $region110: #{tpu_custom_call.1} parent=107 // pred_check_branch
          %2983 = sbr.rel (%p2981) target = $region112
        $region111: #{tpu_custom_call.1} parent=107 // pred_region
          %s2984 = sand.u32 %s470, 1
          %s2985 = scalar_lea.sflag [#allocation4], %s2984
          %s2986 = sand.u32 %s470, 1
          %s2987 = smul.addr %s2986, 2
          %s2988 = scalar_lea.vmem [#allocation3], %s2987
          %2989 = dma.done %s2985, 32
        $region112: #{tpu_custom_call.1} parent=107 // pred_fallthru
          _
      $region108: #{tpu_custom_call.1} parent=5 // pred_fallthru
        _
    $region6: #{tpu_custom_call.1} parent=1 // loop_footer
      %s35 = sadd.s32 1, %s31
    $region7: #{tpu_custom_call.1} parent=1 // loop_footer_branch
      %30 = sbr.rel target = $region3
    $region8: #{tpu_custom_call.1} parent=1 // loop_exit
      _
    %2990 = vsyncpa [#allocation4], 1
    %s2991 = scalar_lea.sflag [#allocation4], 1
    %2992 = vsyncpa %s2991, 1

</llo_original>
